<compile_context>
chip_gen: v7x
topology: tpu7x:2x2x1
jax: 0.10.0
libtpu: 0.0.40
codegen_flags: <defaults>
</compile_context>

<pallas_src>
import numpy as np
import jax
import jax.numpy as jnp
from jax.experimental import pallas as pl
from jax.experimental.pallas import tpu as pltpu

# shapes fixed by multiPromptLearner.__init__
N_CTX = 3
CTX_DIM = 1280
PROJ_DIM = 1408
CTX_PAD = 8            # pad n_ctx (3) up to a full sublane tile
PROJ_PAD = 1536        # pad 1408 -> 2 lane-dense tiles of 768 (6*128); splits v7x's 2 TCs
TN = PROJ_PAD // 2     # 768


# ----------------------------------------------------------------------------
# Kernel 1: prompt projection, tiled over the output-N axis.
#   ctx_pad (8,1280) bf16  @  W tile (1280,768) bf16  ->  f32, + bias tile
# ----------------------------------------------------------------------------
def _proj_kernel(ctx_ref, w_ref, b_ref, proj_ref):
    proj_ref[...] = (
        jnp.dot(ctx_ref[...], w_ref[...], preferred_element_type=jnp.float32)
        + b_ref[...]
    )


# ----------------------------------------------------------------------------
# Kernel 2: classification head (normalize, logits, cross-entropy, argmax acc).
# ----------------------------------------------------------------------------
def _classify_kernel(pf_ref, tf_ref, label_ref, scale_ref,
                     logits_ref, loss_ref, acc_ref):
    pf = pf_ref[...].astype(jnp.float32)                # (B, D)
    tf = tf_ref[...].astype(jnp.float32)                # (C, D)
    scale = scale_ref[0, 0]
    eps = jnp.float32(1e-12)

    # x / ||x||  ->  x * rsqrt(sum(x^2)+eps) (EUP); logit_scale folded into pf's factor.
    pf = pf * (scale * jax.lax.rsqrt(jnp.sum(pf * pf, axis=-1, keepdims=True) + eps))
    tf = tf * jax.lax.rsqrt(jnp.sum(tf * tf, axis=-1, keepdims=True) + eps)

    # logits = logit_scale * point_features @ text_features.t()
    logits = jax.lax.dot_general(
        pf, tf, (((1,), (1,)), ((), ())), preferred_element_type=jnp.float32
    )                                                    # (B, C)
    logits_ref[...] = logits

    B, C = logits.shape
    col_ids = jax.lax.broadcasted_iota(jnp.int32, (B, C), 1)
    label = label_ref[...]                               # (B, 1) int32
    onehot = col_ids == label

    # F.cross_entropy(logits, label), mean reduction, numerically stabilized.
    m = jnp.max(logits, axis=-1, keepdims=True)          # reused for argmax below
    lse = m + jnp.log(jnp.sum(jnp.exp(logits - m), axis=-1, keepdims=True))
    picked = jnp.sum(jnp.where(onehot, logits, 0.0), axis=-1, keepdims=True)
    loss_ref[...] = jnp.sum(lse - picked, axis=(0, 1), keepdims=True) / B

    # pred = torch.max(logits, dim=1)[1]; acc = #(pred == label)
    # NOTE: m is a bit-exact copy of one logit (jnp.max), so `==` tie-break is exact.
    is_max = logits == m
    pred = jnp.min(jnp.where(is_max, col_ids, C), axis=-1, keepdims=True)
    acc_ref[...] = jnp.sum((pred == label).astype(jnp.int32), axis=(0, 1), keepdims=True)


# ----------------------------------------------------------------------------
# Parameter init: master f32 params + ONE-TIME packed bf16 kernel copies.
# ----------------------------------------------------------------------------
def init_prompt_params(key):
    k_ctx, k_w = jax.random.split(key)
    ctx = 0.02 * jax.random.normal(k_ctx, (N_CTX, CTX_DIM), jnp.float32)
    w_proj = 0.02 * jax.random.normal(k_w, (CTX_DIM, PROJ_DIM), jnp.float32)
    b_proj = jnp.zeros((PROJ_DIM,), jnp.float32)
    logit_scale = jnp.float32(np.log(1.0 / 0.07))

    # Pack once: bf16 cast + pad (rows 3..7 zero, cols 1408..1535 zero). Never redone per call.
    ctx_pad_bf16 = (jnp.zeros((CTX_PAD, CTX_DIM), jnp.bfloat16)
                    .at[:N_CTX].set(ctx.astype(jnp.bfloat16)))
    w_pad_bf16 = (jnp.zeros((CTX_DIM, PROJ_PAD), jnp.bfloat16)
                  .at[:, :PROJ_DIM].set(w_proj.astype(jnp.bfloat16)))
    b_pad = (jnp.zeros((1, PROJ_PAD), jnp.float32)
             .at[0, :PROJ_DIM].set(b_proj))

    master = {"ctx": ctx, "w_proj": w_proj, "b_proj": b_proj}
    packed = {"ctx_pad_bf16": ctx_pad_bf16, "w_pad_bf16": w_pad_bf16,
              "b_pad": b_pad, "logit_scale": logit_scale}
    return master, packed


# ----------------------------------------------------------------------------
# multiPrompt.forward (one jit, two pallas_calls)
# ----------------------------------------------------------------------------
@jax.jit
def multi_prompt_forward(pc, point_features, text_features, label,
                         ctx_pad_bf16, w_pad_bf16, b_pad, logit_scale):
    batch = pc.shape[0]
    B, _ = point_features.shape
    C = text_features.shape[0]

    # ---- prompt projection, 2 N-tiles: pipelined weight DMA, parallel on v7x's 2 TCs ----
    n_tiles = PROJ_PAD // TN
    proj_cost = pl.CostEstimate(
        flops=2 * CTX_PAD * CTX_DIM * PROJ_PAD,
        transcendentals=0,
        bytes_accessed=(CTX_DIM * PROJ_PAD * 2        # bf16 W
                        + CTX_PAD * CTX_DIM * 2       # bf16 ctx
                        + PROJ_PAD * 4                # f32 bias
                        + CTX_PAD * PROJ_PAD * 4))    # f32 output
    proj_pad = pl.pallas_call(
        _proj_kernel,
        out_shape=jax.ShapeDtypeStruct((CTX_PAD, PROJ_PAD), jnp.float32),
        grid=(n_tiles,),
        in_specs=[
            pl.BlockSpec((CTX_PAD, CTX_DIM), lambda j: (0, 0)),  # ctx (resident)
            pl.BlockSpec((CTX_DIM, TN), lambda j: (0, j)),       # W tile
            pl.BlockSpec((1, TN), lambda j: (0, j)),             # bias tile
        ],
        out_specs=pl.BlockSpec((CTX_PAD, TN), lambda j: (0, j)),
        compiler_params=pltpu.CompilerParams(dimension_semantics=("parallel",)),
        cost_estimate=proj_cost,
    )(ctx_pad_bf16, w_pad_bf16, b_pad)

    # `.repeat(batch_size, 1, 1)` of the original: not materialized — return the single
    # projection; the (stubbed) pc_model consumer would broadcast it over the batch.
    point_prompt = proj_pad[:N_CTX, :PROJ_DIM]

    # ---- classification head (tiny, grid-less) ----
    label2d = label.reshape(B, 1).astype(jnp.int32)
    scale2d = jnp.asarray(logit_scale, jnp.float32).reshape(1, 1)
    logits, loss, acc = pl.pallas_call(
        _classify_kernel,
        out_shape=(
            jax.ShapeDtypeStruct((B, C), jnp.float32),   # logits
            jax.ShapeDtypeStruct((1, 1), jnp.float32),   # loss
            jax.ShapeDtypeStruct((1, 1), jnp.int32),     # acc
        ),
        in_specs=[
            pl.BlockSpec(memory_space=pltpu.MemorySpace.VMEM),  # point_features
            pl.BlockSpec(memory_space=pltpu.MemorySpace.VMEM),  # text_features
            pl.BlockSpec(memory_space=pltpu.MemorySpace.VMEM),  # label
            pl.BlockSpec(memory_space=pltpu.MemorySpace.SMEM),  # logit_scale scalar
        ],
        out_specs=(
            pl.BlockSpec(memory_space=pltpu.MemorySpace.VMEM),
            pl.BlockSpec(memory_space=pltpu.MemorySpace.VMEM),
            pl.BlockSpec(memory_space=pltpu.MemorySpace.VMEM),
        ),
    )(point_features, text_features, label2d, scale2d)

    return {"loss": loss[0, 0], "acc": acc[0, 0], "total": batch,
            "point_prompt": point_prompt, "logits": logits}


if __name__ == "__main__":
    B = 2
    classnames = ["airplane", "car", "chair", "table"]
    C = len(classnames)
    D = 256          # feature dim of the (stubbed) external encoders
    N_POINTS = 64

    key = jax.random.PRNGKey(0)
    k_param, k_pc, k_label, k_pf, k_tf = jax.random.split(key, 5)

    master, packed = init_prompt_params(k_param)

    pc = jax.random.normal(k_pc, (B, N_POINTS, 3), jnp.float32)
    label = jax.random.randint(k_label, (B,), 0, C, jnp.int32)
    # TODO(synk): clip_model.encode_text / pc_model.encode_pc / SimpleTokenizer are
    # external pretrained components; stubbed with deterministic random features.
    point_features = jax.random.normal(k_pf, (B, D), jnp.float32)
    text_features = jax.random.normal(k_tf, (C, D), jnp.float32)

    out = multi_prompt_forward(pc, point_features, text_features, label,
                               packed["ctx_pad_bf16"], packed["w_pad_bf16"],
                               packed["b_pad"], packed["logit_scale"])
    jax.block_until_ready(out)

    # ---- pure-JAX reference ----
    ctx, w_proj, b_proj = master["ctx"], master["w_proj"], master["b_proj"]
    logit_scale = packed["logit_scale"]
    pprompt_ref = ctx @ w_proj + b_proj
    pf = point_features / jnp.linalg.norm(point_features, axis=-1, keepdims=True)
    tf = text_features / jnp.linalg.norm(text_features, axis=-1, keepdims=True)
    logits_ref = logit_scale * pf @ tf.T
    lse = jax.scipy.special.logsumexp(logits_ref, axis=-1)
    loss_ref = jnp.mean(lse - logits_ref[jnp.arange(B), label])
    acc_ref = jnp.sum(jnp.argmax(logits_ref, axis=-1) == label)

    # point_prompt tolerance loosened because the projection weights are stored/run in bf16.
    assert np.allclose(out["point_prompt"], pprompt_ref, atol=5e-3, rtol=2e-2)
    assert np.allclose(out["logits"], logits_ref, atol=1e-3, rtol=1e-3)
    assert np.allclose(out["loss"], loss_ref, atol=1e-3, rtol=1e-3)
    assert int(out["acc"]) == int(acc_ref)
    assert int(out["total"]) == B

    print("KERNEL_OK")
</pallas_src>

<mosaic_0001>
module attributes {stable_mosaic.version = 11 : i64} {
  func.func @_classify_kernel(%arg0: memref<2x256xf32, #tpu.memory_space<vmem>>, %arg1: memref<4x256xf32, #tpu.memory_space<vmem>>, %arg2: memref<2x1xi32, #tpu.memory_space<vmem>>, %arg3: memref<1x1xf32, #tpu.memory_space<smem>>, %arg4: memref<2x4xf32, #tpu.memory_space<vmem>>, %arg5: memref<1x1xf32, #tpu.memory_space<vmem>>, %arg6: memref<1x1xi32, #tpu.memory_space<vmem>>) attributes {dimension_semantics = [], scalar_prefetch = 0 : i64, scratch_operands = 0 : i64, tpu.core_type = #tpu.core_type<tc>} {
    %c0 = arith.constant 0 : index
    %c0_0 = arith.constant 0 : index
    %0 = vector.load %arg0[%c0, %c0_0] : memref<2x256xf32, #tpu.memory_space<vmem>>, vector<2x256xf32>
    %c0_1 = arith.constant 0 : index
    %c0_2 = arith.constant 0 : index
    %1 = vector.load %arg1[%c0_1, %c0_2] : memref<4x256xf32, #tpu.memory_space<vmem>>, vector<4x256xf32>
    %c0_3 = arith.constant 0 : index
    %c0_4 = arith.constant 0 : index
    %2 = memref.load %arg3[%c0_3, %c0_4] : memref<1x1xf32, #tpu.memory_space<smem>>
    %3 = arith.mulf %0, %0 : vector<2x256xf32>
    %cst = arith.constant dense<0.000000e+00> : vector<2xf32>
    %4 = vector.multi_reduction <add>, %3, %cst [1] : vector<2x256xf32> to vector<2xf32>
    %5 = vector.shape_cast %4 : vector<2xf32> to vector<2x1xf32>
    %cst_5 = arith.constant 9.99999996E-13 : f32
    %6 = vector.broadcast %cst_5 : f32 to vector<2x1xf32>
    %7 = arith.addf %5, %6 : vector<2x1xf32>
    %8 = math.rsqrt %7 : vector<2x1xf32>
    %9 = vector.broadcast %2 : f32 to vector<2x1xf32>
    %10 = arith.mulf %9, %8 : vector<2x1xf32>
    %11 = vector.broadcast %10 : vector<2x1xf32> to vector<2x256xf32>
    %12 = arith.mulf %0, %11 : vector<2x256xf32>
    %13 = arith.mulf %1, %1 : vector<4x256xf32>
    %cst_6 = arith.constant dense<0.000000e+00> : vector<4xf32>
    %14 = vector.multi_reduction <add>, %13, %cst_6 [1] : vector<4x256xf32> to vector<4xf32>
    %15 = vector.shape_cast %14 : vector<4xf32> to vector<4x1xf32>
    %cst_7 = arith.constant 9.99999996E-13 : f32
    %16 = vector.broadcast %cst_7 : f32 to vector<4x1xf32>
    %17 = arith.addf %15, %16 : vector<4x1xf32>
    %18 = math.rsqrt %17 : vector<4x1xf32>
    %19 = vector.broadcast %18 : vector<4x1xf32> to vector<4x256xf32>
    %20 = arith.mulf %1, %19 : vector<4x256xf32>
    %cst_8 = arith.constant dense<0.000000e+00> : vector<2x4xf32>
    %21 = tpu.matmul %12, %20, %cst_8 {dimension_numbers = #tpu.dot_dimension_numbers<[1], [1], [0], [0], [0, 0, 1, 0], [], []>} : vector<2x256xf32>, vector<4x256xf32>, vector<2x4xf32> -> vector<2x4xf32>
    %c0_9 = arith.constant 0 : index
    %c0_10 = arith.constant 0 : index
    %22 = vector.load %arg4[%c0_9, %c0_10] : memref<2x4xf32, #tpu.memory_space<vmem>>, vector<2x4xf32>
    tpu.vector_store %arg4[%c0_9, %c0_10], %21 {strides = array<i32>} : memref<2x4xf32, #tpu.memory_space<vmem>>, vector<2x4xf32>,
    %23 = tpu.iota {dimensions = array<i32: 1>} : vector<2x4xi32>
    %c0_11 = arith.constant 0 : index
    %c0_12 = arith.constant 0 : index
    %24 = vector.load %arg2[%c0_11, %c0_12] : memref<2x1xi32, #tpu.memory_space<vmem>>, vector<2x1xi32>
    %25 = vector.broadcast %24 : vector<2x1xi32> to vector<2x4xi32>
    %26 = arith.cmpi eq, %23, %25 : vector<2x4xi32>
    %cst_13 = arith.constant dense<0xFF800000> : vector<2xf32>
    %27 = vector.multi_reduction <maximumf>, %21, %cst_13 [1] : vector<2x4xf32> to vector<2xf32>
    %28 = vector.shape_cast %27 : vector<2xf32> to vector<2x1xf32>
    %29 = vector.broadcast %28 : vector<2x1xf32> to vector<2x4xf32>
    %30 = arith.subf %21, %29 : vector<2x4xf32>
    %31 = math.exp %30 : vector<2x4xf32>
    %cst_14 = arith.constant dense<0.000000e+00> : vector<2xf32>
    %32 = vector.multi_reduction <add>, %31, %cst_14 [1] : vector<2x4xf32> to vector<2xf32>
    %33 = vector.shape_cast %32 : vector<2xf32> to vector<2x1xf32>
    %34 = math.log %33 : vector<2x1xf32>
    %35 = arith.addf %28, %34 : vector<2x1xf32>
    %cst_15 = arith.constant 0.000000e+00 : f32
    %36 = vector.broadcast %cst_15 : f32 to vector<2x4xf32>
    %37 = arith.select %26, %21, %36 : vector<2x4xi1>, vector<2x4xf32>
    %cst_16 = arith.constant dense<0.000000e+00> : vector<2xf32>
    %38 = vector.multi_reduction <add>, %37, %cst_16 [1] : vector<2x4xf32> to vector<2xf32>
    %39 = vector.shape_cast %38 : vector<2xf32> to vector<2x1xf32>
    %40 = arith.subf %35, %39 : vector<2x1xf32>
    %41 = vector.shape_cast %40 : vector<2x1xf32> to vector<1x2x1xf32>
    %cst_17 = arith.constant dense<0.000000e+00> : vector<1xf32>
    %42 = vector.multi_reduction <add>, %41, %cst_17 [1, 2] : vector<1x2x1xf32> to vector<1xf32>
    %43 = vector.shape_cast %42 : vector<1xf32> to vector<1x1x1xf32>
    %44 = vector.extract %43[0, 0, 0] : f32 from vector<1x1x1xf32>
    %45 = vector.broadcast %44 : f32 to vector<1x1xf32>
    %cst_18 = arith.constant 2.000000e+00 : f32
    %46 = vector.broadcast %cst_18 : f32 to vector<1x1xf32>
    %47 = arith.divf %45, %46 : vector<1x1xf32>
    %c0_19 = arith.constant 0 : index
    %c0_20 = arith.constant 0 : index
    %48 = vector.load %arg5[%c0_19, %c0_20] : memref<1x1xf32, #tpu.memory_space<vmem>>, vector<1x1xf32>
    tpu.vector_store %arg5[%c0_19, %c0_20], %47 {strides = array<i32>} : memref<1x1xf32, #tpu.memory_space<vmem>>, vector<1x1xf32>,
    %49 = vector.broadcast %28 : vector<2x1xf32> to vector<2x4xf32>
    %50 = arith.cmpf oeq, %21, %49 : vector<2x4xf32>
    %c4_i32 = arith.constant 4 : i32
    %51 = vector.broadcast %c4_i32 : i32 to vector<2x4xi32>
    %52 = arith.select %50, %23, %51 : vector<2x4xi1>, vector<2x4xi32>
    %cst_21 = arith.constant dense<2147483647> : vector<2xi32>
    %53 = vector.multi_reduction <minsi>, %52, %cst_21 [1] : vector<2x4xi32> to vector<2xi32>
    %54 = vector.shape_cast %53 : vector<2xi32> to vector<2x1xi32>
    %55 = arith.cmpi eq, %54, %24 : vector<2x1xi32>
    %56 = arith.extui %55 : vector<2x1xi1> to vector<2x1xi32>
    %57 = vector.shape_cast %56 : vector<2x1xi32> to vector<1x2x1xi32>
    %cst_22 = arith.constant dense<0> : vector<1xi32>
    %58 = vector.multi_reduction <add>, %57, %cst_22 [1, 2] : vector<1x2x1xi32> to vector<1xi32>
    %59 = vector.shape_cast %58 : vector<1xi32> to vector<1x1x1xi32>
    %60 = vector.extract %59[0, 0, 0] : i32 from vector<1x1x1xi32>
    %61 = vector.broadcast %60 : i32 to vector<1x1xi32>
    %c0_23 = arith.constant 0 : index
    %c0_24 = arith.constant 0 : index
    %62 = vector.load %arg6[%c0_23, %c0_24] : memref<1x1xi32, #tpu.memory_space<vmem>>, vector<1x1xi32>
    tpu.vector_store %arg6[%c0_23, %c0_24], %61 {strides = array<i32>} : memref<1x1xi32, #tpu.memory_space<vmem>>, vector<1x1xi32>,
    return
  }
}

module attributes {stable_mosaic.version = 11 : i64} {
  func.func @_proj_kernel(%arg0: i32, %arg1: memref<8x1280xbf16, #tpu.memory_space<vmem>>, %arg2: memref<1280x768xbf16, #tpu.memory_space<vmem>>, %arg3: memref<1x768xf32, #tpu.memory_space<vmem>>, %arg4: memref<8x768xf32, #tpu.memory_space<vmem>>) attributes {dimension_semantics = [#tpu.dimension_semantics<parallel>], iteration_bounds = array<i64: 2>, scalar_prefetch = 0 : i64, scratch_operands = 0 : i64, tpu.core_type = #tpu.core_type<tc>, window_params = [{pipeline_mode = #tpu.pipeline_mode<synchronous>, transform_indices = @transform_0, window_bounds = array<i64: 8, 1280>}, {transform_indices = @transform_1, window_bounds = array<i64: 1280, 768>}, {transform_indices = @transform_2, window_bounds = array<i64: 1, 768>}, {transform_indices = @transform_3, window_bounds = array<i64: 8, 768>}]} {
    %c0 = arith.constant 0 : index
    %c0_0 = arith.constant 0 : index
    %0 = vector.load %arg1[%c0, %c0_0] : memref<8x1280xbf16, #tpu.memory_space<vmem>>, vector<8x1280xbf16>
    %c0_1 = arith.constant 0 : index
    %c0_2 = arith.constant 0 : index
    %1 = vector.load %arg2[%c0_1, %c0_2] : memref<1280x768xbf16, #tpu.memory_space<vmem>>, vector<1280x768xbf16>
    %cst = arith.constant dense<0.000000e+00> : vector<8x768xf32>
    %2 = tpu.matmul %0, %1, %cst {dimension_numbers = #tpu.dot_dimension_numbers<[1], [0], [0], [1], [0, 0, 1, 1], [], []>} : vector<8x1280xbf16>, vector<1280x768xbf16>, vector<8x768xf32> -> vector<8x768xf32>
    %c0_3 = arith.constant 0 : index
    %c0_4 = arith.constant 0 : index
    %3 = vector.load %arg3[%c0_3, %c0_4] : memref<1x768xf32, #tpu.memory_space<vmem>>, vector<1x768xf32>
    %4 = vector.broadcast %3 : vector<1x768xf32> to vector<8x768xf32>
    %5 = arith.addf %2, %4 : vector<8x768xf32>
    %c0_5 = arith.constant 0 : index
    %c0_6 = arith.constant 0 : index
    %6 = vector.load %arg4[%c0_5, %c0_6] : memref<8x768xf32, #tpu.memory_space<vmem>>, vector<8x768xf32>
    tpu.vector_store %arg4[%c0_5, %c0_6], %5 {strides = array<i32>} : memref<8x768xf32, #tpu.memory_space<vmem>>, vector<8x768xf32>,
    return
  }
  func.func @transform_0(%arg0: i32) -> (i32, i32) {
    %c0_i32 = arith.constant 0 : i32
    %c0_i32_0 = arith.constant 0 : i32
    %c0_i32_1 = arith.constant 0 : i32
    return %c0_i32, %c0_i32_0 : i32, i32
  }
  func.func @transform_1(%arg0: i32) -> (i32, i32) {
    %c0_i32 = arith.constant 0 : i32
    %c0_i32_0 = arith.constant 0 : i32
    return %c0_i32, %arg0 : i32, i32
  }
  func.func @transform_2(%arg0: i32) -> (i32, i32) {
    %c0_i32 = arith.constant 0 : i32
    %c0_i32_0 = arith.constant 0 : i32
    return %c0_i32, %arg0 : i32, i32
  }
  func.func @transform_3(%arg0: i32) -> (i32, i32) {
    %c0_i32 = arith.constant 0 : i32
    %c0_i32_0 = arith.constant 0 : i32
    return %c0_i32, %arg0 : i32, i32
  }
}

</mosaic_0001>

<llo_original>
// kernel: multi_prompt_forward.3
$region0: #{multi_prompt_forward.3}
  #allocation0 [shape = 'u32[]', space=smem, size = 0x4, offset = 0x4, fixed_abs, tag = 'smem constant byte address 0x4 - core index']
  #allocation1 [shape = 'u32[144,128]{1,0:T(1,128)}', space=vmem, size = 0x12000, scoped, tag = 'internal scratch']
  #allocation2 [shape = 'f32[1,1]{1,0:T(1,128)S(6)}', space=smem, size = 0x200, scoped, tag = 'scoped memory for multi_prompt_forward.3']
  %s0 = inlined_call_operand.hbm [shape: f32[2,256], index: 0, kind: input, shape index: {}]
  %s1 = inlined_call_operand.hbm [shape: f32[4,256], index: 1, kind: input, shape index: {}]
  %s2 = inlined_call_operand.vmem [shape: s32[2,1], index: 2, kind: input, shape index: {}]
  %s3 = inlined_call_operand.<no memory space> [shape: f32[1,1], index: 3, kind: input, shape index: {}]
  %s4 = inlined_call_operand.hbm [shape: f32[2,4], index: 4, kind: output, shape index: {0}]
  %s5 = inlined_call_operand.hbm [shape: f32[1,1], index: 5, kind: output, shape index: {1}]
  %s6 = inlined_call_operand.hbm [shape: s32[1,1], index: 6, kind: output, shape index: {2}]
  %7 = xla_tuple %s4, %s5, %s6
  %s8 = sld [smem:[#allocation0]]
  $region50: #{multi_prompt_forward.3} parent=0
    _
  %s10 = ssub.s32 1, %s8
  %s11 = scalar_select 0, %s10, %s8
  %12 = sst [smem:[#allocation2]] %s3
  $region1: #{multi_prompt_forward.3} parent=0
    #allocation3 [shape = 'u8[2048]{0}', space=vmem, size = 0x800, scoped, tag = 'input window, operand 0, single buffered']
    #allocation4 [shape = 's32[1]{0}', space=sflag, size = 0x4, scoped, tag = 'scoped memory for multi_prompt_forward.3']
    #allocation5 [shape = 's32[1]{0}', space=sflag, size = 0x4, scoped, tag = 'scoped memory for multi_prompt_forward.3']
    #allocation6 [shape = 'u8[4096]{0}', space=vmem, size = 0x1000, scoped, tag = 'input window, operand 1, single buffered']
    #allocation7 [shape = 's32[1]{0}', space=sflag, size = 0x4, scoped, tag = 'scoped memory for multi_prompt_forward.3']
    #allocation8 [shape = 'u8[1024]{0}', space=vmem, size = 0x400, scoped, tag = 'output window, operand 0, single buffered']
    #allocation9 [shape = 'u8[512]{0}', space=vmem, size = 0x400, scoped, tag = 'output window, operand 1, single buffered']
    #allocation10 [shape = 's32[1]{0}', space=sflag, size = 0x4, scoped, tag = 'scoped memory for multi_prompt_forward.3']
    #allocation11 [shape = 'u8[512]{0}', space=vmem, size = 0x400, scoped, tag = 'output window, operand 2, single buffered']
    %13 = vsyncpa [#allocation4], 0
    %14 = vsyncpa [#allocation7], 0
    %15 = vsyncpa [#allocation5], 0
    %16 = vsyncpa [#allocation10], 0
    // Predicated region
    $region2: #{multi_prompt_forward.3} parent=1 // pred_check
      _
    $region3: #{multi_prompt_forward.3} parent=1 // pred_check_branch
      %18 = sbr.rel (0) target = $region5
    $region4: #{multi_prompt_forward.3} parent=1 // pred_region
      %s20 = ssub.s32 64, 64
      %21 = vsyncadd [#allocation4], %s20
      %s23 = sshll.u32 [#allocation3], 4
      %s24 = int_to_ptr.vmem [resolvable:$true] %s23
      %26 = dma.hbm_to_vmem [thread:$0]  %s0, 64, %s24, [#allocation4]
    $region5: #{multi_prompt_forward.3} parent=1 // pred_fallthru
      _
    // Predicated region
    $region6: #{multi_prompt_forward.3} parent=1 // pred_check
      _
    $region7: #{multi_prompt_forward.3} parent=1 // pred_check_branch
      %28 = sbr.rel (0) target = $region9
    $region8: #{multi_prompt_forward.3} parent=1 // pred_region
      %s30 = ssub.s32 128, 128
      %31 = vsyncadd [#allocation7], %s30
      %s33 = sshll.u32 [#allocation6], 4
      %s34 = int_to_ptr.vmem [resolvable:$true] %s33
      %36 = dma.hbm_to_vmem [thread:$0]  %s1, 128, %s34, [#allocation7]
    $region9: #{multi_prompt_forward.3} parent=1 // pred_fallthru
      _
    // Predicated region
    $region10: #{multi_prompt_forward.3} parent=1 // pred_check
      _
    $region11: #{multi_prompt_forward.3} parent=1 // pred_check_branch
      %38 = sbr.rel (0) target = $region13
    $region12: #{multi_prompt_forward.3} parent=1 // pred_region
      _
    $region13: #{multi_prompt_forward.3} parent=1 // pred_fallthru
      _
    // Predicated region
    $region14: #{multi_prompt_forward.3} parent=1 // pred_check
      _
    $region15: #{multi_prompt_forward.3} parent=1 // pred_check_branch
      %40 = sbr.rel (0) target = $region17
    $region16: #{multi_prompt_forward.3} parent=1 // pred_region
      _
    $region17: #{multi_prompt_forward.3} parent=1 // pred_fallthru
      _
    // Predicated region
    $region18: #{multi_prompt_forward.3} parent=1 // pred_check
      _
    $region19: #{multi_prompt_forward.3} parent=1 // pred_check_branch
      %42 = sbr.rel (0) target = $region21
    $region20: #{multi_prompt_forward.3} parent=1 // pred_region
      %43 = dma.done [#allocation4], 64
    $region21: #{multi_prompt_forward.3} parent=1 // pred_fallthru
      _
    // Predicated region
    $region22: #{multi_prompt_forward.3} parent=1 // pred_check
      _
    $region23: #{multi_prompt_forward.3} parent=1 // pred_check_branch
      %45 = sbr.rel (0) target = $region25
    $region24: #{multi_prompt_forward.3} parent=1 // pred_region
      %46 = dma.done [#allocation7], 128
    $region25: #{multi_prompt_forward.3} parent=1 // pred_fallthru
      _
    %v47 = vld [vmem:[#allocation3] sm:$0xf]
    %v48 = vld [vmem:[#allocation6] sm:$0xff]
    %s49 = sld [smem:[#allocation2]]
    %v50 = vmul.f32 %v47, %v47
    %v53 = vunpack.c.l.s4 1983009808
    %v54 = vunpack.c.0.s8 %v53
    %v55 = vlaneseq
    %v56 = vshrl.u32 %v55, 7
    %v57 = vsub.s32 %v54, %v56
    %v58 = vrot.slane %v50, %v57
    %v59 = vcombine.high %v58, %v58
    %vm62 = vcmask 1041408
    %v63 = vsel %vm62, %v58, 0.0
    %v64 = vsel %vm62, %v59, 0.0
    %v65 = vadd.f32 %v63, %v64
    %66 = vadd.xlane.f32.xlu0 %v65
    %v67 = vpop.xlane.xlu0 %66
    %v68 = vadd.f32 %v67, 1e-12
    %v69 = vrsqrt.pop %v68
    %v70 = vstv %s49
    %v71 = vmul.f32 %v70, %v69
    %v74 = vunpack.c.l.s4 269488144
    %v75 = vunpack.c.0.s8 %v74
    %v76 = vlaneseq
    %v77 = vshrl.u32 %v76, 7
    %v78 = vsub.s32 %v75, %v77
    %v79 = vrot.slane %v71, %v78
    %v81 = vmul.f32 %v47, %v79
    %v82 = vmul.f32 %v48, %v48
    %v84 = vcombine.high %v82, %v82
    %vm86 = vcmask 1043456
    %v87 = vsel %vm86, %v82, 0.0
    %v88 = vsel %vm86, %v84, 0.0
    %v89 = vadd.f32 %v87, %v88
    %90 = vadd.xlane.f32.xlu0 %v89
    %v91 = vpop.xlane.xlu0 %90
    %v92 = vadd.f32 %v91, 1e-12
    %v93 = vrsqrt.pop %v92
    %v96 = vunpack.c.l.s4 839922192
    %v97 = vunpack.c.0.s8 %v96
    %v98 = vlaneseq
    %v99 = vshrl.u32 %v98, 7
    %v100 = vsub.s32 %v97, %v99
    %v101 = vrot.slane %v93, %v100
    %v103 = vmul.f32 %v48, %v101
    %v106 = vunpack.c.l.s4 1983009808
    %v107 = vunpack.c.0.s8 %v106
    %v108 = vlaneseq
    %v109 = vshrl.u32 %v108, 7
    %v110 = vsub.s32 %v107, %v109
    %v111 = vrot.slane %v81, %v110
    %v112 = vcombine.high %v111, %v111
    %v116 = vcombine.high %v103, %v103
    %118 = vmatprep.subr.mxu0 %v116
    %119 = vmatpush1.xpose.msra.mxu0 %v103
    %120 = vmatprep.subr.mxu0 0.0
    %121 = vmatpush1.xpose.msra.mxu0 0.0
    %122 = vmatprep.subr.mxu0 0.0
    %123 = vmatpush1.xpose.msra.mxu0 0.0
    %124 = vmatprep.subr.mxu0 0.0
    %125 = vmatpush1.xpose.msra.mxu0 0.0
    %126 = vmatprep.subr.mxu0 0.0
    %127 = vmatpush1.xpose.msra.mxu0 0.0
    %128 = vmatprep.subr.mxu0 0.0
    %129 = vmatpush1.xpose.msra.mxu0 0.0
    %130 = vmatprep.subr.mxu0 0.0
    %131 = vmatpush1.xpose.msra.mxu0 0.0
    %132 = vmatprep.subr.mxu0 0.0
    %133 = vmatpush1.xpose.msra.mxu0 0.0
    %134 = vmatprep.subr.mxu0 0.0
    %135 = vmatpush1.xpose.msra.mxu0 0.0
    %136 = vmatprep.subr.mxu0 0.0
    %137 = vmatpush1.xpose.msra.mxu0 0.0
    %138 = vmatprep.subr.mxu0 0.0
    %139 = vmatpush1.xpose.msra.mxu0 0.0
    %140 = vmatprep.subr.mxu0 0.0
    %141 = vmatpush1.xpose.msra.mxu0 0.0
    %142 = vmatprep.subr.mxu0 0.0
    %143 = vmatpush1.xpose.msra.mxu0 0.0
    %144 = vmatprep.subr.mxu0 0.0
    %145 = vmatpush1.xpose.msra.mxu0 0.0
    %146 = vmatprep.subr.mxu0 0.0
    %147 = vmatpush1.xpose.msra.mxu0 0.0
    %148 = vmatprep.subr.mxu0 0.0
    %149 = vmatpush1.xpose.msra.mxu0 0.0
    %150 = vmatprep.subr.mxu0 0.0
    %151 = vmatpush1.xpose.msra.mxu0 0.0
    %152 = vmatprep.subr.mxu0 0.0
    %153 = vmatpush1.xpose.msra.mxu0 0.0
    %154 = vmatprep.subr.mxu0 0.0
    %155 = vmatpush1.xpose.msra.mxu0 0.0
    %156 = vmatprep.subr.mxu0 0.0
    %157 = vmatpush1.xpose.msra.mxu0 0.0
    %158 = vmatprep.subr.mxu0 0.0
    %159 = vmatpush1.xpose.msra.mxu0 0.0
    %160 = vmatprep.subr.mxu0 0.0
    %161 = vmatpush1.xpose.msra.mxu0 0.0
    %162 = vmatprep.subr.mxu0 0.0
    %163 = vmatpush1.xpose.msra.mxu0 0.0
    %164 = vmatprep.subr.mxu0 0.0
    %165 = vmatpush1.xpose.msra.mxu0 0.0
    %166 = vmatprep.subr.mxu0 0.0
    %167 = vmatpush1.xpose.msra.mxu0 0.0
    %168 = vmatprep.subr.mxu0 0.0
    %169 = vmatpush1.xpose.msra.mxu0 0.0
    %170 = vmatprep.subr.mxu0 0.0
    %171 = vmatpush1.xpose.msra.mxu0 0.0
    %172 = vmatprep.subr.mxu0 0.0
    %173 = vmatpush1.xpose.msra.mxu0 0.0
    %174 = vmatprep.subr.mxu0 0.0
    %175 = vmatpush1.xpose.msra.mxu0 0.0
    %176 = vmatprep.subr.mxu0 0.0
    %177 = vmatpush1.xpose.msra.mxu0 0.0
    %178 = vmatprep.subr.mxu0 0.0
    %179 = vmatpush1.xpose.msra.mxu0 0.0
    %180 = vmatprep.subr.mxu0 0.0
    %181 = vmatpush1.xpose.msra.mxu0 0.0
    %182 = vmatprep.mubr.f32.mxu0 %v112
    %183 = vmatmul.mubr.f32.gmra.mrb[0].mxu0 %v111
    %v184 = vpop.f32.mrb[0].mxu0
    %v185 = vadd.f32 0.0, %v184
    %v186 = vpop.f32.mrb[0].mxu0
    %187 = vdwg.mxu0
    %vm188 = vcmask 25600
    %189 = vst.msk [vmem:[#allocation8] sm:$0x3] %vm188, %v185
    %v190 = vlaneseq
    %v191 = vand.u32 %v190, 127
    %v192 = vld [vmem:[%s2] sm:$0x3]
    %193 = vset.pattern.permute.xlu0 0
    %194 = vperm.xlu0 %193, %v192
    %v195 = vpop.permute.xlu0 %194
    %vm196 = vcmp.eq.s32.totalorder %v191, %v195
    %v197 = vsel %vm188, %v185, -inf
    %198 = vmax.xlane.f32.xlu0 %v197
    %v199 = vpop.xlane.xlu0 %198
    %v200 = vsub.f32 %v185, %v199
    %v201 = vmul.f32 %v200, 1.442695
    %v202 = vpow.pop %v201
    %v203 = vsel %vm188, %v202, 0.0
    %204 = vadd.xlane.f32.xlu0 %v203
    %v205 = vpop.xlane.xlu0 %204
    %v206 = vlog2.pop %v205
    %v207 = vmul.f32 %v206, 0.6931472
    %v208 = vadd.f32 %v199, %v207
    %v209 = vsel %vm196, %v185, 0.0
    %v210 = vsel %vm188, %v209, 0.0
    %211 = vadd.xlane.f32.xlu0 %v210
    %v212 = vpop.xlane.xlu0 %211
    %v213 = vsub.f32 %v208, %v212
    %vm214 = vcmask 1024
    %v215 = vsel %vm214, %v213, 0.0
    %216 = vadd.xlane.f32.xlu0 %v215
    %v217 = vpop.xlane.xlu0 %216
    %v218 = vrot.slane %v217, 4
    %v219 = vadd.f32 %v217, %v218
    %v220 = vrot.slane %v219, 2
    %v221 = vadd.f32 %v219, %v220
    %v222 = vrot.slane %v221, 1
    %v223 = vadd.f32 %v221, %v222
    %s224 = vtos %v223
    %v225 = vstv %s224
    %v226 = vrcp.pop 2.0
    %v227 = vmul.f32 %v225, %v226
    %vm228 = vcmask 0
    %229 = vst.msk [vmem:[#allocation9] sm:$0x1] %vm228, %v227
    %vm230 = vcmp.eq.f32.partialorder %v185, %v199
    %v231 = vsel %vm230, %v191, 4
    %v232 = vsel %vm188, %v231, 2147483647
    %v233 = vand.u32 %v232, 65535
    %v234 = vshra.s32 %v232, 16
    %v235 = vcvt.s32.f32 %v233
    %v236 = vcvt.s32.f32 %v234
    %237 = vmin.xlane.f32.xlu0 %v236
    %v238 = vpop.xlane.xlu0 %237
    %vm239 = vcmp.eq.f32.partialorder %v236, %v238
    %v240 = vsel %vm239, %v235, inf
    %241 = vmin.xlane.f32.xlu0 %v240
    %v242 = vpop.xlane.xlu0 %241
    %v243 = vcvt.f32.s32 %v242
    %v244 = vcvt.f32.s32 %v238
    %v245 = vshll.u32 %v244, 16
    %v246 = vadd.s32 %v245, %v243
    %vm247 = vcmp.eq.s32.totalorder %v246, %v192
    %v248 = vsel %vm247, 1, 0
    %v249 = vsel %vm214, %v248, 0
    %v250 = vand.u32 %v249, 65535
    %v251 = vshrl.u32 %v249, 16
    %v252 = vcvt.s32.f32 %v250
    %v253 = vcvt.s32.f32 %v251
    %254 = vadd.xlane.f32.xlu0 %v252
    %v255 = vpop.xlane.xlu0 %254
    %256 = vadd.xlane.f32.xlu0 %v253
    %v257 = vpop.xlane.xlu0 %256
    %v258 = vcvt.f32.s32 %v255
    %v259 = vcvt.f32.s32 %v257
    %v260 = vshll.u32 %v259, 16
    %v261 = vadd.s32 %v260, %v258
    %v262 = vrot.slane %v261, 4
    %v263 = vadd.s32 %v261, %v262
    %v264 = vrot.slane %v263, 2
    %v265 = vadd.s32 %v263, %v264
    %v266 = vrot.slane %v265, 1
    %v267 = vadd.s32 %v265, %v266
    %s268 = vtos %v267
    %v269 = vstv %s268
    %270 = vst.msk [vmem:[#allocation11] sm:$0x1] %vm228, %v269
    // Predicated region
    $region26: #{multi_prompt_forward.3} parent=1 // pred_check
      _
    $region27: #{multi_prompt_forward.3} parent=1 // pred_check_branch
      %272 = sbr.rel (0) target = $region29
    $region28: #{multi_prompt_forward.3} parent=1 // pred_region
      %s274 = ssub.s32 32, 32
      %275 = vsyncadd [#allocation5], %s274
      %s277 = sshll.u32 [#allocation8], 4
      %s278 = int_to_ptr.vmem [resolvable:$true] %s277
      %280 = dma.vmem_to_hbm [thread:$0]  %s278, 32, %s4, [#allocation5]
    $region29: #{multi_prompt_forward.3} parent=1 // pred_fallthru
      _
    // Predicated region
    $region30: #{multi_prompt_forward.3} parent=1 // pred_check
      _
    $region31: #{multi_prompt_forward.3} parent=1 // pred_check_branch
      %282 = sbr.rel (0) target = $region33
    $region32: #{multi_prompt_forward.3} parent=1 // pred_region
      %s284 = ssub.s32 16, 16
      %285 = vsyncadd [#allocation10], %s284
      %s287 = sshll.u32 [#allocation9], 4
      %s288 = int_to_ptr.vmem [resolvable:$true] %s287
      %290 = dma.vmem_to_hbm [thread:$0]  %s288, 16, %s5, [#allocation10]
    $region33: #{multi_prompt_forward.3} parent=1 // pred_fallthru
      _
    // Predicated region
    $region34: #{multi_prompt_forward.3} parent=1 // pred_check
      _
    $region35: #{multi_prompt_forward.3} parent=1 // pred_check_branch
      %292 = sbr.rel (0) target = $region37
    $region36: #{multi_prompt_forward.3} parent=1 // pred_region
      %s294 = ssub.s32 16, 16
      %295 = vsyncadd [#allocation10], %s294
      %s297 = sshll.u32 [#allocation11], 4
      %s298 = int_to_ptr.vmem [resolvable:$true] %s297
      %300 = dma.vmem_to_hbm [thread:$0]  %s298, 16, %s6, [#allocation10]
    $region37: #{multi_prompt_forward.3} parent=1 // pred_fallthru
      _
    // Predicated region
    $region38: #{multi_prompt_forward.3} parent=1 // pred_check
      _
    $region39: #{multi_prompt_forward.3} parent=1 // pred_check_branch
      %302 = sbr.rel (0) target = $region41
    $region40: #{multi_prompt_forward.3} parent=1 // pred_region
      %303 = dma.done [#allocation5], 32
    $region41: #{multi_prompt_forward.3} parent=1 // pred_fallthru
      _
    // Predicated region
    $region42: #{multi_prompt_forward.3} parent=1 // pred_check
      _
    $region43: #{multi_prompt_forward.3} parent=1 // pred_check_branch
      %305 = sbr.rel (0) target = $region45
    $region44: #{multi_prompt_forward.3} parent=1 // pred_region
      %306 = dma.done [#allocation10], 16
    $region45: #{multi_prompt_forward.3} parent=1 // pred_fallthru
      _
    // Predicated region
    $region46: #{multi_prompt_forward.3} parent=1 // pred_check
      _
    $region47: #{multi_prompt_forward.3} parent=1 // pred_check_branch
      %308 = sbr.rel (0) target = $region49
    $region48: #{multi_prompt_forward.3} parent=1 // pred_region
      %309 = dma.done [#allocation10], 16
    $region49: #{multi_prompt_forward.3} parent=1 // pred_fallthru
      _
    %310 = vsyncpa [#allocation4], 1
    %311 = vsyncpa [#allocation7], 1
    %312 = vsyncpa [#allocation5], 1
    %313 = vsyncpa [#allocation10], 1

// kernel: multi_prompt_forward.2
$region0: #{multi_prompt_forward.2}
  #allocation0 [shape = 'u32[]', space=smem, size = 0x4, offset = 0x4, fixed_abs, tag = 'smem constant byte address 0x4 - core index']
  #allocation1 [shape = 'u32[144,128]{1,0:T(1,128)}', space=vmem, size = 0x12000, scoped, tag = 'internal scratch']
  %s0 = inlined_call_operand.hbm [shape: bf16[8,1280], index: 0, kind: input, shape index: {}]
  %s1 = inlined_call_operand.hbm [shape: bf16[1280,1536], index: 1, kind: input, shape index: {}]
  %s2 = inlined_call_operand.hbm [shape: f32[1,1536], index: 2, kind: input, shape index: {}]
  %s3 = inlined_call_operand.vmem [shape: f32[8,1536], index: 3, kind: output, shape index: {}]
  %s4 = sld [smem:[#allocation0]]
  $region57: #{multi_prompt_forward.2} parent=0
    _
  %s6 = ssub.s32 1, %s4
  %s7 = scalar_select 0, %s6, %s4
  $region1: #{multi_prompt_forward.2} parent=0
    #allocation2 [shape = 'u8[20480]{0}', space=vmem, size = 0x5000, scoped, tag = 'input window, operand 0, single buffered']
    #allocation3 [shape = 's32[2]{0}', space=sflag, size = 0x8, scoped, tag = 'scoped memory for multi_prompt_forward.2']
    #allocation4 [shape = 'u8[3932160]{0}', space=vmem, size = 0x3c0000, scoped, tag = 'input window, operand 1']
    #allocation5 [shape = 's32[2]{0}', space=sflag, size = 0x8, scoped, tag = 'scoped memory for multi_prompt_forward.2']
    #allocation6 [shape = 'u8[6144]{0}', space=vmem, size = 0x1800, scoped, tag = 'input window, operand 2']
    %8 = vsyncpa [#allocation3], 0
    %9 = vsyncpa [#allocation5], 0
    %s10 = scalar_lea.sflag [#allocation5], 1
    %11 = vsyncpa %s10, 0
    loop: start=0, step=1, limit=4
    $region2: #{multi_prompt_forward.2} parent=1 // loop_pre_header
      _
    $region3: #{multi_prompt_forward.2} parent=1 // loop_header
      %s13 = sphi 0, %s17
      %p14 = scmp.ge.s32.totalorder %s13, 4
      %s21 = sphi 0, %s21
      %s23 = sphi 0, %s21
      %s24 = sphi 0, %s23
      %s38 = sphi 0, %s24
      %s44 = sphi 0, %s46
      %s47 = sphi 0, %s44
      %s48 = sphi 0, %s47
      %s64 = sphi 0, %s48
      %s70 = sphi 0, %s72
      %s73 = sphi 0, %s70
      %s74 = sphi 0, %s73
      %s90 = sphi 0, %s74
      %s96 = sphi 0, %s98
      %s99 = sphi 0, %s96
      %s100 = sphi 0, %s99
      %s116 = sphi 0, %s100
    $region4: #{multi_prompt_forward.2} parent=1 // loop_header_branch
      %16 = sbr.rel (%p14) target = $region8
    $region5: #{multi_prompt_forward.2} parent=1 // loop_body
      %s18 = ssub.s32 %s13, 1
      %s19 = ssub.s32 %s13, 2
      %s20 = sadd.s32 %s13, 1
      %s22 = sadd.s32 %s21, 1
      %p25 = scmp.eq.s32.totalorder %s13, 1
      %p26 = scmp.ne.s32.totalorder %s21, %s23
      %p27 = scmp.eq.s32.totalorder %s13, 0
      %p28 = por %p26, %p27
      %p29 = scmp.ne.s32.totalorder %s21, %s23
      %p30 = scmp.eq.s32.totalorder %s18, 1
      %p31 = por %p29, %p30
      %p32 = scmp.ne.s32.totalorder %s23, %s24
      %p33 = scmp.eq.s32.totalorder %s18, 0
      %p34 = por %p32, %p33
      %p35 = scmp.ne.s32.totalorder %s23, %s24
      %p36 = scmp.eq.s32.totalorder %s19, 1
      %p37 = por %p35, %p36
      %p39 = scmp.ne.s32.totalorder %s24, %s38
      %p40 = scmp.eq.s32.totalorder %s19, 0
      %p41 = por %p39, %p40
      %s42 = ssub.s32 %s13, %s20
      %p43 = scmp.eq.s32.totalorder %s42, 0
      %s45 = sadd.s32 %s44, 1
      %s46 = scalar_select %p43, %s44, %s45
      %p49 = pneg %p43
      %p50 = scmp.eq.s32.totalorder %s13, 1
      %p51 = por %p49, %p50
      %p52 = scmp.ne.s32.totalorder %s44, %s47
      %p53 = scmp.eq.s32.totalorder %s13, 0
      %p54 = por %p52, %p53
      %p55 = scmp.ne.s32.totalorder %s44, %s47
      %p56 = scmp.eq.s32.totalorder %s18, 1
      %p57 = por %p55, %p56
      %p58 = scmp.ne.s32.totalorder %s47, %s48
      %p59 = scmp.eq.s32.totalorder %s18, 0
      %p60 = por %p58, %p59
      %p61 = scmp.ne.s32.totalorder %s47, %s48
      %p62 = scmp.eq.s32.totalorder %s19, 1
      %p63 = por %p61, %p62
      %p65 = scmp.ne.s32.totalorder %s48, %s64
      %p66 = scmp.eq.s32.totalorder %s19, 0
      %p67 = por %p65, %p66
      %s68 = ssub.s32 %s13, %s20
      %p69 = scmp.eq.s32.totalorder %s68, 0
      %s71 = sadd.s32 %s70, 1
      %s72 = scalar_select %p69, %s70, %s71
      %p75 = pneg %p69
      %p76 = scmp.eq.s32.totalorder %s13, 1
      %p77 = por %p75, %p76
      %p78 = scmp.ne.s32.totalorder %s70, %s73
      %p79 = scmp.eq.s32.totalorder %s13, 0
      %p80 = por %p78, %p79
      %p81 = scmp.ne.s32.totalorder %s70, %s73
      %p82 = scmp.eq.s32.totalorder %s18, 1
      %p83 = por %p81, %p82
      %p84 = scmp.ne.s32.totalorder %s73, %s74
      %p85 = scmp.eq.s32.totalorder %s18, 0
      %p86 = por %p84, %p85
      %p87 = scmp.ne.s32.totalorder %s73, %s74
      %p88 = scmp.eq.s32.totalorder %s19, 1
      %p89 = por %p87, %p88
      %p91 = scmp.ne.s32.totalorder %s74, %s90
      %p92 = scmp.eq.s32.totalorder %s19, 0
      %p93 = por %p91, %p92
      %s94 = ssub.s32 %s13, %s20
      %p95 = scmp.eq.s32.totalorder %s94, 0
      %s97 = sadd.s32 %s96, 1
      %s98 = scalar_select %p95, %s96, %s97
      %p101 = pneg %p95
      %p102 = scmp.eq.s32.totalorder %s13, 1
      %p103 = por %p101, %p102
      %p104 = scmp.ne.s32.totalorder %s96, %s99
      %p105 = scmp.eq.s32.totalorder %s13, 0
      %p106 = por %p104, %p105
      %p107 = scmp.ne.s32.totalorder %s96, %s99
      %p108 = scmp.eq.s32.totalorder %s18, 1
      %p109 = por %p107, %p108
      %p110 = scmp.ne.s32.totalorder %s99, %s100
      %p111 = scmp.eq.s32.totalorder %s18, 0
      %p112 = por %p110, %p111
      %p113 = scmp.ne.s32.totalorder %s99, %s100
      %p114 = scmp.eq.s32.totalorder %s19, 1
      %p115 = por %p113, %p114
      %p117 = scmp.ne.s32.totalorder %s100, %s116
      %p118 = scmp.eq.s32.totalorder %s19, 0
      %p119 = por %p117, %p118
      %p120 = scmp.le.s32.totalorder 1, %s13
      %p121 = scmp.lt.s32.totalorder %s13, 3
      %p122 = pnand %p120, %p121
      %p123 = pneg %p122
      // Predicated region
      $region9: #{multi_prompt_forward.2} parent=5 // pred_check
        _
      $region10: #{multi_prompt_forward.2} parent=5 // pred_check_branch
        %125 = sbr.rel (%p122) target = $region12
      $region11: #{multi_prompt_forward.2} parent=5 // pred_region
        %s126 = ssub.s32 %s13, 1
        // Predicated region
        $region13: #{multi_prompt_forward.2} parent=11 // pred_check
          %p127 = pneg %p34
        $region14: #{multi_prompt_forward.2} parent=11 // pred_check_branch
          %129 = sbr.rel (%p127) target = $region16
        $region15: #{multi_prompt_forward.2} parent=11 // pred_region
          %s131 = ssub.s32 640, 640
          %132 = vsyncadd [#allocation3], %s131
          %s134 = sshll.u32 [#allocation2], 4
          %s135 = int_to_ptr.vmem [resolvable:$true] %s134
          %137 = dma.hbm_to_vmem [thread:$0]  %s0, 640, %s135, [#allocation3]
        $region16: #{multi_prompt_forward.2} parent=11 // pred_fallthru
          _
      $region12: #{multi_prompt_forward.2} parent=5 // pred_fallthru
        _
      %p138 = scmp.lt.s32.totalorder %s13, 2
      // Predicated region
      $region17: #{multi_prompt_forward.2} parent=5 // pred_check
        %p139 = pneg %p138
      $region18: #{multi_prompt_forward.2} parent=5 // pred_check_branch
        %141 = sbr.rel (%p139) target = $region20
      $region19: #{multi_prompt_forward.2} parent=5 // pred_region
        // Predicated region
        $region21: #{multi_prompt_forward.2} parent=19 // pred_check
          %p142 = pneg %p54
        $region22: #{multi_prompt_forward.2} parent=19 // pred_check_branch
          %144 = sbr.rel (%p142) target = $region24
        $region23: #{multi_prompt_forward.2} parent=19 // pred_region
          %s145 = sand.u32 %s13, 1
          %s146 = scalar_lea.sflag [#allocation5], %s145
          %s147 = sand.u32 %s44, 1
          %s148 = smul.addr %s147, 3840
          %s149 = scalar_lea.vmem [#allocation4], %s148
          %s150 = smul.u32 6, %s13
          %s152 = ssub.s32 61440, 61440
          %153 = vsyncadd %s146, %s152
          %s154 = smul.addr %s150, 64
          %s155 = scalar_lea.hbm %s1, %s154
          %s156 = sshll.u32 %s149, 4
          %s157 = int_to_ptr.vmem [resolvable:$true] %s156
          %162 = dma.hbm_to_vmem [thread:$0]  %s155, 61440, %s157, %s146, 768, 384, 24
        $region24: #{multi_prompt_forward.2} parent=19 // pred_fallthru
          _
        // Predicated region
        $region25: #{multi_prompt_forward.2} parent=19 // pred_check
          %p163 = pneg %p80
        $region26: #{multi_prompt_forward.2} parent=19 // pred_check_branch
          %165 = sbr.rel (%p163) target = $region28
        $region27: #{multi_prompt_forward.2} parent=19 // pred_region
          %s166 = sand.u32 %s13, 1
          %s167 = scalar_lea.sflag [#allocation5], %s166
          %s168 = sand.u32 %s70, 1
          %s169 = smul.addr %s168, 6
          %s170 = scalar_lea.vmem [#allocation6], %s169
          %s171 = smul.u32 6, %s13
          %s173 = ssub.s32 96, 96
          %174 = vsyncadd %s167, %s173
          %s175 = smul.addr %s171, 16
          %s176 = scalar_lea.hbm %s2, %s175
          %s178 = sshll.u32 %s170, 4
          %s179 = int_to_ptr.vmem [resolvable:$true] %s178
          %181 = dma.hbm_to_vmem [thread:$0]  %s176, 96, %s179, %s167
        $region28: #{multi_prompt_forward.2} parent=19 // pred_fallthru
          _
      $region20: #{multi_prompt_forward.2} parent=5 // pred_fallthru
        _
      %p182 = scmp.le.s32.totalorder 1, %s13
      %p183 = scmp.lt.s32.totalorder %s13, 3
      %p184 = pnand %p182, %p183
      %p185 = pneg %p184
      // Predicated region
      $region29: #{multi_prompt_forward.2} parent=5 // pred_check
        _
      $region30: #{multi_prompt_forward.2} parent=5 // pred_check_branch
        %187 = sbr.rel (%p184) target = $region32
      $region31: #{multi_prompt_forward.2} parent=5 // pred_region
        %s188 = ssub.s32 %s13, 1
        // Predicated region
        $region33: #{multi_prompt_forward.2} parent=31 // pred_check
          %p189 = pneg %p34
        $region34: #{multi_prompt_forward.2} parent=31 // pred_check_branch
          %191 = sbr.rel (%p189) target = $region36
        $region35: #{multi_prompt_forward.2} parent=31 // pred_region
          %192 = dma.done [#allocation3], 640
        $region36: #{multi_prompt_forward.2} parent=31 // pred_fallthru
          _
        %s193 = sand.u32 %s18, 1
        %s194 = scalar_lea.sflag [#allocation5], %s193
        %s195 = sand.u32 %s47, 1
        %s196 = smul.addr %s195, 3840
        %s197 = scalar_lea.vmem [#allocation4], %s196
        // Predicated region
        $region37: #{multi_prompt_forward.2} parent=31 // pred_check
          %p198 = pneg %p60
        $region38: #{multi_prompt_forward.2} parent=31 // pred_check_branch
          %200 = sbr.rel (%p198) target = $region40
        $region39: #{multi_prompt_forward.2} parent=31 // pred_region
          %201 = dma.done %s194, 61440
        $region40: #{multi_prompt_forward.2} parent=31 // pred_fallthru
          _
        %s202 = sand.u32 %s18, 1
        %s203 = scalar_lea.sflag [#allocation5], %s202
        %s204 = sand.u32 %s73, 1
        %s205 = smul.addr %s204, 6
        %s206 = scalar_lea.vmem [#allocation6], %s205
        // Predicated region
        $region41: #{multi_prompt_forward.2} parent=31 // pred_check
          %p207 = pneg %p86
        $region42: #{multi_prompt_forward.2} parent=31 // pred_check_branch
          %209 = sbr.rel (%p207) target = $region44
        $region43: #{multi_prompt_forward.2} parent=31 // pred_region
          %210 = dma.done %s203, 96
        $region44: #{multi_prompt_forward.2} parent=31 // pred_fallthru
          _
        %p211 = pneg %p34
        %p212 = pneg %p31
        %s213 = sand.u32 %s18, 1
        %s214 = scalar_lea.sflag [#allocation5], %s213
        %s215 = sand.u32 %s47, 1
        %s216 = smul.addr %s215, 3840
        %s217 = scalar_lea.vmem [#allocation4], %s216
        %p218 = pneg %p60
        %p219 = pneg %p57
        %s220 = sand.u32 %s18, 1
        %s221 = scalar_lea.sflag [#allocation5], %s220
        %s222 = sand.u32 %s73, 1
        %s223 = smul.addr %s222, 6
        %s224 = scalar_lea.vmem [#allocation6], %s223
        %p225 = pneg %p86
        %p226 = pneg %p83
        %p227 = pneg %p112
        %p228 = pneg %p109
        %s229 = smul.u32 6, %s18
        %p230 = scmp.lt.s32.totalorder %s229, 11
        %s231 = scalar_select %p230, %s229, 11
        %s232 = smul.addr %s231, 8
        %s233 = scalar_lea.vmem %s3, %s232
        %s234 = smul.u32 6, %s18
        %s235 = smul.u32 6, %s18
        %s236 = smul.u32 6, %s18
        %p237 = scmp.lt.s32.totalorder %s236, 11
        %s238 = scalar_select %p237, %s236, 11
        %s239 = smul.addr %s238, 8
        %s240 = scalar_lea.vmem %s3, %s239
        %s241 = smul.u32 6, %s18
        %v242 = vld [vmem:[#allocation2] sm:$0xff]
        %v243 = vld [vmem:[#allocation2 + $0x8] sm:$0xff]
        %v244 = vld [vmem:[#allocation2 + $0x10] sm:$0xff]
        %v245 = vld [vmem:[#allocation2 + $0x18] sm:$0xff]
        %v246 = vld [vmem:[#allocation2 + $0x20] sm:$0xff]
        %v247 = vld [vmem:[%s197] sm:$0xff]
        %v248 = vld [vmem:[%s197 + $0x8] sm:$0xff]
        %v249 = vld [vmem:[%s197 + $0x10] sm:$0xff]
        %v250 = vld [vmem:[%s197 + $0x18] sm:$0xff]
        %v251 = vld [vmem:[%s197 + $0x20] sm:$0xff]
        %v252 = vld [vmem:[%s197 + $0x28] sm:$0xff]
        %v253 = vld [vmem:[%s197 + $0x30] sm:$0xff]
        %v254 = vld [vmem:[%s197 + $0x38] sm:$0xff]
        %v255 = vld [vmem:[%s197 + $0x40] sm:$0xff]
        %v256 = vld [vmem:[%s197 + $0x48] sm:$0xff]
        %v257 = vld [vmem:[%s197 + $0x50] sm:$0xff]
        %v258 = vld [vmem:[%s197 + $0x58] sm:$0xff]
        %v259 = vld [vmem:[%s197 + $0x60] sm:$0xff]
        %v260 = vld [vmem:[%s197 + $0x68] sm:$0xff]
        %v261 = vld [vmem:[%s197 + $0x70] sm:$0xff]
        %v262 = vld [vmem:[%s197 + $0x78] sm:$0xff]
        %v263 = vld [vmem:[%s197 + $0x80] sm:$0xff]
        %v264 = vld [vmem:[%s197 + $0x88] sm:$0xff]
        %v265 = vld [vmem:[%s197 + $0x90] sm:$0xff]
        %v266 = vld [vmem:[%s197 + $0x98] sm:$0xff]
        %v267 = vld [vmem:[%s197 + $0xa0] sm:$0xff]
        %v268 = vld [vmem:[%s197 + $0xa8] sm:$0xff]
        %v269 = vld [vmem:[%s197 + $0xb0] sm:$0xff]
        %v270 = vld [vmem:[%s197 + $0xb8] sm:$0xff]
        %v271 = vld [vmem:[%s197 + $0xc0] sm:$0xff]
        %v272 = vld [vmem:[%s197 + $0xc8] sm:$0xff]
        %v273 = vld [vmem:[%s197 + $0xd0] sm:$0xff]
        %v274 = vld [vmem:[%s197 + $0xd8] sm:$0xff]
        %v275 = vld [vmem:[%s197 + $0xe0] sm:$0xff]
        %v276 = vld [vmem:[%s197 + $0xe8] sm:$0xff]
        %v277 = vld [vmem:[%s197 + $0xf0] sm:$0xff]
        %v278 = vld [vmem:[%s197 + $0xf8] sm:$0xff]
        %v279 = vld [vmem:[%s197 + $0x100] sm:$0xff]
        %v280 = vld [vmem:[%s197 + $0x108] sm:$0xff]
        %v281 = vld [vmem:[%s197 + $0x110] sm:$0xff]
        %v282 = vld [vmem:[%s197 + $0x118] sm:$0xff]
        %v283 = vld [vmem:[%s197 + $0x120] sm:$0xff]
        %v284 = vld [vmem:[%s197 + $0x128] sm:$0xff]
        %v285 = vld [vmem:[%s197 + $0x130] sm:$0xff]
        %v286 = vld [vmem:[%s197 + $0x138] sm:$0xff]
        %v287 = vld [vmem:[%s197 + $0x140] sm:$0xff]
        %v288 = vld [vmem:[%s197 + $0x148] sm:$0xff]
        %v289 = vld [vmem:[%s197 + $0x150] sm:$0xff]
        %v290 = vld [vmem:[%s197 + $0x158] sm:$0xff]
        %v291 = vld [vmem:[%s197 + $0x160] sm:$0xff]
        %v292 = vld [vmem:[%s197 + $0x168] sm:$0xff]
        %v293 = vld [vmem:[%s197 + $0x170] sm:$0xff]
        %v294 = vld [vmem:[%s197 + $0x178] sm:$0xff]
        %v295 = vld [vmem:[%s197 + $0x180] sm:$0xff]
        %v296 = vld [vmem:[%s197 + $0x188] sm:$0xff]
        %v297 = vld [vmem:[%s197 + $0x190] sm:$0xff]
        %v298 = vld [vmem:[%s197 + $0x198] sm:$0xff]
        %v299 = vld [vmem:[%s197 + $0x1a0] sm:$0xff]
        %v300 = vld [vmem:[%s197 + $0x1a8] sm:$0xff]
        %v301 = vld [vmem:[%s197 + $0x1b0] sm:$0xff]
        %v302 = vld [vmem:[%s197 + $0x1b8] sm:$0xff]
        %v303 = vld [vmem:[%s197 + $0x1c0] sm:$0xff]
        %v304 = vld [vmem:[%s197 + $0x1c8] sm:$0xff]
        %v305 = vld [vmem:[%s197 + $0x1d0] sm:$0xff]
        %v306 = vld [vmem:[%s197 + $0x1d8] sm:$0xff]
        %v307 = vld [vmem:[%s197 + $0x1e0] sm:$0xff]
        %v308 = vld [vmem:[%s197 + $0x1e8] sm:$0xff]
        %v309 = vld [vmem:[%s197 + $0x1f0] sm:$0xff]
        %v310 = vld [vmem:[%s197 + $0x1f8] sm:$0xff]
        %v311 = vld [vmem:[%s197 + $0x200] sm:$0xff]
        %v312 = vld [vmem:[%s197 + $0x208] sm:$0xff]
        %v313 = vld [vmem:[%s197 + $0x210] sm:$0xff]
        %v314 = vld [vmem:[%s197 + $0x218] sm:$0xff]
        %v315 = vld [vmem:[%s197 + $0x220] sm:$0xff]
        %v316 = vld [vmem:[%s197 + $0x228] sm:$0xff]
        %v317 = vld [vmem:[%s197 + $0x230] sm:$0xff]
        %v318 = vld [vmem:[%s197 + $0x238] sm:$0xff]
        %v319 = vld [vmem:[%s197 + $0x240] sm:$0xff]
        %v320 = vld [vmem:[%s197 + $0x248] sm:$0xff]
        %v321 = vld [vmem:[%s197 + $0x250] sm:$0xff]
        %v322 = vld [vmem:[%s197 + $0x258] sm:$0xff]
        %v323 = vld [vmem:[%s197 + $0x260] sm:$0xff]
        %v324 = vld [vmem:[%s197 + $0x268] sm:$0xff]
        %v325 = vld [vmem:[%s197 + $0x270] sm:$0xff]
        %v326 = vld [vmem:[%s197 + $0x278] sm:$0xff]
        %v327 = vld [vmem:[%s197 + $0x280] sm:$0xff]
        %v328 = vld [vmem:[%s197 + $0x288] sm:$0xff]
        %v329 = vld [vmem:[%s197 + $0x290] sm:$0xff]
        %v330 = vld [vmem:[%s197 + $0x298] sm:$0xff]
        %v331 = vld [vmem:[%s197 + $0x2a0] sm:$0xff]
        %v332 = vld [vmem:[%s197 + $0x2a8] sm:$0xff]
        %v333 = vld [vmem:[%s197 + $0x2b0] sm:$0xff]
        %v334 = vld [vmem:[%s197 + $0x2b8] sm:$0xff]
        %v335 = vld [vmem:[%s197 + $0x2c0] sm:$0xff]
        %v336 = vld [vmem:[%s197 + $0x2c8] sm:$0xff]
        %v337 = vld [vmem:[%s197 + $0x2d0] sm:$0xff]
        %v338 = vld [vmem:[%s197 + $0x2d8] sm:$0xff]
        %v339 = vld [vmem:[%s197 + $0x2e0] sm:$0xff]
        %v340 = vld [vmem:[%s197 + $0x2e8] sm:$0xff]
        %v341 = vld [vmem:[%s197 + $0x2f0] sm:$0xff]
        %v342 = vld [vmem:[%s197 + $0x2f8] sm:$0xff]
        %v343 = vld [vmem:[%s197 + $0x300] sm:$0xff]
        %v344 = vld [vmem:[%s197 + $0x308] sm:$0xff]
        %v345 = vld [vmem:[%s197 + $0x310] sm:$0xff]
        %v346 = vld [vmem:[%s197 + $0x318] sm:$0xff]
        %v347 = vld [vmem:[%s197 + $0x320] sm:$0xff]
        %v348 = vld [vmem:[%s197 + $0x328] sm:$0xff]
        %v349 = vld [vmem:[%s197 + $0x330] sm:$0xff]
        %v350 = vld [vmem:[%s197 + $0x338] sm:$0xff]
        %v351 = vld [vmem:[%s197 + $0x340] sm:$0xff]
        %v352 = vld [vmem:[%s197 + $0x348] sm:$0xff]
        %v353 = vld [vmem:[%s197 + $0x350] sm:$0xff]
        %v354 = vld [vmem:[%s197 + $0x358] sm:$0xff]
        %v355 = vld [vmem:[%s197 + $0x360] sm:$0xff]
        %v356 = vld [vmem:[%s197 + $0x368] sm:$0xff]
        %v357 = vld [vmem:[%s197 + $0x370] sm:$0xff]
        %v358 = vld [vmem:[%s197 + $0x378] sm:$0xff]
        %v359 = vld [vmem:[%s197 + $0x380] sm:$0xff]
        %v360 = vld [vmem:[%s197 + $0x388] sm:$0xff]
        %v361 = vld [vmem:[%s197 + $0x390] sm:$0xff]
        %v362 = vld [vmem:[%s197 + $0x398] sm:$0xff]
        %v363 = vld [vmem:[%s197 + $0x3a0] sm:$0xff]
        %v364 = vld [vmem:[%s197 + $0x3a8] sm:$0xff]
        %v365 = vld [vmem:[%s197 + $0x3b0] sm:$0xff]
        %v366 = vld [vmem:[%s197 + $0x3b8] sm:$0xff]
        %v367 = vld [vmem:[%s197 + $0x3c0] sm:$0xff]
        %v368 = vld [vmem:[%s197 + $0x3c8] sm:$0xff]
        %v369 = vld [vmem:[%s197 + $0x3d0] sm:$0xff]
        %v370 = vld [vmem:[%s197 + $0x3d8] sm:$0xff]
        %v371 = vld [vmem:[%s197 + $0x3e0] sm:$0xff]
        %v372 = vld [vmem:[%s197 + $0x3e8] sm:$0xff]
        %v373 = vld [vmem:[%s197 + $0x3f0] sm:$0xff]
        %v374 = vld [vmem:[%s197 + $0x3f8] sm:$0xff]
        %v375 = vld [vmem:[%s197 + $0x400] sm:$0xff]
        %v376 = vld [vmem:[%s197 + $0x408] sm:$0xff]
        %v377 = vld [vmem:[%s197 + $0x410] sm:$0xff]
        %v378 = vld [vmem:[%s197 + $0x418] sm:$0xff]
        %v379 = vld [vmem:[%s197 + $0x420] sm:$0xff]
        %v380 = vld [vmem:[%s197 + $0x428] sm:$0xff]
        %v381 = vld [vmem:[%s197 + $0x430] sm:$0xff]
        %v382 = vld [vmem:[%s197 + $0x438] sm:$0xff]
        %v383 = vld [vmem:[%s197 + $0x440] sm:$0xff]
        %v384 = vld [vmem:[%s197 + $0x448] sm:$0xff]
        %v385 = vld [vmem:[%s197 + $0x450] sm:$0xff]
        %v386 = vld [vmem:[%s197 + $0x458] sm:$0xff]
        %v387 = vld [vmem:[%s197 + $0x460] sm:$0xff]
        %v388 = vld [vmem:[%s197 + $0x468] sm:$0xff]
        %v389 = vld [vmem:[%s197 + $0x470] sm:$0xff]
        %v390 = vld [vmem:[%s197 + $0x478] sm:$0xff]
        %v391 = vld [vmem:[%s197 + $0x480] sm:$0xff]
        %v392 = vld [vmem:[%s197 + $0x488] sm:$0xff]
        %v393 = vld [vmem:[%s197 + $0x490] sm:$0xff]
        %v394 = vld [vmem:[%s197 + $0x498] sm:$0xff]
        %v395 = vld [vmem:[%s197 + $0x4a0] sm:$0xff]
        %v396 = vld [vmem:[%s197 + $0x4a8] sm:$0xff]
        %v397 = vld [vmem:[%s197 + $0x4b0] sm:$0xff]
        %v398 = vld [vmem:[%s197 + $0x4b8] sm:$0xff]
        %v399 = vld [vmem:[%s197 + $0x4c0] sm:$0xff]
        %v400 = vld [vmem:[%s197 + $0x4c8] sm:$0xff]
        %v401 = vld [vmem:[%s197 + $0x4d0] sm:$0xff]
        %v402 = vld [vmem:[%s197 + $0x4d8] sm:$0xff]
        %v403 = vld [vmem:[%s197 + $0x4e0] sm:$0xff]
        %v404 = vld [vmem:[%s197 + $0x4e8] sm:$0xff]
        %v405 = vld [vmem:[%s197 + $0x4f0] sm:$0xff]
        %v406 = vld [vmem:[%s197 + $0x4f8] sm:$0xff]
        %v407 = vld [vmem:[%s197 + $0x500] sm:$0xff]
        %v408 = vld [vmem:[%s197 + $0x508] sm:$0xff]
        %v409 = vld [vmem:[%s197 + $0x510] sm:$0xff]
        %v410 = vld [vmem:[%s197 + $0x518] sm:$0xff]
        %v411 = vld [vmem:[%s197 + $0x520] sm:$0xff]
        %v412 = vld [vmem:[%s197 + $0x528] sm:$0xff]
        %v413 = vld [vmem:[%s197 + $0x530] sm:$0xff]
        %v414 = vld [vmem:[%s197 + $0x538] sm:$0xff]
        %v415 = vld [vmem:[%s197 + $0x540] sm:$0xff]
        %v416 = vld [vmem:[%s197 + $0x548] sm:$0xff]
        %v417 = vld [vmem:[%s197 + $0x550] sm:$0xff]
        %v418 = vld [vmem:[%s197 + $0x558] sm:$0xff]
        %v419 = vld [vmem:[%s197 + $0x560] sm:$0xff]
        %v420 = vld [vmem:[%s197 + $0x568] sm:$0xff]
        %v421 = vld [vmem:[%s197 + $0x570] sm:$0xff]
        %v422 = vld [vmem:[%s197 + $0x578] sm:$0xff]
        %v423 = vld [vmem:[%s197 + $0x580] sm:$0xff]
        %v424 = vld [vmem:[%s197 + $0x588] sm:$0xff]
        %v425 = vld [vmem:[%s197 + $0x590] sm:$0xff]
        %v426 = vld [vmem:[%s197 + $0x598] sm:$0xff]
        %v427 = vld [vmem:[%s197 + $0x5a0] sm:$0xff]
        %v428 = vld [vmem:[%s197 + $0x5a8] sm:$0xff]
        %v429 = vld [vmem:[%s197 + $0x5b0] sm:$0xff]
        %v430 = vld [vmem:[%s197 + $0x5b8] sm:$0xff]
        %v431 = vld [vmem:[%s197 + $0x5c0] sm:$0xff]
        %v432 = vld [vmem:[%s197 + $0x5c8] sm:$0xff]
        %v433 = vld [vmem:[%s197 + $0x5d0] sm:$0xff]
        %v434 = vld [vmem:[%s197 + $0x5d8] sm:$0xff]
        %v435 = vld [vmem:[%s197 + $0x5e0] sm:$0xff]
        %v436 = vld [vmem:[%s197 + $0x5e8] sm:$0xff]
        %v437 = vld [vmem:[%s197 + $0x5f0] sm:$0xff]
        %v438 = vld [vmem:[%s197 + $0x5f8] sm:$0xff]
        %v439 = vld [vmem:[%s197 + $0x600] sm:$0xff]
        %v440 = vld [vmem:[%s197 + $0x608] sm:$0xff]
        %v441 = vld [vmem:[%s197 + $0x610] sm:$0xff]
        %v442 = vld [vmem:[%s197 + $0x618] sm:$0xff]
        %v443 = vld [vmem:[%s197 + $0x620] sm:$0xff]
        %v444 = vld [vmem:[%s197 + $0x628] sm:$0xff]
        %v445 = vld [vmem:[%s197 + $0x630] sm:$0xff]
        %v446 = vld [vmem:[%s197 + $0x638] sm:$0xff]
        %v447 = vld [vmem:[%s197 + $0x640] sm:$0xff]
        %v448 = vld [vmem:[%s197 + $0x648] sm:$0xff]
        %v449 = vld [vmem:[%s197 + $0x650] sm:$0xff]
        %v450 = vld [vmem:[%s197 + $0x658] sm:$0xff]
        %v451 = vld [vmem:[%s197 + $0x660] sm:$0xff]
        %v452 = vld [vmem:[%s197 + $0x668] sm:$0xff]
        %v453 = vld [vmem:[%s197 + $0x670] sm:$0xff]
        %v454 = vld [vmem:[%s197 + $0x678] sm:$0xff]
        %v455 = vld [vmem:[%s197 + $0x680] sm:$0xff]
        %v456 = vld [vmem:[%s197 + $0x688] sm:$0xff]
        %v457 = vld [vmem:[%s197 + $0x690] sm:$0xff]
        %v458 = vld [vmem:[%s197 + $0x698] sm:$0xff]
        %v459 = vld [vmem:[%s197 + $0x6a0] sm:$0xff]
        %v460 = vld [vmem:[%s197 + $0x6a8] sm:$0xff]
        %v461 = vld [vmem:[%s197 + $0x6b0] sm:$0xff]
        %v462 = vld [vmem:[%s197 + $0x6b8] sm:$0xff]
        %v463 = vld [vmem:[%s197 + $0x6c0] sm:$0xff]
        %v464 = vld [vmem:[%s197 + $0x6c8] sm:$0xff]
        %v465 = vld [vmem:[%s197 + $0x6d0] sm:$0xff]
        %v466 = vld [vmem:[%s197 + $0x6d8] sm:$0xff]
        %v467 = vld [vmem:[%s197 + $0x6e0] sm:$0xff]
        %v468 = vld [vmem:[%s197 + $0x6e8] sm:$0xff]
        %v469 = vld [vmem:[%s197 + $0x6f0] sm:$0xff]
        %v470 = vld [vmem:[%s197 + $0x6f8] sm:$0xff]
        %v471 = vld [vmem:[%s197 + $0x700] sm:$0xff]
        %v472 = vld [vmem:[%s197 + $0x708] sm:$0xff]
        %v473 = vld [vmem:[%s197 + $0x710] sm:$0xff]
        %v474 = vld [vmem:[%s197 + $0x718] sm:$0xff]
        %v475 = vld [vmem:[%s197 + $0x720] sm:$0xff]
        %v476 = vld [vmem:[%s197 + $0x728] sm:$0xff]
        %v477 = vld [vmem:[%s197 + $0x730] sm:$0xff]
        %v478 = vld [vmem:[%s197 + $0x738] sm:$0xff]
        %v479 = vld [vmem:[%s197 + $0x740] sm:$0xff]
        %v480 = vld [vmem:[%s197 + $0x748] sm:$0xff]
        %v481 = vld [vmem:[%s197 + $0x750] sm:$0xff]
        %v482 = vld [vmem:[%s197 + $0x758] sm:$0xff]
        %v483 = vld [vmem:[%s197 + $0x760] sm:$0xff]
        %v484 = vld [vmem:[%s197 + $0x768] sm:$0xff]
        %v485 = vld [vmem:[%s197 + $0x770] sm:$0xff]
        %v486 = vld [vmem:[%s197 + $0x778] sm:$0xff]
        %v487 = vld [vmem:[%s197 + $0x780] sm:$0xff]
        %v488 = vld [vmem:[%s197 + $0x788] sm:$0xff]
        %v489 = vld [vmem:[%s197 + $0x790] sm:$0xff]
        %v490 = vld [vmem:[%s197 + $0x798] sm:$0xff]
        %v491 = vld [vmem:[%s197 + $0x7a0] sm:$0xff]
        %v492 = vld [vmem:[%s197 + $0x7a8] sm:$0xff]
        %v493 = vld [vmem:[%s197 + $0x7b0] sm:$0xff]
        %v494 = vld [vmem:[%s197 + $0x7b8] sm:$0xff]
        %v495 = vld [vmem:[%s197 + $0x7c0] sm:$0xff]
        %v496 = vld [vmem:[%s197 + $0x7c8] sm:$0xff]
        %v497 = vld [vmem:[%s197 + $0x7d0] sm:$0xff]
        %v498 = vld [vmem:[%s197 + $0x7d8] sm:$0xff]
        %v499 = vld [vmem:[%s197 + $0x7e0] sm:$0xff]
        %v500 = vld [vmem:[%s197 + $0x7e8] sm:$0xff]
        %v501 = vld [vmem:[%s197 + $0x7f0] sm:$0xff]
        %v502 = vld [vmem:[%s197 + $0x7f8] sm:$0xff]
        %v503 = vld [vmem:[%s197 + $0x800] sm:$0xff]
        %v504 = vld [vmem:[%s197 + $0x808] sm:$0xff]
        %v505 = vld [vmem:[%s197 + $0x810] sm:$0xff]
        %v506 = vld [vmem:[%s197 + $0x818] sm:$0xff]
        %v507 = vld [vmem:[%s197 + $0x820] sm:$0xff]
        %v508 = vld [vmem:[%s197 + $0x828] sm:$0xff]
        %v509 = vld [vmem:[%s197 + $0x830] sm:$0xff]
        %v510 = vld [vmem:[%s197 + $0x838] sm:$0xff]
        %v511 = vld [vmem:[%s197 + $0x840] sm:$0xff]
        %v512 = vld [vmem:[%s197 + $0x848] sm:$0xff]
        %v513 = vld [vmem:[%s197 + $0x850] sm:$0xff]
        %v514 = vld [vmem:[%s197 + $0x858] sm:$0xff]
        %v515 = vld [vmem:[%s197 + $0x860] sm:$0xff]
        %v516 = vld [vmem:[%s197 + $0x868] sm:$0xff]
        %v517 = vld [vmem:[%s197 + $0x870] sm:$0xff]
        %v518 = vld [vmem:[%s197 + $0x878] sm:$0xff]
        %v519 = vld [vmem:[%s197 + $0x880] sm:$0xff]
        %v520 = vld [vmem:[%s197 + $0x888] sm:$0xff]
        %v521 = vld [vmem:[%s197 + $0x890] sm:$0xff]
        %v522 = vld [vmem:[%s197 + $0x898] sm:$0xff]
        %v523 = vld [vmem:[%s197 + $0x8a0] sm:$0xff]
        %v524 = vld [vmem:[%s197 + $0x8a8] sm:$0xff]
        %v525 = vld [vmem:[%s197 + $0x8b0] sm:$0xff]
        %v526 = vld [vmem:[%s197 + $0x8b8] sm:$0xff]
        %v527 = vld [vmem:[%s197 + $0x8c0] sm:$0xff]
        %v528 = vld [vmem:[%s197 + $0x8c8] sm:$0xff]
        %v529 = vld [vmem:[%s197 + $0x8d0] sm:$0xff]
        %v530 = vld [vmem:[%s197 + $0x8d8] sm:$0xff]
        %v531 = vld [vmem:[%s197 + $0x8e0] sm:$0xff]
        %v532 = vld [vmem:[%s197 + $0x8e8] sm:$0xff]
        %v533 = vld [vmem:[%s197 + $0x8f0] sm:$0xff]
        %v534 = vld [vmem:[%s197 + $0x8f8] sm:$0xff]
        %v535 = vld [vmem:[%s197 + $0x900] sm:$0xff]
        %v536 = vld [vmem:[%s197 + $0x908] sm:$0xff]
        %v537 = vld [vmem:[%s197 + $0x910] sm:$0xff]
        %v538 = vld [vmem:[%s197 + $0x918] sm:$0xff]
        %v539 = vld [vmem:[%s197 + $0x920] sm:$0xff]
        %v540 = vld [vmem:[%s197 + $0x928] sm:$0xff]
        %v541 = vld [vmem:[%s197 + $0x930] sm:$0xff]
        %v542 = vld [vmem:[%s197 + $0x938] sm:$0xff]
        %v543 = vld [vmem:[%s197 + $0x940] sm:$0xff]
        %v544 = vld [vmem:[%s197 + $0x948] sm:$0xff]
        %v545 = vld [vmem:[%s197 + $0x950] sm:$0xff]
        %v546 = vld [vmem:[%s197 + $0x958] sm:$0xff]
        %v547 = vld [vmem:[%s197 + $0x960] sm:$0xff]
        %v548 = vld [vmem:[%s197 + $0x968] sm:$0xff]
        %v549 = vld [vmem:[%s197 + $0x970] sm:$0xff]
        %v550 = vld [vmem:[%s197 + $0x978] sm:$0xff]
        %v551 = vld [vmem:[%s197 + $0x980] sm:$0xff]
        %v552 = vld [vmem:[%s197 + $0x988] sm:$0xff]
        %v553 = vld [vmem:[%s197 + $0x990] sm:$0xff]
        %v554 = vld [vmem:[%s197 + $0x998] sm:$0xff]
        %v555 = vld [vmem:[%s197 + $0x9a0] sm:$0xff]
        %v556 = vld [vmem:[%s197 + $0x9a8] sm:$0xff]
        %v557 = vld [vmem:[%s197 + $0x9b0] sm:$0xff]
        %v558 = vld [vmem:[%s197 + $0x9b8] sm:$0xff]
        %v559 = vld [vmem:[%s197 + $0x9c0] sm:$0xff]
        %v560 = vld [vmem:[%s197 + $0x9c8] sm:$0xff]
        %v561 = vld [vmem:[%s197 + $0x9d0] sm:$0xff]
        %v562 = vld [vmem:[%s197 + $0x9d8] sm:$0xff]
        %v563 = vld [vmem:[%s197 + $0x9e0] sm:$0xff]
        %v564 = vld [vmem:[%s197 + $0x9e8] sm:$0xff]
        %v565 = vld [vmem:[%s197 + $0x9f0] sm:$0xff]
        %v566 = vld [vmem:[%s197 + $0x9f8] sm:$0xff]
        %v567 = vld [vmem:[%s197 + $0xa00] sm:$0xff]
        %v568 = vld [vmem:[%s197 + $0xa08] sm:$0xff]
        %v569 = vld [vmem:[%s197 + $0xa10] sm:$0xff]
        %v570 = vld [vmem:[%s197 + $0xa18] sm:$0xff]
        %v571 = vld [vmem:[%s197 + $0xa20] sm:$0xff]
        %v572 = vld [vmem:[%s197 + $0xa28] sm:$0xff]
        %v573 = vld [vmem:[%s197 + $0xa30] sm:$0xff]
        %v574 = vld [vmem:[%s197 + $0xa38] sm:$0xff]
        %v575 = vld [vmem:[%s197 + $0xa40] sm:$0xff]
        %v576 = vld [vmem:[%s197 + $0xa48] sm:$0xff]
        %v577 = vld [vmem:[%s197 + $0xa50] sm:$0xff]
        %v578 = vld [vmem:[%s197 + $0xa58] sm:$0xff]
        %v579 = vld [vmem:[%s197 + $0xa60] sm:$0xff]
        %v580 = vld [vmem:[%s197 + $0xa68] sm:$0xff]
        %v581 = vld [vmem:[%s197 + $0xa70] sm:$0xff]
        %v582 = vld [vmem:[%s197 + $0xa78] sm:$0xff]
        %v583 = vld [vmem:[%s197 + $0xa80] sm:$0xff]
        %v584 = vld [vmem:[%s197 + $0xa88] sm:$0xff]
        %v585 = vld [vmem:[%s197 + $0xa90] sm:$0xff]
        %v586 = vld [vmem:[%s197 + $0xa98] sm:$0xff]
        %v587 = vld [vmem:[%s197 + $0xaa0] sm:$0xff]
        %v588 = vld [vmem:[%s197 + $0xaa8] sm:$0xff]
        %v589 = vld [vmem:[%s197 + $0xab0] sm:$0xff]
        %v590 = vld [vmem:[%s197 + $0xab8] sm:$0xff]
        %v591 = vld [vmem:[%s197 + $0xac0] sm:$0xff]
        %v592 = vld [vmem:[%s197 + $0xac8] sm:$0xff]
        %v593 = vld [vmem:[%s197 + $0xad0] sm:$0xff]
        %v594 = vld [vmem:[%s197 + $0xad8] sm:$0xff]
        %v595 = vld [vmem:[%s197 + $0xae0] sm:$0xff]
        %v596 = vld [vmem:[%s197 + $0xae8] sm:$0xff]
        %v597 = vld [vmem:[%s197 + $0xaf0] sm:$0xff]
        %v598 = vld [vmem:[%s197 + $0xaf8] sm:$0xff]
        %v599 = vld [vmem:[%s197 + $0xb00] sm:$0xff]
        %v600 = vld [vmem:[%s197 + $0xb08] sm:$0xff]
        %v601 = vld [vmem:[%s197 + $0xb10] sm:$0xff]
        %v602 = vld [vmem:[%s197 + $0xb18] sm:$0xff]
        %v603 = vld [vmem:[%s197 + $0xb20] sm:$0xff]
        %v604 = vld [vmem:[%s197 + $0xb28] sm:$0xff]
        %v605 = vld [vmem:[%s197 + $0xb30] sm:$0xff]
        %v606 = vld [vmem:[%s197 + $0xb38] sm:$0xff]
        %v607 = vld [vmem:[%s197 + $0xb40] sm:$0xff]
        %v608 = vld [vmem:[%s197 + $0xb48] sm:$0xff]
        %v609 = vld [vmem:[%s197 + $0xb50] sm:$0xff]
        %v610 = vld [vmem:[%s197 + $0xb58] sm:$0xff]
        %v611 = vld [vmem:[%s197 + $0xb60] sm:$0xff]
        %v612 = vld [vmem:[%s197 + $0xb68] sm:$0xff]
        %v613 = vld [vmem:[%s197 + $0xb70] sm:$0xff]
        %v614 = vld [vmem:[%s197 + $0xb78] sm:$0xff]
        %v615 = vld [vmem:[%s197 + $0xb80] sm:$0xff]
        %v616 = vld [vmem:[%s197 + $0xb88] sm:$0xff]
        %v617 = vld [vmem:[%s197 + $0xb90] sm:$0xff]
        %v618 = vld [vmem:[%s197 + $0xb98] sm:$0xff]
        %v619 = vld [vmem:[%s197 + $0xba0] sm:$0xff]
        %v620 = vld [vmem:[%s197 + $0xba8] sm:$0xff]
        %v621 = vld [vmem:[%s197 + $0xbb0] sm:$0xff]
        %v622 = vld [vmem:[%s197 + $0xbb8] sm:$0xff]
        %v623 = vld [vmem:[%s197 + $0xbc0] sm:$0xff]
        %v624 = vld [vmem:[%s197 + $0xbc8] sm:$0xff]
        %v625 = vld [vmem:[%s197 + $0xbd0] sm:$0xff]
        %v626 = vld [vmem:[%s197 + $0xbd8] sm:$0xff]
        %v627 = vld [vmem:[%s197 + $0xbe0] sm:$0xff]
        %v628 = vld [vmem:[%s197 + $0xbe8] sm:$0xff]
        %v629 = vld [vmem:[%s197 + $0xbf0] sm:$0xff]
        %v630 = vld [vmem:[%s197 + $0xbf8] sm:$0xff]
        %v631 = vld [vmem:[%s197 + $0xc00] sm:$0xff]
        %v632 = vld [vmem:[%s197 + $0xc08] sm:$0xff]
        %v633 = vld [vmem:[%s197 + $0xc10] sm:$0xff]
        %v634 = vld [vmem:[%s197 + $0xc18] sm:$0xff]
        %v635 = vld [vmem:[%s197 + $0xc20] sm:$0xff]
        %v636 = vld [vmem:[%s197 + $0xc28] sm:$0xff]
        %v637 = vld [vmem:[%s197 + $0xc30] sm:$0xff]
        %v638 = vld [vmem:[%s197 + $0xc38] sm:$0xff]
        %v639 = vld [vmem:[%s197 + $0xc40] sm:$0xff]
        %v640 = vld [vmem:[%s197 + $0xc48] sm:$0xff]
        %v641 = vld [vmem:[%s197 + $0xc50] sm:$0xff]
        %v642 = vld [vmem:[%s197 + $0xc58] sm:$0xff]
        %v643 = vld [vmem:[%s197 + $0xc60] sm:$0xff]
        %v644 = vld [vmem:[%s197 + $0xc68] sm:$0xff]
        %v645 = vld [vmem:[%s197 + $0xc70] sm:$0xff]
        %v646 = vld [vmem:[%s197 + $0xc78] sm:$0xff]
        %v647 = vld [vmem:[%s197 + $0xc80] sm:$0xff]
        %v648 = vld [vmem:[%s197 + $0xc88] sm:$0xff]
        %v649 = vld [vmem:[%s197 + $0xc90] sm:$0xff]
        %v650 = vld [vmem:[%s197 + $0xc98] sm:$0xff]
        %v651 = vld [vmem:[%s197 + $0xca0] sm:$0xff]
        %v652 = vld [vmem:[%s197 + $0xca8] sm:$0xff]
        %v653 = vld [vmem:[%s197 + $0xcb0] sm:$0xff]
        %v654 = vld [vmem:[%s197 + $0xcb8] sm:$0xff]
        %v655 = vld [vmem:[%s197 + $0xcc0] sm:$0xff]
        %v656 = vld [vmem:[%s197 + $0xcc8] sm:$0xff]
        %v657 = vld [vmem:[%s197 + $0xcd0] sm:$0xff]
        %v658 = vld [vmem:[%s197 + $0xcd8] sm:$0xff]
        %v659 = vld [vmem:[%s197 + $0xce0] sm:$0xff]
        %v660 = vld [vmem:[%s197 + $0xce8] sm:$0xff]
        %v661 = vld [vmem:[%s197 + $0xcf0] sm:$0xff]
        %v662 = vld [vmem:[%s197 + $0xcf8] sm:$0xff]
        %v663 = vld [vmem:[%s197 + $0xd00] sm:$0xff]
        %v664 = vld [vmem:[%s197 + $0xd08] sm:$0xff]
        %v665 = vld [vmem:[%s197 + $0xd10] sm:$0xff]
        %v666 = vld [vmem:[%s197 + $0xd18] sm:$0xff]
        %v667 = vld [vmem:[%s197 + $0xd20] sm:$0xff]
        %v668 = vld [vmem:[%s197 + $0xd28] sm:$0xff]
        %v669 = vld [vmem:[%s197 + $0xd30] sm:$0xff]
        %v670 = vld [vmem:[%s197 + $0xd38] sm:$0xff]
        %v671 = vld [vmem:[%s197 + $0xd40] sm:$0xff]
        %v672 = vld [vmem:[%s197 + $0xd48] sm:$0xff]
        %v673 = vld [vmem:[%s197 + $0xd50] sm:$0xff]
        %v674 = vld [vmem:[%s197 + $0xd58] sm:$0xff]
        %v675 = vld [vmem:[%s197 + $0xd60] sm:$0xff]
        %v676 = vld [vmem:[%s197 + $0xd68] sm:$0xff]
        %v677 = vld [vmem:[%s197 + $0xd70] sm:$0xff]
        %v678 = vld [vmem:[%s197 + $0xd78] sm:$0xff]
        %v679 = vld [vmem:[%s197 + $0xd80] sm:$0xff]
        %v680 = vld [vmem:[%s197 + $0xd88] sm:$0xff]
        %v681 = vld [vmem:[%s197 + $0xd90] sm:$0xff]
        %v682 = vld [vmem:[%s197 + $0xd98] sm:$0xff]
        %v683 = vld [vmem:[%s197 + $0xda0] sm:$0xff]
        %v684 = vld [vmem:[%s197 + $0xda8] sm:$0xff]
        %v685 = vld [vmem:[%s197 + $0xdb0] sm:$0xff]
        %v686 = vld [vmem:[%s197 + $0xdb8] sm:$0xff]
        %v687 = vld [vmem:[%s197 + $0xdc0] sm:$0xff]
        %v688 = vld [vmem:[%s197 + $0xdc8] sm:$0xff]
        %v689 = vld [vmem:[%s197 + $0xdd0] sm:$0xff]
        %v690 = vld [vmem:[%s197 + $0xdd8] sm:$0xff]
        %v691 = vld [vmem:[%s197 + $0xde0] sm:$0xff]
        %v692 = vld [vmem:[%s197 + $0xde8] sm:$0xff]
        %v693 = vld [vmem:[%s197 + $0xdf0] sm:$0xff]
        %v694 = vld [vmem:[%s197 + $0xdf8] sm:$0xff]
        %v695 = vld [vmem:[%s197 + $0xe00] sm:$0xff]
        %v696 = vld [vmem:[%s197 + $0xe08] sm:$0xff]
        %v697 = vld [vmem:[%s197 + $0xe10] sm:$0xff]
        %v698 = vld [vmem:[%s197 + $0xe18] sm:$0xff]
        %v699 = vld [vmem:[%s197 + $0xe20] sm:$0xff]
        %v700 = vld [vmem:[%s197 + $0xe28] sm:$0xff]
        %v701 = vld [vmem:[%s197 + $0xe30] sm:$0xff]
        %v702 = vld [vmem:[%s197 + $0xe38] sm:$0xff]
        %v703 = vld [vmem:[%s197 + $0xe40] sm:$0xff]
        %v704 = vld [vmem:[%s197 + $0xe48] sm:$0xff]
        %v705 = vld [vmem:[%s197 + $0xe50] sm:$0xff]
        %v706 = vld [vmem:[%s197 + $0xe58] sm:$0xff]
        %v707 = vld [vmem:[%s197 + $0xe60] sm:$0xff]
        %v708 = vld [vmem:[%s197 + $0xe68] sm:$0xff]
        %v709 = vld [vmem:[%s197 + $0xe70] sm:$0xff]
        %v710 = vld [vmem:[%s197 + $0xe78] sm:$0xff]
        %v711 = vld [vmem:[%s197 + $0xe80] sm:$0xff]
        %v712 = vld [vmem:[%s197 + $0xe88] sm:$0xff]
        %v713 = vld [vmem:[%s197 + $0xe90] sm:$0xff]
        %v714 = vld [vmem:[%s197 + $0xe98] sm:$0xff]
        %v715 = vld [vmem:[%s197 + $0xea0] sm:$0xff]
        %v716 = vld [vmem:[%s197 + $0xea8] sm:$0xff]
        %v717 = vld [vmem:[%s197 + $0xeb0] sm:$0xff]
        %v718 = vld [vmem:[%s197 + $0xeb8] sm:$0xff]
        %v719 = vld [vmem:[%s197 + $0xec0] sm:$0xff]
        %v720 = vld [vmem:[%s197 + $0xec8] sm:$0xff]
        %v721 = vld [vmem:[%s197 + $0xed0] sm:$0xff]
        %v722 = vld [vmem:[%s197 + $0xed8] sm:$0xff]
        %v723 = vld [vmem:[%s197 + $0xee0] sm:$0xff]
        %v724 = vld [vmem:[%s197 + $0xee8] sm:$0xff]
        %v725 = vld [vmem:[%s197 + $0xef0] sm:$0xff]
        %v726 = vld [vmem:[%s197 + $0xef8] sm:$0xff]
        %v727 = vld [vmem:[%s206] sm:$0x3f]
        %v729 = vlaneseq
        %v730 = vshrl.u32 %v729, 7
        %v731 = vsub.s32 0, %v730
        %v732 = vrot.slane %v727, %v731
        %v733 = vlaneseq
        %v734 = vshrl.u32 %v733, 7
        %v735 = vsub.s32 1, %v734
        %v736 = vrot.slane %v727, %v735
        %v737 = vlaneseq
        %v738 = vshrl.u32 %v737, 7
        %v739 = vsub.s32 2, %v738
        %v740 = vrot.slane %v727, %v739
        %v741 = vlaneseq
        %v742 = vshrl.u32 %v741, 7
        %v743 = vsub.s32 3, %v742
        %v744 = vrot.slane %v727, %v743
        %v745 = vlaneseq
        %v746 = vshrl.u32 %v745, 7
        %v747 = vsub.s32 4, %v746
        %v748 = vrot.slane %v727, %v747
        %v749 = vlaneseq
        %v750 = vshrl.u32 %v749, 7
        %v751 = vsub.s32 5, %v750
        %v752 = vrot.slane %v727, %v751
        %v764 = vunpack.c.l.b16 %v242
        %v765 = vunpack.c.h.b16 %v242
        %v766 = vunpack.c.l.b16 %v243
        %v767 = vunpack.c.h.b16 %v243
        %v768 = vunpack.c.l.b16 %v244
        %v769 = vunpack.c.h.b16 %v244
        %v770 = vunpack.c.l.b16 %v245
        %v771 = vunpack.c.h.b16 %v245
        %v772 = vunpack.c.l.b16 %v246
        %v773 = vunpack.c.h.b16 %v246
        %v774 = vpack.c.b16 %v764, %v764
        %v775 = vpack.c.b16 %v765, %v765
        %v776 = vpack.c.b16 %v766, %v766
        %v777 = vpack.c.b16 %v767, %v767
        %v778 = vpack.c.b16 %v768, %v768
        %v779 = vpack.c.b16 %v769, %v769
        %v780 = vpack.c.b16 %v770, %v770
        %v781 = vpack.c.b16 %v771, %v771
        %v782 = vpack.c.b16 %v772, %v772
        %v783 = vpack.c.b16 %v773, %v773
        %v1274 = vunpack.c.l.b16 %v247
        %v1275 = vunpack.c.h.b16 %v247
        %v1276 = vunpack.c.l.b16 %v248
        %v1277 = vunpack.c.h.b16 %v248
        %v1278 = vunpack.c.l.b16 %v249
        %v1279 = vunpack.c.h.b16 %v249
        %v1280 = vunpack.c.l.b16 %v250
        %v1281 = vunpack.c.h.b16 %v250
        %v1282 = vunpack.c.l.b16 %v251
        %v1283 = vunpack.c.h.b16 %v251
        %v1284 = vunpack.c.l.b16 %v252
        %v1285 = vunpack.c.h.b16 %v252
        %v1286 = vunpack.c.l.b16 %v253
        %v1287 = vunpack.c.h.b16 %v253
        %v1288 = vunpack.c.l.b16 %v254
        %v1289 = vunpack.c.h.b16 %v254
        %v1290 = vunpack.c.l.b16 %v255
        %v1291 = vunpack.c.h.b16 %v255
        %v1292 = vunpack.c.l.b16 %v256
        %v1293 = vunpack.c.h.b16 %v256
        %v1294 = vunpack.c.l.b16 %v257
        %v1295 = vunpack.c.h.b16 %v257
        %v1296 = vunpack.c.l.b16 %v258
        %v1297 = vunpack.c.h.b16 %v258
        %v1298 = vunpack.c.l.b16 %v259
        %v1299 = vunpack.c.h.b16 %v259
        %v1300 = vunpack.c.l.b16 %v260
        %v1301 = vunpack.c.h.b16 %v260
        %v1302 = vunpack.c.l.b16 %v261
        %v1303 = vunpack.c.h.b16 %v261
        %v1304 = vunpack.c.l.b16 %v262
        %v1305 = vunpack.c.h.b16 %v262
        %v1306 = vunpack.c.l.b16 %v263
        %v1307 = vunpack.c.h.b16 %v263
        %v1308 = vunpack.c.l.b16 %v264
        %v1309 = vunpack.c.h.b16 %v264
        %v1310 = vunpack.c.l.b16 %v265
        %v1311 = vunpack.c.h.b16 %v265
        %v1312 = vunpack.c.l.b16 %v266
        %v1313 = vunpack.c.h.b16 %v266
        %v1314 = vunpack.c.l.b16 %v267
        %v1315 = vunpack.c.h.b16 %v267
        %v1316 = vunpack.c.l.b16 %v268
        %v1317 = vunpack.c.h.b16 %v268
        %v1318 = vunpack.c.l.b16 %v269
        %v1319 = vunpack.c.h.b16 %v269
        %v1320 = vunpack.c.l.b16 %v270
        %v1321 = vunpack.c.h.b16 %v270
        %v1322 = vunpack.c.l.b16 %v271
        %v1323 = vunpack.c.h.b16 %v271
        %v1324 = vunpack.c.l.b16 %v272
        %v1325 = vunpack.c.h.b16 %v272
        %v1326 = vunpack.c.l.b16 %v273
        %v1327 = vunpack.c.h.b16 %v273
        %v1328 = vunpack.c.l.b16 %v274
        %v1329 = vunpack.c.h.b16 %v274
        %v1330 = vunpack.c.l.b16 %v275
        %v1331 = vunpack.c.h.b16 %v275
        %v1332 = vunpack.c.l.b16 %v276
        %v1333 = vunpack.c.h.b16 %v276
        %v1334 = vunpack.c.l.b16 %v277
        %v1335 = vunpack.c.h.b16 %v277
        %v1336 = vunpack.c.l.b16 %v278
        %v1337 = vunpack.c.h.b16 %v278
        %v1338 = vunpack.c.l.b16 %v279
        %v1339 = vunpack.c.h.b16 %v279
        %v1340 = vunpack.c.l.b16 %v280
        %v1341 = vunpack.c.h.b16 %v280
        %v1342 = vunpack.c.l.b16 %v281
        %v1343 = vunpack.c.h.b16 %v281
        %v1344 = vunpack.c.l.b16 %v282
        %v1345 = vunpack.c.h.b16 %v282
        %v1346 = vunpack.c.l.b16 %v283
        %v1347 = vunpack.c.h.b16 %v283
        %v1348 = vunpack.c.l.b16 %v284
        %v1349 = vunpack.c.h.b16 %v284
        %v1350 = vunpack.c.l.b16 %v285
        %v1351 = vunpack.c.h.b16 %v285
        %v1352 = vunpack.c.l.b16 %v286
        %v1353 = vunpack.c.h.b16 %v286
        %v1354 = vunpack.c.l.b16 %v287
        %v1355 = vunpack.c.h.b16 %v287
        %v1356 = vunpack.c.l.b16 %v288
        %v1357 = vunpack.c.h.b16 %v288
        %v1358 = vunpack.c.l.b16 %v289
        %v1359 = vunpack.c.h.b16 %v289
        %v1360 = vunpack.c.l.b16 %v290
        %v1361 = vunpack.c.h.b16 %v290
        %v1362 = vunpack.c.l.b16 %v291
        %v1363 = vunpack.c.h.b16 %v291
        %v1364 = vunpack.c.l.b16 %v292
        %v1365 = vunpack.c.h.b16 %v292
        %v1366 = vunpack.c.l.b16 %v293
        %v1367 = vunpack.c.h.b16 %v293
        %v1368 = vunpack.c.l.b16 %v294
        %v1369 = vunpack.c.h.b16 %v294
        %v1370 = vunpack.c.l.b16 %v295
        %v1371 = vunpack.c.h.b16 %v295
        %v1372 = vunpack.c.l.b16 %v296
        %v1373 = vunpack.c.h.b16 %v296
        %v1374 = vunpack.c.l.b16 %v297
        %v1375 = vunpack.c.h.b16 %v297
        %v1376 = vunpack.c.l.b16 %v298
        %v1377 = vunpack.c.h.b16 %v298
        %v1378 = vunpack.c.l.b16 %v299
        %v1379 = vunpack.c.h.b16 %v299
        %v1380 = vunpack.c.l.b16 %v300
        %v1381 = vunpack.c.h.b16 %v300
        %v1382 = vunpack.c.l.b16 %v301
        %v1383 = vunpack.c.h.b16 %v301
        %v1384 = vunpack.c.l.b16 %v302
        %v1385 = vunpack.c.h.b16 %v302
        %v1386 = vunpack.c.l.b16 %v303
        %v1387 = vunpack.c.h.b16 %v303
        %v1388 = vunpack.c.l.b16 %v304
        %v1389 = vunpack.c.h.b16 %v304
        %v1390 = vunpack.c.l.b16 %v305
        %v1391 = vunpack.c.h.b16 %v305
        %v1392 = vunpack.c.l.b16 %v306
        %v1393 = vunpack.c.h.b16 %v306
        %v1394 = vunpack.c.l.b16 %v307
        %v1395 = vunpack.c.h.b16 %v307
        %v1396 = vunpack.c.l.b16 %v308
        %v1397 = vunpack.c.h.b16 %v308
        %v1398 = vunpack.c.l.b16 %v309
        %v1399 = vunpack.c.h.b16 %v309
        %v1400 = vunpack.c.l.b16 %v310
        %v1401 = vunpack.c.h.b16 %v310
        %v1402 = vunpack.c.l.b16 %v311
        %v1403 = vunpack.c.h.b16 %v311
        %v1404 = vunpack.c.l.b16 %v312
        %v1405 = vunpack.c.h.b16 %v312
        %v1406 = vunpack.c.l.b16 %v313
        %v1407 = vunpack.c.h.b16 %v313
        %v1408 = vunpack.c.l.b16 %v314
        %v1409 = vunpack.c.h.b16 %v314
        %v1410 = vunpack.c.l.b16 %v315
        %v1411 = vunpack.c.h.b16 %v315
        %v1412 = vunpack.c.l.b16 %v316
        %v1413 = vunpack.c.h.b16 %v316
        %v1414 = vunpack.c.l.b16 %v317
        %v1415 = vunpack.c.h.b16 %v317
        %v1416 = vunpack.c.l.b16 %v318
        %v1417 = vunpack.c.h.b16 %v318
        %v1418 = vunpack.c.l.b16 %v319
        %v1419 = vunpack.c.h.b16 %v319
        %v1420 = vunpack.c.l.b16 %v320
        %v1421 = vunpack.c.h.b16 %v320
        %v1422 = vunpack.c.l.b16 %v321
        %v1423 = vunpack.c.h.b16 %v321
        %v1424 = vunpack.c.l.b16 %v322
        %v1425 = vunpack.c.h.b16 %v322
        %v1426 = vunpack.c.l.b16 %v323
        %v1427 = vunpack.c.h.b16 %v323
        %v1428 = vunpack.c.l.b16 %v324
        %v1429 = vunpack.c.h.b16 %v324
        %v1430 = vunpack.c.l.b16 %v325
        %v1431 = vunpack.c.h.b16 %v325
        %v1432 = vunpack.c.l.b16 %v326
        %v1433 = vunpack.c.h.b16 %v326
        %v1434 = vunpack.c.l.b16 %v327
        %v1435 = vunpack.c.h.b16 %v327
        %v1436 = vunpack.c.l.b16 %v328
        %v1437 = vunpack.c.h.b16 %v328
        %v1438 = vunpack.c.l.b16 %v329
        %v1439 = vunpack.c.h.b16 %v329
        %v1440 = vunpack.c.l.b16 %v330
        %v1441 = vunpack.c.h.b16 %v330
        %v1442 = vunpack.c.l.b16 %v331
        %v1443 = vunpack.c.h.b16 %v331
        %v1444 = vunpack.c.l.b16 %v332
        %v1445 = vunpack.c.h.b16 %v332
        %v1446 = vunpack.c.l.b16 %v333
        %v1447 = vunpack.c.h.b16 %v333
        %v1448 = vunpack.c.l.b16 %v334
        %v1449 = vunpack.c.h.b16 %v334
        %v1450 = vunpack.c.l.b16 %v335
        %v1451 = vunpack.c.h.b16 %v335
        %v1452 = vunpack.c.l.b16 %v336
        %v1453 = vunpack.c.h.b16 %v336
        %v1454 = vunpack.c.l.b16 %v337
        %v1455 = vunpack.c.h.b16 %v337
        %v1456 = vunpack.c.l.b16 %v338
        %v1457 = vunpack.c.h.b16 %v338
        %v1458 = vunpack.c.l.b16 %v339
        %v1459 = vunpack.c.h.b16 %v339
        %v1460 = vunpack.c.l.b16 %v340
        %v1461 = vunpack.c.h.b16 %v340
        %v1462 = vunpack.c.l.b16 %v341
        %v1463 = vunpack.c.h.b16 %v341
        %v1464 = vunpack.c.l.b16 %v342
        %v1465 = vunpack.c.h.b16 %v342
        %v1466 = vunpack.c.l.b16 %v343
        %v1467 = vunpack.c.h.b16 %v343
        %v1468 = vunpack.c.l.b16 %v344
        %v1469 = vunpack.c.h.b16 %v344
        %v1470 = vunpack.c.l.b16 %v345
        %v1471 = vunpack.c.h.b16 %v345
        %v1472 = vunpack.c.l.b16 %v346
        %v1473 = vunpack.c.h.b16 %v346
        %v1474 = vunpack.c.l.b16 %v347
        %v1475 = vunpack.c.h.b16 %v347
        %v1476 = vunpack.c.l.b16 %v348
        %v1477 = vunpack.c.h.b16 %v348
        %v1478 = vunpack.c.l.b16 %v349
        %v1479 = vunpack.c.h.b16 %v349
        %v1480 = vunpack.c.l.b16 %v350
        %v1481 = vunpack.c.h.b16 %v350
        %v1482 = vunpack.c.l.b16 %v351
        %v1483 = vunpack.c.h.b16 %v351
        %v1484 = vunpack.c.l.b16 %v352
        %v1485 = vunpack.c.h.b16 %v352
        %v1486 = vunpack.c.l.b16 %v353
        %v1487 = vunpack.c.h.b16 %v353
        %v1488 = vunpack.c.l.b16 %v354
        %v1489 = vunpack.c.h.b16 %v354
        %v1490 = vunpack.c.l.b16 %v355
        %v1491 = vunpack.c.h.b16 %v355
        %v1492 = vunpack.c.l.b16 %v356
        %v1493 = vunpack.c.h.b16 %v356
        %v1494 = vunpack.c.l.b16 %v357
        %v1495 = vunpack.c.h.b16 %v357
        %v1496 = vunpack.c.l.b16 %v358
        %v1497 = vunpack.c.h.b16 %v358
        %v1498 = vunpack.c.l.b16 %v359
        %v1499 = vunpack.c.h.b16 %v359
        %v1500 = vunpack.c.l.b16 %v360
        %v1501 = vunpack.c.h.b16 %v360
        %v1502 = vunpack.c.l.b16 %v361
        %v1503 = vunpack.c.h.b16 %v361
        %v1504 = vunpack.c.l.b16 %v362
        %v1505 = vunpack.c.h.b16 %v362
        %v1506 = vunpack.c.l.b16 %v363
        %v1507 = vunpack.c.h.b16 %v363
        %v1508 = vunpack.c.l.b16 %v364
        %v1509 = vunpack.c.h.b16 %v364
        %v1510 = vunpack.c.l.b16 %v365
        %v1511 = vunpack.c.h.b16 %v365
        %v1512 = vunpack.c.l.b16 %v366
        %v1513 = vunpack.c.h.b16 %v366
        %v1514 = vunpack.c.l.b16 %v367
        %v1515 = vunpack.c.h.b16 %v367
        %v1516 = vunpack.c.l.b16 %v368
        %v1517 = vunpack.c.h.b16 %v368
        %v1518 = vunpack.c.l.b16 %v369
        %v1519 = vunpack.c.h.b16 %v369
        %v1520 = vunpack.c.l.b16 %v370
        %v1521 = vunpack.c.h.b16 %v370
        %v1522 = vunpack.c.l.b16 %v371
        %v1523 = vunpack.c.h.b16 %v371
        %v1524 = vunpack.c.l.b16 %v372
        %v1525 = vunpack.c.h.b16 %v372
        %v1526 = vunpack.c.l.b16 %v373
        %v1527 = vunpack.c.h.b16 %v373
        %v1528 = vunpack.c.l.b16 %v374
        %v1529 = vunpack.c.h.b16 %v374
        %v1530 = vunpack.c.l.b16 %v375
        %v1531 = vunpack.c.h.b16 %v375
        %v1532 = vunpack.c.l.b16 %v376
        %v1533 = vunpack.c.h.b16 %v376
        %v1534 = vunpack.c.l.b16 %v377
        %v1535 = vunpack.c.h.b16 %v377
        %v1536 = vunpack.c.l.b16 %v378
        %v1537 = vunpack.c.h.b16 %v378
        %v1538 = vunpack.c.l.b16 %v379
        %v1539 = vunpack.c.h.b16 %v379
        %v1540 = vunpack.c.l.b16 %v380
        %v1541 = vunpack.c.h.b16 %v380
        %v1542 = vunpack.c.l.b16 %v381
        %v1543 = vunpack.c.h.b16 %v381
        %v1544 = vunpack.c.l.b16 %v382
        %v1545 = vunpack.c.h.b16 %v382
        %v1546 = vunpack.c.l.b16 %v383
        %v1547 = vunpack.c.h.b16 %v383
        %v1548 = vunpack.c.l.b16 %v384
        %v1549 = vunpack.c.h.b16 %v384
        %v1550 = vunpack.c.l.b16 %v385
        %v1551 = vunpack.c.h.b16 %v385
        %v1552 = vunpack.c.l.b16 %v386
        %v1553 = vunpack.c.h.b16 %v386
        %v1554 = vunpack.c.l.b16 %v387
        %v1555 = vunpack.c.h.b16 %v387
        %v1556 = vunpack.c.l.b16 %v388
        %v1557 = vunpack.c.h.b16 %v388
        %v1558 = vunpack.c.l.b16 %v389
        %v1559 = vunpack.c.h.b16 %v389
        %v1560 = vunpack.c.l.b16 %v390
        %v1561 = vunpack.c.h.b16 %v390
        %v1562 = vunpack.c.l.b16 %v391
        %v1563 = vunpack.c.h.b16 %v391
        %v1564 = vunpack.c.l.b16 %v392
        %v1565 = vunpack.c.h.b16 %v392
        %v1566 = vunpack.c.l.b16 %v393
        %v1567 = vunpack.c.h.b16 %v393
        %v1568 = vunpack.c.l.b16 %v394
        %v1569 = vunpack.c.h.b16 %v394
        %v1570 = vunpack.c.l.b16 %v395
        %v1571 = vunpack.c.h.b16 %v395
        %v1572 = vunpack.c.l.b16 %v396
        %v1573 = vunpack.c.h.b16 %v396
        %v1574 = vunpack.c.l.b16 %v397
        %v1575 = vunpack.c.h.b16 %v397
        %v1576 = vunpack.c.l.b16 %v398
        %v1577 = vunpack.c.h.b16 %v398
        %v1578 = vunpack.c.l.b16 %v399
        %v1579 = vunpack.c.h.b16 %v399
        %v1580 = vunpack.c.l.b16 %v400
        %v1581 = vunpack.c.h.b16 %v400
        %v1582 = vunpack.c.l.b16 %v401
        %v1583 = vunpack.c.h.b16 %v401
        %v1584 = vunpack.c.l.b16 %v402
        %v1585 = vunpack.c.h.b16 %v402
        %v1586 = vunpack.c.l.b16 %v403
        %v1587 = vunpack.c.h.b16 %v403
        %v1588 = vunpack.c.l.b16 %v404
        %v1589 = vunpack.c.h.b16 %v404
        %v1590 = vunpack.c.l.b16 %v405
        %v1591 = vunpack.c.h.b16 %v405
        %v1592 = vunpack.c.l.b16 %v406
        %v1593 = vunpack.c.h.b16 %v406
        %v1594 = vunpack.c.l.b16 %v407
        %v1595 = vunpack.c.h.b16 %v407
        %v1596 = vunpack.c.l.b16 %v408
        %v1597 = vunpack.c.h.b16 %v408
        %v1598 = vunpack.c.l.b16 %v409
        %v1599 = vunpack.c.h.b16 %v409
        %v1600 = vunpack.c.l.b16 %v410
        %v1601 = vunpack.c.h.b16 %v410
        %v1602 = vunpack.c.l.b16 %v411
        %v1603 = vunpack.c.h.b16 %v411
        %v1604 = vunpack.c.l.b16 %v412
        %v1605 = vunpack.c.h.b16 %v412
        %v1606 = vunpack.c.l.b16 %v413
        %v1607 = vunpack.c.h.b16 %v413
        %v1608 = vunpack.c.l.b16 %v414
        %v1609 = vunpack.c.h.b16 %v414
        %v1610 = vunpack.c.l.b16 %v415
        %v1611 = vunpack.c.h.b16 %v415
        %v1612 = vunpack.c.l.b16 %v416
        %v1613 = vunpack.c.h.b16 %v416
        %v1614 = vunpack.c.l.b16 %v417
        %v1615 = vunpack.c.h.b16 %v417
        %v1616 = vunpack.c.l.b16 %v418
        %v1617 = vunpack.c.h.b16 %v418
        %v1618 = vunpack.c.l.b16 %v419
        %v1619 = vunpack.c.h.b16 %v419
        %v1620 = vunpack.c.l.b16 %v420
        %v1621 = vunpack.c.h.b16 %v420
        %v1622 = vunpack.c.l.b16 %v421
        %v1623 = vunpack.c.h.b16 %v421
        %v1624 = vunpack.c.l.b16 %v422
        %v1625 = vunpack.c.h.b16 %v422
        %v1626 = vunpack.c.l.b16 %v423
        %v1627 = vunpack.c.h.b16 %v423
        %v1628 = vunpack.c.l.b16 %v424
        %v1629 = vunpack.c.h.b16 %v424
        %v1630 = vunpack.c.l.b16 %v425
        %v1631 = vunpack.c.h.b16 %v425
        %v1632 = vunpack.c.l.b16 %v426
        %v1633 = vunpack.c.h.b16 %v426
        %v1634 = vunpack.c.l.b16 %v427
        %v1635 = vunpack.c.h.b16 %v427
        %v1636 = vunpack.c.l.b16 %v428
        %v1637 = vunpack.c.h.b16 %v428
        %v1638 = vunpack.c.l.b16 %v429
        %v1639 = vunpack.c.h.b16 %v429
        %v1640 = vunpack.c.l.b16 %v430
        %v1641 = vunpack.c.h.b16 %v430
        %v1642 = vunpack.c.l.b16 %v431
        %v1643 = vunpack.c.h.b16 %v431
        %v1644 = vunpack.c.l.b16 %v432
        %v1645 = vunpack.c.h.b16 %v432
        %v1646 = vunpack.c.l.b16 %v433
        %v1647 = vunpack.c.h.b16 %v433
        %v1648 = vunpack.c.l.b16 %v434
        %v1649 = vunpack.c.h.b16 %v434
        %v1650 = vunpack.c.l.b16 %v435
        %v1651 = vunpack.c.h.b16 %v435
        %v1652 = vunpack.c.l.b16 %v436
        %v1653 = vunpack.c.h.b16 %v436
        %v1654 = vunpack.c.l.b16 %v437
        %v1655 = vunpack.c.h.b16 %v437
        %v1656 = vunpack.c.l.b16 %v438
        %v1657 = vunpack.c.h.b16 %v438
        %v1658 = vunpack.c.l.b16 %v439
        %v1659 = vunpack.c.h.b16 %v439
        %v1660 = vunpack.c.l.b16 %v440
        %v1661 = vunpack.c.h.b16 %v440
        %v1662 = vunpack.c.l.b16 %v441
        %v1663 = vunpack.c.h.b16 %v441
        %v1664 = vunpack.c.l.b16 %v442
        %v1665 = vunpack.c.h.b16 %v442
        %v1666 = vunpack.c.l.b16 %v443
        %v1667 = vunpack.c.h.b16 %v443
        %v1668 = vunpack.c.l.b16 %v444
        %v1669 = vunpack.c.h.b16 %v444
        %v1670 = vunpack.c.l.b16 %v445
        %v1671 = vunpack.c.h.b16 %v445
        %v1672 = vunpack.c.l.b16 %v446
        %v1673 = vunpack.c.h.b16 %v446
        %v1674 = vunpack.c.l.b16 %v447
        %v1675 = vunpack.c.h.b16 %v447
        %v1676 = vunpack.c.l.b16 %v448
        %v1677 = vunpack.c.h.b16 %v448
        %v1678 = vunpack.c.l.b16 %v449
        %v1679 = vunpack.c.h.b16 %v449
        %v1680 = vunpack.c.l.b16 %v450
        %v1681 = vunpack.c.h.b16 %v450
        %v1682 = vunpack.c.l.b16 %v451
        %v1683 = vunpack.c.h.b16 %v451
        %v1684 = vunpack.c.l.b16 %v452
        %v1685 = vunpack.c.h.b16 %v452
        %v1686 = vunpack.c.l.b16 %v453
        %v1687 = vunpack.c.h.b16 %v453
        %v1688 = vunpack.c.l.b16 %v454
        %v1689 = vunpack.c.h.b16 %v454
        %v1690 = vunpack.c.l.b16 %v455
        %v1691 = vunpack.c.h.b16 %v455
        %v1692 = vunpack.c.l.b16 %v456
        %v1693 = vunpack.c.h.b16 %v456
        %v1694 = vunpack.c.l.b16 %v457
        %v1695 = vunpack.c.h.b16 %v457
        %v1696 = vunpack.c.l.b16 %v458
        %v1697 = vunpack.c.h.b16 %v458
        %v1698 = vunpack.c.l.b16 %v459
        %v1699 = vunpack.c.h.b16 %v459
        %v1700 = vunpack.c.l.b16 %v460
        %v1701 = vunpack.c.h.b16 %v460
        %v1702 = vunpack.c.l.b16 %v461
        %v1703 = vunpack.c.h.b16 %v461
        %v1704 = vunpack.c.l.b16 %v462
        %v1705 = vunpack.c.h.b16 %v462
        %v1706 = vunpack.c.l.b16 %v463
        %v1707 = vunpack.c.h.b16 %v463
        %v1708 = vunpack.c.l.b16 %v464
        %v1709 = vunpack.c.h.b16 %v464
        %v1710 = vunpack.c.l.b16 %v465
        %v1711 = vunpack.c.h.b16 %v465
        %v1712 = vunpack.c.l.b16 %v466
        %v1713 = vunpack.c.h.b16 %v466
        %v1714 = vunpack.c.l.b16 %v467
        %v1715 = vunpack.c.h.b16 %v467
        %v1716 = vunpack.c.l.b16 %v468
        %v1717 = vunpack.c.h.b16 %v468
        %v1718 = vunpack.c.l.b16 %v469
        %v1719 = vunpack.c.h.b16 %v469
        %v1720 = vunpack.c.l.b16 %v470
        %v1721 = vunpack.c.h.b16 %v470
        %v1722 = vunpack.c.l.b16 %v471
        %v1723 = vunpack.c.h.b16 %v471
        %v1724 = vunpack.c.l.b16 %v472
        %v1725 = vunpack.c.h.b16 %v472
        %v1726 = vunpack.c.l.b16 %v473
        %v1727 = vunpack.c.h.b16 %v473
        %v1728 = vunpack.c.l.b16 %v474
        %v1729 = vunpack.c.h.b16 %v474
        %v1730 = vunpack.c.l.b16 %v475
        %v1731 = vunpack.c.h.b16 %v475
        %v1732 = vunpack.c.l.b16 %v476
        %v1733 = vunpack.c.h.b16 %v476
        %v1734 = vunpack.c.l.b16 %v477
        %v1735 = vunpack.c.h.b16 %v477
        %v1736 = vunpack.c.l.b16 %v478
        %v1737 = vunpack.c.h.b16 %v478
        %v1738 = vunpack.c.l.b16 %v479
        %v1739 = vunpack.c.h.b16 %v479
        %v1740 = vunpack.c.l.b16 %v480
        %v1741 = vunpack.c.h.b16 %v480
        %v1742 = vunpack.c.l.b16 %v481
        %v1743 = vunpack.c.h.b16 %v481
        %v1744 = vunpack.c.l.b16 %v482
        %v1745 = vunpack.c.h.b16 %v482
        %v1746 = vunpack.c.l.b16 %v483
        %v1747 = vunpack.c.h.b16 %v483
        %v1748 = vunpack.c.l.b16 %v484
        %v1749 = vunpack.c.h.b16 %v484
        %v1750 = vunpack.c.l.b16 %v485
        %v1751 = vunpack.c.h.b16 %v485
        %v1752 = vunpack.c.l.b16 %v486
        %v1753 = vunpack.c.h.b16 %v486
        %v1754 = vunpack.c.l.b16 %v487
        %v1755 = vunpack.c.h.b16 %v487
        %v1756 = vunpack.c.l.b16 %v488
        %v1757 = vunpack.c.h.b16 %v488
        %v1758 = vunpack.c.l.b16 %v489
        %v1759 = vunpack.c.h.b16 %v489
        %v1760 = vunpack.c.l.b16 %v490
        %v1761 = vunpack.c.h.b16 %v490
        %v1762 = vunpack.c.l.b16 %v491
        %v1763 = vunpack.c.h.b16 %v491
        %v1764 = vunpack.c.l.b16 %v492
        %v1765 = vunpack.c.h.b16 %v492
        %v1766 = vunpack.c.l.b16 %v493
        %v1767 = vunpack.c.h.b16 %v493
        %v1768 = vunpack.c.l.b16 %v494
        %v1769 = vunpack.c.h.b16 %v494
        %v1770 = vunpack.c.l.b16 %v495
        %v1771 = vunpack.c.h.b16 %v495
        %v1772 = vunpack.c.l.b16 %v496
        %v1773 = vunpack.c.h.b16 %v496
        %v1774 = vunpack.c.l.b16 %v497
        %v1775 = vunpack.c.h.b16 %v497
        %v1776 = vunpack.c.l.b16 %v498
        %v1777 = vunpack.c.h.b16 %v498
        %v1778 = vunpack.c.l.b16 %v499
        %v1779 = vunpack.c.h.b16 %v499
        %v1780 = vunpack.c.l.b16 %v500
        %v1781 = vunpack.c.h.b16 %v500
        %v1782 = vunpack.c.l.b16 %v501
        %v1783 = vunpack.c.h.b16 %v501
        %v1784 = vunpack.c.l.b16 %v502
        %v1785 = vunpack.c.h.b16 %v502
        %v1786 = vunpack.c.l.b16 %v503
        %v1787 = vunpack.c.h.b16 %v503
        %v1788 = vunpack.c.l.b16 %v504
        %v1789 = vunpack.c.h.b16 %v504
        %v1790 = vunpack.c.l.b16 %v505
        %v1791 = vunpack.c.h.b16 %v505
        %v1792 = vunpack.c.l.b16 %v506
        %v1793 = vunpack.c.h.b16 %v506
        %v1794 = vunpack.c.l.b16 %v507
        %v1795 = vunpack.c.h.b16 %v507
        %v1796 = vunpack.c.l.b16 %v508
        %v1797 = vunpack.c.h.b16 %v508
        %v1798 = vunpack.c.l.b16 %v509
        %v1799 = vunpack.c.h.b16 %v509
        %v1800 = vunpack.c.l.b16 %v510
        %v1801 = vunpack.c.h.b16 %v510
        %v1802 = vunpack.c.l.b16 %v511
        %v1803 = vunpack.c.h.b16 %v511
        %v1804 = vunpack.c.l.b16 %v512
        %v1805 = vunpack.c.h.b16 %v512
        %v1806 = vunpack.c.l.b16 %v513
        %v1807 = vunpack.c.h.b16 %v513
        %v1808 = vunpack.c.l.b16 %v514
        %v1809 = vunpack.c.h.b16 %v514
        %v1810 = vunpack.c.l.b16 %v515
        %v1811 = vunpack.c.h.b16 %v515
        %v1812 = vunpack.c.l.b16 %v516
        %v1813 = vunpack.c.h.b16 %v516
        %v1814 = vunpack.c.l.b16 %v517
        %v1815 = vunpack.c.h.b16 %v517
        %v1816 = vunpack.c.l.b16 %v518
        %v1817 = vunpack.c.h.b16 %v518
        %v1818 = vunpack.c.l.b16 %v519
        %v1819 = vunpack.c.h.b16 %v519
        %v1820 = vunpack.c.l.b16 %v520
        %v1821 = vunpack.c.h.b16 %v520
        %v1822 = vunpack.c.l.b16 %v521
        %v1823 = vunpack.c.h.b16 %v521
        %v1824 = vunpack.c.l.b16 %v522
        %v1825 = vunpack.c.h.b16 %v522
        %v1826 = vunpack.c.l.b16 %v523
        %v1827 = vunpack.c.h.b16 %v523
        %v1828 = vunpack.c.l.b16 %v524
        %v1829 = vunpack.c.h.b16 %v524
        %v1830 = vunpack.c.l.b16 %v525
        %v1831 = vunpack.c.h.b16 %v525
        %v1832 = vunpack.c.l.b16 %v526
        %v1833 = vunpack.c.h.b16 %v526
        %v1834 = vunpack.c.l.b16 %v527
        %v1835 = vunpack.c.h.b16 %v527
        %v1836 = vunpack.c.l.b16 %v528
        %v1837 = vunpack.c.h.b16 %v528
        %v1838 = vunpack.c.l.b16 %v529
        %v1839 = vunpack.c.h.b16 %v529
        %v1840 = vunpack.c.l.b16 %v530
        %v1841 = vunpack.c.h.b16 %v530
        %v1842 = vunpack.c.l.b16 %v531
        %v1843 = vunpack.c.h.b16 %v531
        %v1844 = vunpack.c.l.b16 %v532
        %v1845 = vunpack.c.h.b16 %v532
        %v1846 = vunpack.c.l.b16 %v533
        %v1847 = vunpack.c.h.b16 %v533
        %v1848 = vunpack.c.l.b16 %v534
        %v1849 = vunpack.c.h.b16 %v534
        %v1850 = vunpack.c.l.b16 %v535
        %v1851 = vunpack.c.h.b16 %v535
        %v1852 = vunpack.c.l.b16 %v536
        %v1853 = vunpack.c.h.b16 %v536
        %v1854 = vunpack.c.l.b16 %v537
        %v1855 = vunpack.c.h.b16 %v537
        %v1856 = vunpack.c.l.b16 %v538
        %v1857 = vunpack.c.h.b16 %v538
        %v1858 = vunpack.c.l.b16 %v539
        %v1859 = vunpack.c.h.b16 %v539
        %v1860 = vunpack.c.l.b16 %v540
        %v1861 = vunpack.c.h.b16 %v540
        %v1862 = vunpack.c.l.b16 %v541
        %v1863 = vunpack.c.h.b16 %v541
        %v1864 = vunpack.c.l.b16 %v542
        %v1865 = vunpack.c.h.b16 %v542
        %v1866 = vunpack.c.l.b16 %v543
        %v1867 = vunpack.c.h.b16 %v543
        %v1868 = vunpack.c.l.b16 %v544
        %v1869 = vunpack.c.h.b16 %v544
        %v1870 = vunpack.c.l.b16 %v545
        %v1871 = vunpack.c.h.b16 %v545
        %v1872 = vunpack.c.l.b16 %v546
        %v1873 = vunpack.c.h.b16 %v546
        %v1874 = vunpack.c.l.b16 %v547
        %v1875 = vunpack.c.h.b16 %v547
        %v1876 = vunpack.c.l.b16 %v548
        %v1877 = vunpack.c.h.b16 %v548
        %v1878 = vunpack.c.l.b16 %v549
        %v1879 = vunpack.c.h.b16 %v549
        %v1880 = vunpack.c.l.b16 %v550
        %v1881 = vunpack.c.h.b16 %v550
        %v1882 = vunpack.c.l.b16 %v551
        %v1883 = vunpack.c.h.b16 %v551
        %v1884 = vunpack.c.l.b16 %v552
        %v1885 = vunpack.c.h.b16 %v552
        %v1886 = vunpack.c.l.b16 %v553
        %v1887 = vunpack.c.h.b16 %v553
        %v1888 = vunpack.c.l.b16 %v554
        %v1889 = vunpack.c.h.b16 %v554
        %v1890 = vunpack.c.l.b16 %v555
        %v1891 = vunpack.c.h.b16 %v555
        %v1892 = vunpack.c.l.b16 %v556
        %v1893 = vunpack.c.h.b16 %v556
        %v1894 = vunpack.c.l.b16 %v557
        %v1895 = vunpack.c.h.b16 %v557
        %v1896 = vunpack.c.l.b16 %v558
        %v1897 = vunpack.c.h.b16 %v558
        %v1898 = vunpack.c.l.b16 %v559
        %v1899 = vunpack.c.h.b16 %v559
        %v1900 = vunpack.c.l.b16 %v560
        %v1901 = vunpack.c.h.b16 %v560
        %v1902 = vunpack.c.l.b16 %v561
        %v1903 = vunpack.c.h.b16 %v561
        %v1904 = vunpack.c.l.b16 %v562
        %v1905 = vunpack.c.h.b16 %v562
        %v1906 = vunpack.c.l.b16 %v563
        %v1907 = vunpack.c.h.b16 %v563
        %v1908 = vunpack.c.l.b16 %v564
        %v1909 = vunpack.c.h.b16 %v564
        %v1910 = vunpack.c.l.b16 %v565
        %v1911 = vunpack.c.h.b16 %v565
        %v1912 = vunpack.c.l.b16 %v566
        %v1913 = vunpack.c.h.b16 %v566
        %v1914 = vunpack.c.l.b16 %v567
        %v1915 = vunpack.c.h.b16 %v567
        %v1916 = vunpack.c.l.b16 %v568
        %v1917 = vunpack.c.h.b16 %v568
        %v1918 = vunpack.c.l.b16 %v569
        %v1919 = vunpack.c.h.b16 %v569
        %v1920 = vunpack.c.l.b16 %v570
        %v1921 = vunpack.c.h.b16 %v570
        %v1922 = vunpack.c.l.b16 %v571
        %v1923 = vunpack.c.h.b16 %v571
        %v1924 = vunpack.c.l.b16 %v572
        %v1925 = vunpack.c.h.b16 %v572
        %v1926 = vunpack.c.l.b16 %v573
        %v1927 = vunpack.c.h.b16 %v573
        %v1928 = vunpack.c.l.b16 %v574
        %v1929 = vunpack.c.h.b16 %v574
        %v1930 = vunpack.c.l.b16 %v575
        %v1931 = vunpack.c.h.b16 %v575
        %v1932 = vunpack.c.l.b16 %v576
        %v1933 = vunpack.c.h.b16 %v576
        %v1934 = vunpack.c.l.b16 %v577
        %v1935 = vunpack.c.h.b16 %v577
        %v1936 = vunpack.c.l.b16 %v578
        %v1937 = vunpack.c.h.b16 %v578
        %v1938 = vunpack.c.l.b16 %v579
        %v1939 = vunpack.c.h.b16 %v579
        %v1940 = vunpack.c.l.b16 %v580
        %v1941 = vunpack.c.h.b16 %v580
        %v1942 = vunpack.c.l.b16 %v581
        %v1943 = vunpack.c.h.b16 %v581
        %v1944 = vunpack.c.l.b16 %v582
        %v1945 = vunpack.c.h.b16 %v582
        %v1946 = vunpack.c.l.b16 %v583
        %v1947 = vunpack.c.h.b16 %v583
        %v1948 = vunpack.c.l.b16 %v584
        %v1949 = vunpack.c.h.b16 %v584
        %v1950 = vunpack.c.l.b16 %v585
        %v1951 = vunpack.c.h.b16 %v585
        %v1952 = vunpack.c.l.b16 %v586
        %v1953 = vunpack.c.h.b16 %v586
        %v1954 = vunpack.c.l.b16 %v587
        %v1955 = vunpack.c.h.b16 %v587
        %v1956 = vunpack.c.l.b16 %v588
        %v1957 = vunpack.c.h.b16 %v588
        %v1958 = vunpack.c.l.b16 %v589
        %v1959 = vunpack.c.h.b16 %v589
        %v1960 = vunpack.c.l.b16 %v590
        %v1961 = vunpack.c.h.b16 %v590
        %v1962 = vunpack.c.l.b16 %v591
        %v1963 = vunpack.c.h.b16 %v591
        %v1964 = vunpack.c.l.b16 %v592
        %v1965 = vunpack.c.h.b16 %v592
        %v1966 = vunpack.c.l.b16 %v593
        %v1967 = vunpack.c.h.b16 %v593
        %v1968 = vunpack.c.l.b16 %v594
        %v1969 = vunpack.c.h.b16 %v594
        %v1970 = vunpack.c.l.b16 %v595
        %v1971 = vunpack.c.h.b16 %v595
        %v1972 = vunpack.c.l.b16 %v596
        %v1973 = vunpack.c.h.b16 %v596
        %v1974 = vunpack.c.l.b16 %v597
        %v1975 = vunpack.c.h.b16 %v597
        %v1976 = vunpack.c.l.b16 %v598
        %v1977 = vunpack.c.h.b16 %v598
        %v1978 = vunpack.c.l.b16 %v599
        %v1979 = vunpack.c.h.b16 %v599
        %v1980 = vunpack.c.l.b16 %v600
        %v1981 = vunpack.c.h.b16 %v600
        %v1982 = vunpack.c.l.b16 %v601
        %v1983 = vunpack.c.h.b16 %v601
        %v1984 = vunpack.c.l.b16 %v602
        %v1985 = vunpack.c.h.b16 %v602
        %v1986 = vunpack.c.l.b16 %v603
        %v1987 = vunpack.c.h.b16 %v603
        %v1988 = vunpack.c.l.b16 %v604
        %v1989 = vunpack.c.h.b16 %v604
        %v1990 = vunpack.c.l.b16 %v605
        %v1991 = vunpack.c.h.b16 %v605
        %v1992 = vunpack.c.l.b16 %v606
        %v1993 = vunpack.c.h.b16 %v606
        %v1994 = vunpack.c.l.b16 %v607
        %v1995 = vunpack.c.h.b16 %v607
        %v1996 = vunpack.c.l.b16 %v608
        %v1997 = vunpack.c.h.b16 %v608
        %v1998 = vunpack.c.l.b16 %v609
        %v1999 = vunpack.c.h.b16 %v609
        %v2000 = vunpack.c.l.b16 %v610
        %v2001 = vunpack.c.h.b16 %v610
        %v2002 = vunpack.c.l.b16 %v611
        %v2003 = vunpack.c.h.b16 %v611
        %v2004 = vunpack.c.l.b16 %v612
        %v2005 = vunpack.c.h.b16 %v612
        %v2006 = vunpack.c.l.b16 %v613
        %v2007 = vunpack.c.h.b16 %v613
        %v2008 = vunpack.c.l.b16 %v614
        %v2009 = vunpack.c.h.b16 %v614
        %v2010 = vunpack.c.l.b16 %v615
        %v2011 = vunpack.c.h.b16 %v615
        %v2012 = vunpack.c.l.b16 %v616
        %v2013 = vunpack.c.h.b16 %v616
        %v2014 = vunpack.c.l.b16 %v617
        %v2015 = vunpack.c.h.b16 %v617
        %v2016 = vunpack.c.l.b16 %v618
        %v2017 = vunpack.c.h.b16 %v618
        %v2018 = vunpack.c.l.b16 %v619
        %v2019 = vunpack.c.h.b16 %v619
        %v2020 = vunpack.c.l.b16 %v620
        %v2021 = vunpack.c.h.b16 %v620
        %v2022 = vunpack.c.l.b16 %v621
        %v2023 = vunpack.c.h.b16 %v621
        %v2024 = vunpack.c.l.b16 %v622
        %v2025 = vunpack.c.h.b16 %v622
        %v2026 = vunpack.c.l.b16 %v623
        %v2027 = vunpack.c.h.b16 %v623
        %v2028 = vunpack.c.l.b16 %v624
        %v2029 = vunpack.c.h.b16 %v624
        %v2030 = vunpack.c.l.b16 %v625
        %v2031 = vunpack.c.h.b16 %v625
        %v2032 = vunpack.c.l.b16 %v626
        %v2033 = vunpack.c.h.b16 %v626
        %v2034 = vunpack.c.l.b16 %v627
        %v2035 = vunpack.c.h.b16 %v627
        %v2036 = vunpack.c.l.b16 %v628
        %v2037 = vunpack.c.h.b16 %v628
        %v2038 = vunpack.c.l.b16 %v629
        %v2039 = vunpack.c.h.b16 %v629
        %v2040 = vunpack.c.l.b16 %v630
        %v2041 = vunpack.c.h.b16 %v630
        %v2042 = vunpack.c.l.b16 %v631
        %v2043 = vunpack.c.h.b16 %v631
        %v2044 = vunpack.c.l.b16 %v632
        %v2045 = vunpack.c.h.b16 %v632
        %v2046 = vunpack.c.l.b16 %v633
        %v2047 = vunpack.c.h.b16 %v633
        %v2048 = vunpack.c.l.b16 %v634
        %v2049 = vunpack.c.h.b16 %v634
        %v2050 = vunpack.c.l.b16 %v635
        %v2051 = vunpack.c.h.b16 %v635
        %v2052 = vunpack.c.l.b16 %v636
        %v2053 = vunpack.c.h.b16 %v636
        %v2054 = vunpack.c.l.b16 %v637
        %v2055 = vunpack.c.h.b16 %v637
        %v2056 = vunpack.c.l.b16 %v638
        %v2057 = vunpack.c.h.b16 %v638
        %v2058 = vunpack.c.l.b16 %v639
        %v2059 = vunpack.c.h.b16 %v639
        %v2060 = vunpack.c.l.b16 %v640
        %v2061 = vunpack.c.h.b16 %v640
        %v2062 = vunpack.c.l.b16 %v641
        %v2063 = vunpack.c.h.b16 %v641
        %v2064 = vunpack.c.l.b16 %v642
        %v2065 = vunpack.c.h.b16 %v642
        %v2066 = vunpack.c.l.b16 %v643
        %v2067 = vunpack.c.h.b16 %v643
        %v2068 = vunpack.c.l.b16 %v644
        %v2069 = vunpack.c.h.b16 %v644
        %v2070 = vunpack.c.l.b16 %v645
        %v2071 = vunpack.c.h.b16 %v645
        %v2072 = vunpack.c.l.b16 %v646
        %v2073 = vunpack.c.h.b16 %v646
        %v2074 = vunpack.c.l.b16 %v647
        %v2075 = vunpack.c.h.b16 %v647
        %v2076 = vunpack.c.l.b16 %v648
        %v2077 = vunpack.c.h.b16 %v648
        %v2078 = vunpack.c.l.b16 %v649
        %v2079 = vunpack.c.h.b16 %v649
        %v2080 = vunpack.c.l.b16 %v650
        %v2081 = vunpack.c.h.b16 %v650
        %v2082 = vunpack.c.l.b16 %v651
        %v2083 = vunpack.c.h.b16 %v651
        %v2084 = vunpack.c.l.b16 %v652
        %v2085 = vunpack.c.h.b16 %v652
        %v2086 = vunpack.c.l.b16 %v653
        %v2087 = vunpack.c.h.b16 %v653
        %v2088 = vunpack.c.l.b16 %v654
        %v2089 = vunpack.c.h.b16 %v654
        %v2090 = vunpack.c.l.b16 %v655
        %v2091 = vunpack.c.h.b16 %v655
        %v2092 = vunpack.c.l.b16 %v656
        %v2093 = vunpack.c.h.b16 %v656
        %v2094 = vunpack.c.l.b16 %v657
        %v2095 = vunpack.c.h.b16 %v657
        %v2096 = vunpack.c.l.b16 %v658
        %v2097 = vunpack.c.h.b16 %v658
        %v2098 = vunpack.c.l.b16 %v659
        %v2099 = vunpack.c.h.b16 %v659
        %v2100 = vunpack.c.l.b16 %v660
        %v2101 = vunpack.c.h.b16 %v660
        %v2102 = vunpack.c.l.b16 %v661
        %v2103 = vunpack.c.h.b16 %v661
        %v2104 = vunpack.c.l.b16 %v662
        %v2105 = vunpack.c.h.b16 %v662
        %v2106 = vunpack.c.l.b16 %v663
        %v2107 = vunpack.c.h.b16 %v663
        %v2108 = vunpack.c.l.b16 %v664
        %v2109 = vunpack.c.h.b16 %v664
        %v2110 = vunpack.c.l.b16 %v665
        %v2111 = vunpack.c.h.b16 %v665
        %v2112 = vunpack.c.l.b16 %v666
        %v2113 = vunpack.c.h.b16 %v666
        %v2114 = vunpack.c.l.b16 %v667
        %v2115 = vunpack.c.h.b16 %v667
        %v2116 = vunpack.c.l.b16 %v668
        %v2117 = vunpack.c.h.b16 %v668
        %v2118 = vunpack.c.l.b16 %v669
        %v2119 = vunpack.c.h.b16 %v669
        %v2120 = vunpack.c.l.b16 %v670
        %v2121 = vunpack.c.h.b16 %v670
        %v2122 = vunpack.c.l.b16 %v671
        %v2123 = vunpack.c.h.b16 %v671
        %v2124 = vunpack.c.l.b16 %v672
        %v2125 = vunpack.c.h.b16 %v672
        %v2126 = vunpack.c.l.b16 %v673
        %v2127 = vunpack.c.h.b16 %v673
        %v2128 = vunpack.c.l.b16 %v674
        %v2129 = vunpack.c.h.b16 %v674
        %v2130 = vunpack.c.l.b16 %v675
        %v2131 = vunpack.c.h.b16 %v675
        %v2132 = vunpack.c.l.b16 %v676
        %v2133 = vunpack.c.h.b16 %v676
        %v2134 = vunpack.c.l.b16 %v677
        %v2135 = vunpack.c.h.b16 %v677
        %v2136 = vunpack.c.l.b16 %v678
        %v2137 = vunpack.c.h.b16 %v678
        %v2138 = vunpack.c.l.b16 %v679
        %v2139 = vunpack.c.h.b16 %v679
        %v2140 = vunpack.c.l.b16 %v680
        %v2141 = vunpack.c.h.b16 %v680
        %v2142 = vunpack.c.l.b16 %v681
        %v2143 = vunpack.c.h.b16 %v681
        %v2144 = vunpack.c.l.b16 %v682
        %v2145 = vunpack.c.h.b16 %v682
        %v2146 = vunpack.c.l.b16 %v683
        %v2147 = vunpack.c.h.b16 %v683
        %v2148 = vunpack.c.l.b16 %v684
        %v2149 = vunpack.c.h.b16 %v684
        %v2150 = vunpack.c.l.b16 %v685
        %v2151 = vunpack.c.h.b16 %v685
        %v2152 = vunpack.c.l.b16 %v686
        %v2153 = vunpack.c.h.b16 %v686
        %v2154 = vunpack.c.l.b16 %v687
        %v2155 = vunpack.c.h.b16 %v687
        %v2156 = vunpack.c.l.b16 %v688
        %v2157 = vunpack.c.h.b16 %v688
        %v2158 = vunpack.c.l.b16 %v689
        %v2159 = vunpack.c.h.b16 %v689
        %v2160 = vunpack.c.l.b16 %v690
        %v2161 = vunpack.c.h.b16 %v690
        %v2162 = vunpack.c.l.b16 %v691
        %v2163 = vunpack.c.h.b16 %v691
        %v2164 = vunpack.c.l.b16 %v692
        %v2165 = vunpack.c.h.b16 %v692
        %v2166 = vunpack.c.l.b16 %v693
        %v2167 = vunpack.c.h.b16 %v693
        %v2168 = vunpack.c.l.b16 %v694
        %v2169 = vunpack.c.h.b16 %v694
        %v2170 = vunpack.c.l.b16 %v695
        %v2171 = vunpack.c.h.b16 %v695
        %v2172 = vunpack.c.l.b16 %v696
        %v2173 = vunpack.c.h.b16 %v696
        %v2174 = vunpack.c.l.b16 %v697
        %v2175 = vunpack.c.h.b16 %v697
        %v2176 = vunpack.c.l.b16 %v698
        %v2177 = vunpack.c.h.b16 %v698
        %v2178 = vunpack.c.l.b16 %v699
        %v2179 = vunpack.c.h.b16 %v699
        %v2180 = vunpack.c.l.b16 %v700
        %v2181 = vunpack.c.h.b16 %v700
        %v2182 = vunpack.c.l.b16 %v701
        %v2183 = vunpack.c.h.b16 %v701
        %v2184 = vunpack.c.l.b16 %v702
        %v2185 = vunpack.c.h.b16 %v702
        %v2186 = vunpack.c.l.b16 %v703
        %v2187 = vunpack.c.h.b16 %v703
        %v2188 = vunpack.c.l.b16 %v704
        %v2189 = vunpack.c.h.b16 %v704
        %v2190 = vunpack.c.l.b16 %v705
        %v2191 = vunpack.c.h.b16 %v705
        %v2192 = vunpack.c.l.b16 %v706
        %v2193 = vunpack.c.h.b16 %v706
        %v2194 = vunpack.c.l.b16 %v707
        %v2195 = vunpack.c.h.b16 %v707
        %v2196 = vunpack.c.l.b16 %v708
        %v2197 = vunpack.c.h.b16 %v708
        %v2198 = vunpack.c.l.b16 %v709
        %v2199 = vunpack.c.h.b16 %v709
        %v2200 = vunpack.c.l.b16 %v710
        %v2201 = vunpack.c.h.b16 %v710
        %v2202 = vunpack.c.l.b16 %v711
        %v2203 = vunpack.c.h.b16 %v711
        %v2204 = vunpack.c.l.b16 %v712
        %v2205 = vunpack.c.h.b16 %v712
        %v2206 = vunpack.c.l.b16 %v713
        %v2207 = vunpack.c.h.b16 %v713
        %v2208 = vunpack.c.l.b16 %v714
        %v2209 = vunpack.c.h.b16 %v714
        %v2210 = vunpack.c.l.b16 %v715
        %v2211 = vunpack.c.h.b16 %v715
        %v2212 = vunpack.c.l.b16 %v716
        %v2213 = vunpack.c.h.b16 %v716
        %v2214 = vunpack.c.l.b16 %v717
        %v2215 = vunpack.c.h.b16 %v717
        %v2216 = vunpack.c.l.b16 %v718
        %v2217 = vunpack.c.h.b16 %v718
        %v2218 = vunpack.c.l.b16 %v719
        %v2219 = vunpack.c.h.b16 %v719
        %v2220 = vunpack.c.l.b16 %v720
        %v2221 = vunpack.c.h.b16 %v720
        %v2222 = vunpack.c.l.b16 %v721
        %v2223 = vunpack.c.h.b16 %v721
        %v2224 = vunpack.c.l.b16 %v722
        %v2225 = vunpack.c.h.b16 %v722
        %v2226 = vunpack.c.l.b16 %v723
        %v2227 = vunpack.c.h.b16 %v723
        %v2228 = vunpack.c.l.b16 %v724
        %v2229 = vunpack.c.h.b16 %v724
        %v2230 = vunpack.c.l.b16 %v725
        %v2231 = vunpack.c.h.b16 %v725
        %v2232 = vunpack.c.l.b16 %v726
        %v2233 = vunpack.c.h.b16 %v726
        %v2234 = vpack.c.b16 %v1280, %v1274
        %v2235 = vpack.c.b16 %v1281, %v1275
        %v2236 = vpack.c.b16 %v1282, %v1276
        %v2237 = vpack.c.b16 %v1283, %v1277
        %v2238 = vpack.c.b16 %v1284, %v1278
        %v2239 = vpack.c.b16 %v1285, %v1279
        %v2240 = vpack.c.b16 %v1292, %v1286
        %v2241 = vpack.c.b16 %v1293, %v1287
        %v2242 = vpack.c.b16 %v1294, %v1288
        %v2243 = vpack.c.b16 %v1295, %v1289
        %v2244 = vpack.c.b16 %v1296, %v1290
        %v2245 = vpack.c.b16 %v1297, %v1291
        %v2246 = vpack.c.b16 %v1304, %v1298
        %v2247 = vpack.c.b16 %v1305, %v1299
        %v2248 = vpack.c.b16 %v1306, %v1300
        %v2249 = vpack.c.b16 %v1307, %v1301
        %v2250 = vpack.c.b16 %v1308, %v1302
        %v2251 = vpack.c.b16 %v1309, %v1303
        %v2252 = vpack.c.b16 %v1316, %v1310
        %v2253 = vpack.c.b16 %v1317, %v1311
        %v2254 = vpack.c.b16 %v1318, %v1312
        %v2255 = vpack.c.b16 %v1319, %v1313
        %v2256 = vpack.c.b16 %v1320, %v1314
        %v2257 = vpack.c.b16 %v1321, %v1315
        %v2258 = vpack.c.b16 %v1328, %v1322
        %v2259 = vpack.c.b16 %v1329, %v1323
        %v2260 = vpack.c.b16 %v1330, %v1324
        %v2261 = vpack.c.b16 %v1331, %v1325
        %v2262 = vpack.c.b16 %v1332, %v1326
        %v2263 = vpack.c.b16 %v1333, %v1327
        %v2264 = vpack.c.b16 %v1340, %v1334
        %v2265 = vpack.c.b16 %v1341, %v1335
        %v2266 = vpack.c.b16 %v1342, %v1336
        %v2267 = vpack.c.b16 %v1343, %v1337
        %v2268 = vpack.c.b16 %v1344, %v1338
        %v2269 = vpack.c.b16 %v1345, %v1339
        %v2270 = vpack.c.b16 %v1352, %v1346
        %v2271 = vpack.c.b16 %v1353, %v1347
        %v2272 = vpack.c.b16 %v1354, %v1348
        %v2273 = vpack.c.b16 %v1355, %v1349
        %v2274 = vpack.c.b16 %v1356, %v1350
        %v2275 = vpack.c.b16 %v1357, %v1351
        %v2276 = vpack.c.b16 %v1364, %v1358
        %v2277 = vpack.c.b16 %v1365, %v1359
        %v2278 = vpack.c.b16 %v1366, %v1360
        %v2279 = vpack.c.b16 %v1367, %v1361
        %v2280 = vpack.c.b16 %v1368, %v1362
        %v2281 = vpack.c.b16 %v1369, %v1363
        %v2282 = vpack.c.b16 %v1376, %v1370
        %v2283 = vpack.c.b16 %v1377, %v1371
        %v2284 = vpack.c.b16 %v1378, %v1372
        %v2285 = vpack.c.b16 %v1379, %v1373
        %v2286 = vpack.c.b16 %v1380, %v1374
        %v2287 = vpack.c.b16 %v1381, %v1375
        %v2288 = vpack.c.b16 %v1388, %v1382
        %v2289 = vpack.c.b16 %v1389, %v1383
        %v2290 = vpack.c.b16 %v1390, %v1384
        %v2291 = vpack.c.b16 %v1391, %v1385
        %v2292 = vpack.c.b16 %v1392, %v1386
        %v2293 = vpack.c.b16 %v1393, %v1387
        %v2294 = vpack.c.b16 %v1400, %v1394
        %v2295 = vpack.c.b16 %v1401, %v1395
        %v2296 = vpack.c.b16 %v1402, %v1396
        %v2297 = vpack.c.b16 %v1403, %v1397
        %v2298 = vpack.c.b16 %v1404, %v1398
        %v2299 = vpack.c.b16 %v1405, %v1399
        %v2300 = vpack.c.b16 %v1412, %v1406
        %v2301 = vpack.c.b16 %v1413, %v1407
        %v2302 = vpack.c.b16 %v1414, %v1408
        %v2303 = vpack.c.b16 %v1415, %v1409
        %v2304 = vpack.c.b16 %v1416, %v1410
        %v2305 = vpack.c.b16 %v1417, %v1411
        %v2306 = vpack.c.b16 %v1424, %v1418
        %v2307 = vpack.c.b16 %v1425, %v1419
        %v2308 = vpack.c.b16 %v1426, %v1420
        %v2309 = vpack.c.b16 %v1427, %v1421
        %v2310 = vpack.c.b16 %v1428, %v1422
        %v2311 = vpack.c.b16 %v1429, %v1423
        %v2312 = vpack.c.b16 %v1436, %v1430
        %v2313 = vpack.c.b16 %v1437, %v1431
        %v2314 = vpack.c.b16 %v1438, %v1432
        %v2315 = vpack.c.b16 %v1439, %v1433
        %v2316 = vpack.c.b16 %v1440, %v1434
        %v2317 = vpack.c.b16 %v1441, %v1435
        %v2318 = vpack.c.b16 %v1448, %v1442
        %v2319 = vpack.c.b16 %v1449, %v1443
        %v2320 = vpack.c.b16 %v1450, %v1444
        %v2321 = vpack.c.b16 %v1451, %v1445
        %v2322 = vpack.c.b16 %v1452, %v1446
        %v2323 = vpack.c.b16 %v1453, %v1447
        %v2324 = vpack.c.b16 %v1460, %v1454
        %v2325 = vpack.c.b16 %v1461, %v1455
        %v2326 = vpack.c.b16 %v1462, %v1456
        %v2327 = vpack.c.b16 %v1463, %v1457
        %v2328 = vpack.c.b16 %v1464, %v1458
        %v2329 = vpack.c.b16 %v1465, %v1459
        %v2330 = vpack.c.b16 %v1472, %v1466
        %v2331 = vpack.c.b16 %v1473, %v1467
        %v2332 = vpack.c.b16 %v1474, %v1468
        %v2333 = vpack.c.b16 %v1475, %v1469
        %v2334 = vpack.c.b16 %v1476, %v1470
        %v2335 = vpack.c.b16 %v1477, %v1471
        %v2336 = vpack.c.b16 %v1484, %v1478
        %v2337 = vpack.c.b16 %v1485, %v1479
        %v2338 = vpack.c.b16 %v1486, %v1480
        %v2339 = vpack.c.b16 %v1487, %v1481
        %v2340 = vpack.c.b16 %v1488, %v1482
        %v2341 = vpack.c.b16 %v1489, %v1483
        %v2342 = vpack.c.b16 %v1496, %v1490
        %v2343 = vpack.c.b16 %v1497, %v1491
        %v2344 = vpack.c.b16 %v1498, %v1492
        %v2345 = vpack.c.b16 %v1499, %v1493
        %v2346 = vpack.c.b16 %v1500, %v1494
        %v2347 = vpack.c.b16 %v1501, %v1495
        %v2348 = vpack.c.b16 %v1508, %v1502
        %v2349 = vpack.c.b16 %v1509, %v1503
        %v2350 = vpack.c.b16 %v1510, %v1504
        %v2351 = vpack.c.b16 %v1511, %v1505
        %v2352 = vpack.c.b16 %v1512, %v1506
        %v2353 = vpack.c.b16 %v1513, %v1507
        %v2354 = vpack.c.b16 %v1520, %v1514
        %v2355 = vpack.c.b16 %v1521, %v1515
        %v2356 = vpack.c.b16 %v1522, %v1516
        %v2357 = vpack.c.b16 %v1523, %v1517
        %v2358 = vpack.c.b16 %v1524, %v1518
        %v2359 = vpack.c.b16 %v1525, %v1519
        %v2360 = vpack.c.b16 %v1532, %v1526
        %v2361 = vpack.c.b16 %v1533, %v1527
        %v2362 = vpack.c.b16 %v1534, %v1528
        %v2363 = vpack.c.b16 %v1535, %v1529
        %v2364 = vpack.c.b16 %v1536, %v1530
        %v2365 = vpack.c.b16 %v1537, %v1531
        %v2366 = vpack.c.b16 %v1544, %v1538
        %v2367 = vpack.c.b16 %v1545, %v1539
        %v2368 = vpack.c.b16 %v1546, %v1540
        %v2369 = vpack.c.b16 %v1547, %v1541
        %v2370 = vpack.c.b16 %v1548, %v1542
        %v2371 = vpack.c.b16 %v1549, %v1543
        %v2372 = vpack.c.b16 %v1556, %v1550
        %v2373 = vpack.c.b16 %v1557, %v1551
        %v2374 = vpack.c.b16 %v1558, %v1552
        %v2375 = vpack.c.b16 %v1559, %v1553
        %v2376 = vpack.c.b16 %v1560, %v1554
        %v2377 = vpack.c.b16 %v1561, %v1555
        %v2378 = vpack.c.b16 %v1568, %v1562
        %v2379 = vpack.c.b16 %v1569, %v1563
        %v2380 = vpack.c.b16 %v1570, %v1564
        %v2381 = vpack.c.b16 %v1571, %v1565
        %v2382 = vpack.c.b16 %v1572, %v1566
        %v2383 = vpack.c.b16 %v1573, %v1567
        %v2384 = vpack.c.b16 %v1580, %v1574
        %v2385 = vpack.c.b16 %v1581, %v1575
        %v2386 = vpack.c.b16 %v1582, %v1576
        %v2387 = vpack.c.b16 %v1583, %v1577
        %v2388 = vpack.c.b16 %v1584, %v1578
        %v2389 = vpack.c.b16 %v1585, %v1579
        %v2390 = vpack.c.b16 %v1592, %v1586
        %v2391 = vpack.c.b16 %v1593, %v1587
        %v2392 = vpack.c.b16 %v1594, %v1588
        %v2393 = vpack.c.b16 %v1595, %v1589
        %v2394 = vpack.c.b16 %v1596, %v1590
        %v2395 = vpack.c.b16 %v1597, %v1591
        %v2396 = vpack.c.b16 %v1604, %v1598
        %v2397 = vpack.c.b16 %v1605, %v1599
        %v2398 = vpack.c.b16 %v1606, %v1600
        %v2399 = vpack.c.b16 %v1607, %v1601
        %v2400 = vpack.c.b16 %v1608, %v1602
        %v2401 = vpack.c.b16 %v1609, %v1603
        %v2402 = vpack.c.b16 %v1616, %v1610
        %v2403 = vpack.c.b16 %v1617, %v1611
        %v2404 = vpack.c.b16 %v1618, %v1612
        %v2405 = vpack.c.b16 %v1619, %v1613
        %v2406 = vpack.c.b16 %v1620, %v1614
        %v2407 = vpack.c.b16 %v1621, %v1615
        %v2408 = vpack.c.b16 %v1628, %v1622
        %v2409 = vpack.c.b16 %v1629, %v1623
        %v2410 = vpack.c.b16 %v1630, %v1624
        %v2411 = vpack.c.b16 %v1631, %v1625
        %v2412 = vpack.c.b16 %v1632, %v1626
        %v2413 = vpack.c.b16 %v1633, %v1627
        %v2414 = vpack.c.b16 %v1640, %v1634
        %v2415 = vpack.c.b16 %v1641, %v1635
        %v2416 = vpack.c.b16 %v1642, %v1636
        %v2417 = vpack.c.b16 %v1643, %v1637
        %v2418 = vpack.c.b16 %v1644, %v1638
        %v2419 = vpack.c.b16 %v1645, %v1639
        %v2420 = vpack.c.b16 %v1652, %v1646
        %v2421 = vpack.c.b16 %v1653, %v1647
        %v2422 = vpack.c.b16 %v1654, %v1648
        %v2423 = vpack.c.b16 %v1655, %v1649
        %v2424 = vpack.c.b16 %v1656, %v1650
        %v2425 = vpack.c.b16 %v1657, %v1651
        %v2426 = vpack.c.b16 %v1664, %v1658
        %v2427 = vpack.c.b16 %v1665, %v1659
        %v2428 = vpack.c.b16 %v1666, %v1660
        %v2429 = vpack.c.b16 %v1667, %v1661
        %v2430 = vpack.c.b16 %v1668, %v1662
        %v2431 = vpack.c.b16 %v1669, %v1663
        %v2432 = vpack.c.b16 %v1676, %v1670
        %v2433 = vpack.c.b16 %v1677, %v1671
        %v2434 = vpack.c.b16 %v1678, %v1672
        %v2435 = vpack.c.b16 %v1679, %v1673
        %v2436 = vpack.c.b16 %v1680, %v1674
        %v2437 = vpack.c.b16 %v1681, %v1675
        %v2438 = vpack.c.b16 %v1688, %v1682
        %v2439 = vpack.c.b16 %v1689, %v1683
        %v2440 = vpack.c.b16 %v1690, %v1684
        %v2441 = vpack.c.b16 %v1691, %v1685
        %v2442 = vpack.c.b16 %v1692, %v1686
        %v2443 = vpack.c.b16 %v1693, %v1687
        %v2444 = vpack.c.b16 %v1700, %v1694
        %v2445 = vpack.c.b16 %v1701, %v1695
        %v2446 = vpack.c.b16 %v1702, %v1696
        %v2447 = vpack.c.b16 %v1703, %v1697
        %v2448 = vpack.c.b16 %v1704, %v1698
        %v2449 = vpack.c.b16 %v1705, %v1699
        %v2450 = vpack.c.b16 %v1712, %v1706
        %v2451 = vpack.c.b16 %v1713, %v1707
        %v2452 = vpack.c.b16 %v1714, %v1708
        %v2453 = vpack.c.b16 %v1715, %v1709
        %v2454 = vpack.c.b16 %v1716, %v1710
        %v2455 = vpack.c.b16 %v1717, %v1711
        %v2456 = vpack.c.b16 %v1724, %v1718
        %v2457 = vpack.c.b16 %v1725, %v1719
        %v2458 = vpack.c.b16 %v1726, %v1720
        %v2459 = vpack.c.b16 %v1727, %v1721
        %v2460 = vpack.c.b16 %v1728, %v1722
        %v2461 = vpack.c.b16 %v1729, %v1723
        %v2462 = vpack.c.b16 %v1736, %v1730
        %v2463 = vpack.c.b16 %v1737, %v1731
        %v2464 = vpack.c.b16 %v1738, %v1732
        %v2465 = vpack.c.b16 %v1739, %v1733
        %v2466 = vpack.c.b16 %v1740, %v1734
        %v2467 = vpack.c.b16 %v1741, %v1735
        %v2468 = vpack.c.b16 %v1748, %v1742
        %v2469 = vpack.c.b16 %v1749, %v1743
        %v2470 = vpack.c.b16 %v1750, %v1744
        %v2471 = vpack.c.b16 %v1751, %v1745
        %v2472 = vpack.c.b16 %v1752, %v1746
        %v2473 = vpack.c.b16 %v1753, %v1747
        %v2474 = vpack.c.b16 %v1760, %v1754
        %v2475 = vpack.c.b16 %v1761, %v1755
        %v2476 = vpack.c.b16 %v1762, %v1756
        %v2477 = vpack.c.b16 %v1763, %v1757
        %v2478 = vpack.c.b16 %v1764, %v1758
        %v2479 = vpack.c.b16 %v1765, %v1759
        %v2480 = vpack.c.b16 %v1772, %v1766
        %v2481 = vpack.c.b16 %v1773, %v1767
        %v2482 = vpack.c.b16 %v1774, %v1768
        %v2483 = vpack.c.b16 %v1775, %v1769
        %v2484 = vpack.c.b16 %v1776, %v1770
        %v2485 = vpack.c.b16 %v1777, %v1771
        %v2486 = vpack.c.b16 %v1784, %v1778
        %v2487 = vpack.c.b16 %v1785, %v1779
        %v2488 = vpack.c.b16 %v1786, %v1780
        %v2489 = vpack.c.b16 %v1787, %v1781
        %v2490 = vpack.c.b16 %v1788, %v1782
        %v2491 = vpack.c.b16 %v1789, %v1783
        %v2492 = vpack.c.b16 %v1796, %v1790
        %v2493 = vpack.c.b16 %v1797, %v1791
        %v2494 = vpack.c.b16 %v1798, %v1792
        %v2495 = vpack.c.b16 %v1799, %v1793
        %v2496 = vpack.c.b16 %v1800, %v1794
        %v2497 = vpack.c.b16 %v1801, %v1795
        %v2498 = vpack.c.b16 %v1808, %v1802
        %v2499 = vpack.c.b16 %v1809, %v1803
        %v2500 = vpack.c.b16 %v1810, %v1804
        %v2501 = vpack.c.b16 %v1811, %v1805
        %v2502 = vpack.c.b16 %v1812, %v1806
        %v2503 = vpack.c.b16 %v1813, %v1807
        %v2504 = vpack.c.b16 %v1820, %v1814
        %v2505 = vpack.c.b16 %v1821, %v1815
        %v2506 = vpack.c.b16 %v1822, %v1816
        %v2507 = vpack.c.b16 %v1823, %v1817
        %v2508 = vpack.c.b16 %v1824, %v1818
        %v2509 = vpack.c.b16 %v1825, %v1819
        %v2510 = vpack.c.b16 %v1832, %v1826
        %v2511 = vpack.c.b16 %v1833, %v1827
        %v2512 = vpack.c.b16 %v1834, %v1828
        %v2513 = vpack.c.b16 %v1835, %v1829
        %v2514 = vpack.c.b16 %v1836, %v1830
        %v2515 = vpack.c.b16 %v1837, %v1831
        %v2516 = vpack.c.b16 %v1844, %v1838
        %v2517 = vpack.c.b16 %v1845, %v1839
        %v2518 = vpack.c.b16 %v1846, %v1840
        %v2519 = vpack.c.b16 %v1847, %v1841
        %v2520 = vpack.c.b16 %v1848, %v1842
        %v2521 = vpack.c.b16 %v1849, %v1843
        %v2522 = vpack.c.b16 %v1856, %v1850
        %v2523 = vpack.c.b16 %v1857, %v1851
        %v2524 = vpack.c.b16 %v1858, %v1852
        %v2525 = vpack.c.b16 %v1859, %v1853
        %v2526 = vpack.c.b16 %v1860, %v1854
        %v2527 = vpack.c.b16 %v1861, %v1855
        %v2528 = vpack.c.b16 %v1868, %v1862
        %v2529 = vpack.c.b16 %v1869, %v1863
        %v2530 = vpack.c.b16 %v1870, %v1864
        %v2531 = vpack.c.b16 %v1871, %v1865
        %v2532 = vpack.c.b16 %v1872, %v1866
        %v2533 = vpack.c.b16 %v1873, %v1867
        %v2534 = vpack.c.b16 %v1880, %v1874
        %v2535 = vpack.c.b16 %v1881, %v1875
        %v2536 = vpack.c.b16 %v1882, %v1876
        %v2537 = vpack.c.b16 %v1883, %v1877
        %v2538 = vpack.c.b16 %v1884, %v1878
        %v2539 = vpack.c.b16 %v1885, %v1879
        %v2540 = vpack.c.b16 %v1892, %v1886
        %v2541 = vpack.c.b16 %v1893, %v1887
        %v2542 = vpack.c.b16 %v1894, %v1888
        %v2543 = vpack.c.b16 %v1895, %v1889
        %v2544 = vpack.c.b16 %v1896, %v1890
        %v2545 = vpack.c.b16 %v1897, %v1891
        %v2546 = vpack.c.b16 %v1904, %v1898
        %v2547 = vpack.c.b16 %v1905, %v1899
        %v2548 = vpack.c.b16 %v1906, %v1900
        %v2549 = vpack.c.b16 %v1907, %v1901
        %v2550 = vpack.c.b16 %v1908, %v1902
        %v2551 = vpack.c.b16 %v1909, %v1903
        %v2552 = vpack.c.b16 %v1916, %v1910
        %v2553 = vpack.c.b16 %v1917, %v1911
        %v2554 = vpack.c.b16 %v1918, %v1912
        %v2555 = vpack.c.b16 %v1919, %v1913
        %v2556 = vpack.c.b16 %v1920, %v1914
        %v2557 = vpack.c.b16 %v1921, %v1915
        %v2558 = vpack.c.b16 %v1928, %v1922
        %v2559 = vpack.c.b16 %v1929, %v1923
        %v2560 = vpack.c.b16 %v1930, %v1924
        %v2561 = vpack.c.b16 %v1931, %v1925
        %v2562 = vpack.c.b16 %v1932, %v1926
        %v2563 = vpack.c.b16 %v1933, %v1927
        %v2564 = vpack.c.b16 %v1940, %v1934
        %v2565 = vpack.c.b16 %v1941, %v1935
        %v2566 = vpack.c.b16 %v1942, %v1936
        %v2567 = vpack.c.b16 %v1943, %v1937
        %v2568 = vpack.c.b16 %v1944, %v1938
        %v2569 = vpack.c.b16 %v1945, %v1939
        %v2570 = vpack.c.b16 %v1952, %v1946
        %v2571 = vpack.c.b16 %v1953, %v1947
        %v2572 = vpack.c.b16 %v1954, %v1948
        %v2573 = vpack.c.b16 %v1955, %v1949
        %v2574 = vpack.c.b16 %v1956, %v1950
        %v2575 = vpack.c.b16 %v1957, %v1951
        %v2576 = vpack.c.b16 %v1964, %v1958
        %v2577 = vpack.c.b16 %v1965, %v1959
        %v2578 = vpack.c.b16 %v1966, %v1960
        %v2579 = vpack.c.b16 %v1967, %v1961
        %v2580 = vpack.c.b16 %v1968, %v1962
        %v2581 = vpack.c.b16 %v1969, %v1963
        %v2582 = vpack.c.b16 %v1976, %v1970
        %v2583 = vpack.c.b16 %v1977, %v1971
        %v2584 = vpack.c.b16 %v1978, %v1972
        %v2585 = vpack.c.b16 %v1979, %v1973
        %v2586 = vpack.c.b16 %v1980, %v1974
        %v2587 = vpack.c.b16 %v1981, %v1975
        %v2588 = vpack.c.b16 %v1988, %v1982
        %v2589 = vpack.c.b16 %v1989, %v1983
        %v2590 = vpack.c.b16 %v1990, %v1984
        %v2591 = vpack.c.b16 %v1991, %v1985
        %v2592 = vpack.c.b16 %v1992, %v1986
        %v2593 = vpack.c.b16 %v1993, %v1987
        %v2594 = vpack.c.b16 %v2000, %v1994
        %v2595 = vpack.c.b16 %v2001, %v1995
        %v2596 = vpack.c.b16 %v2002, %v1996
        %v2597 = vpack.c.b16 %v2003, %v1997
        %v2598 = vpack.c.b16 %v2004, %v1998
        %v2599 = vpack.c.b16 %v2005, %v1999
        %v2600 = vpack.c.b16 %v2012, %v2006
        %v2601 = vpack.c.b16 %v2013, %v2007
        %v2602 = vpack.c.b16 %v2014, %v2008
        %v2603 = vpack.c.b16 %v2015, %v2009
        %v2604 = vpack.c.b16 %v2016, %v2010
        %v2605 = vpack.c.b16 %v2017, %v2011
        %v2606 = vpack.c.b16 %v2024, %v2018
        %v2607 = vpack.c.b16 %v2025, %v2019
        %v2608 = vpack.c.b16 %v2026, %v2020
        %v2609 = vpack.c.b16 %v2027, %v2021
        %v2610 = vpack.c.b16 %v2028, %v2022
        %v2611 = vpack.c.b16 %v2029, %v2023
        %v2612 = vpack.c.b16 %v2036, %v2030
        %v2613 = vpack.c.b16 %v2037, %v2031
        %v2614 = vpack.c.b16 %v2038, %v2032
        %v2615 = vpack.c.b16 %v2039, %v2033
        %v2616 = vpack.c.b16 %v2040, %v2034
        %v2617 = vpack.c.b16 %v2041, %v2035
        %v2618 = vpack.c.b16 %v2048, %v2042
        %v2619 = vpack.c.b16 %v2049, %v2043
        %v2620 = vpack.c.b16 %v2050, %v2044
        %v2621 = vpack.c.b16 %v2051, %v2045
        %v2622 = vpack.c.b16 %v2052, %v2046
        %v2623 = vpack.c.b16 %v2053, %v2047
        %v2624 = vpack.c.b16 %v2060, %v2054
        %v2625 = vpack.c.b16 %v2061, %v2055
        %v2626 = vpack.c.b16 %v2062, %v2056
        %v2627 = vpack.c.b16 %v2063, %v2057
        %v2628 = vpack.c.b16 %v2064, %v2058
        %v2629 = vpack.c.b16 %v2065, %v2059
        %v2630 = vpack.c.b16 %v2072, %v2066
        %v2631 = vpack.c.b16 %v2073, %v2067
        %v2632 = vpack.c.b16 %v2074, %v2068
        %v2633 = vpack.c.b16 %v2075, %v2069
        %v2634 = vpack.c.b16 %v2076, %v2070
        %v2635 = vpack.c.b16 %v2077, %v2071
        %v2636 = vpack.c.b16 %v2084, %v2078
        %v2637 = vpack.c.b16 %v2085, %v2079
        %v2638 = vpack.c.b16 %v2086, %v2080
        %v2639 = vpack.c.b16 %v2087, %v2081
        %v2640 = vpack.c.b16 %v2088, %v2082
        %v2641 = vpack.c.b16 %v2089, %v2083
        %v2642 = vpack.c.b16 %v2096, %v2090
        %v2643 = vpack.c.b16 %v2097, %v2091
        %v2644 = vpack.c.b16 %v2098, %v2092
        %v2645 = vpack.c.b16 %v2099, %v2093
        %v2646 = vpack.c.b16 %v2100, %v2094
        %v2647 = vpack.c.b16 %v2101, %v2095
        %v2648 = vpack.c.b16 %v2108, %v2102
        %v2649 = vpack.c.b16 %v2109, %v2103
        %v2650 = vpack.c.b16 %v2110, %v2104
        %v2651 = vpack.c.b16 %v2111, %v2105
        %v2652 = vpack.c.b16 %v2112, %v2106
        %v2653 = vpack.c.b16 %v2113, %v2107
        %v2654 = vpack.c.b16 %v2120, %v2114
        %v2655 = vpack.c.b16 %v2121, %v2115
        %v2656 = vpack.c.b16 %v2122, %v2116
        %v2657 = vpack.c.b16 %v2123, %v2117
        %v2658 = vpack.c.b16 %v2124, %v2118
        %v2659 = vpack.c.b16 %v2125, %v2119
        %v2660 = vpack.c.b16 %v2132, %v2126
        %v2661 = vpack.c.b16 %v2133, %v2127
        %v2662 = vpack.c.b16 %v2134, %v2128
        %v2663 = vpack.c.b16 %v2135, %v2129
        %v2664 = vpack.c.b16 %v2136, %v2130
        %v2665 = vpack.c.b16 %v2137, %v2131
        %v2666 = vpack.c.b16 %v2144, %v2138
        %v2667 = vpack.c.b16 %v2145, %v2139
        %v2668 = vpack.c.b16 %v2146, %v2140
        %v2669 = vpack.c.b16 %v2147, %v2141
        %v2670 = vpack.c.b16 %v2148, %v2142
        %v2671 = vpack.c.b16 %v2149, %v2143
        %v2672 = vpack.c.b16 %v2156, %v2150
        %v2673 = vpack.c.b16 %v2157, %v2151
        %v2674 = vpack.c.b16 %v2158, %v2152
        %v2675 = vpack.c.b16 %v2159, %v2153
        %v2676 = vpack.c.b16 %v2160, %v2154
        %v2677 = vpack.c.b16 %v2161, %v2155
        %v2678 = vpack.c.b16 %v2168, %v2162
        %v2679 = vpack.c.b16 %v2169, %v2163
        %v2680 = vpack.c.b16 %v2170, %v2164
        %v2681 = vpack.c.b16 %v2171, %v2165
        %v2682 = vpack.c.b16 %v2172, %v2166
        %v2683 = vpack.c.b16 %v2173, %v2167
        %v2684 = vpack.c.b16 %v2180, %v2174
        %v2685 = vpack.c.b16 %v2181, %v2175
        %v2686 = vpack.c.b16 %v2182, %v2176
        %v2687 = vpack.c.b16 %v2183, %v2177
        %v2688 = vpack.c.b16 %v2184, %v2178
        %v2689 = vpack.c.b16 %v2185, %v2179
        %v2690 = vpack.c.b16 %v2192, %v2186
        %v2691 = vpack.c.b16 %v2193, %v2187
        %v2692 = vpack.c.b16 %v2194, %v2188
        %v2693 = vpack.c.b16 %v2195, %v2189
        %v2694 = vpack.c.b16 %v2196, %v2190
        %v2695 = vpack.c.b16 %v2197, %v2191
        %v2696 = vpack.c.b16 %v2204, %v2198
        %v2697 = vpack.c.b16 %v2205, %v2199
        %v2698 = vpack.c.b16 %v2206, %v2200
        %v2699 = vpack.c.b16 %v2207, %v2201
        %v2700 = vpack.c.b16 %v2208, %v2202
        %v2701 = vpack.c.b16 %v2209, %v2203
        %v2702 = vpack.c.b16 %v2216, %v2210
        %v2703 = vpack.c.b16 %v2217, %v2211
        %v2704 = vpack.c.b16 %v2218, %v2212
        %v2705 = vpack.c.b16 %v2219, %v2213
        %v2706 = vpack.c.b16 %v2220, %v2214
        %v2707 = vpack.c.b16 %v2221, %v2215
        %v2708 = vpack.c.b16 %v2228, %v2222
        %v2709 = vpack.c.b16 %v2229, %v2223
        %v2710 = vpack.c.b16 %v2230, %v2224
        %v2711 = vpack.c.b16 %v2231, %v2225
        %v2712 = vpack.c.b16 %v2232, %v2226
        %v2713 = vpack.c.b16 %v2233, %v2227
        %3194 = vmatprep.subr.bf16.mxu0 %v2235
        %3195 = vmatpush1.bf16.msra.mxu0 %v2234
        %3196 = vmatprep.subr.bf16.mxu0 %v2241
        %3197 = vmatpush1.bf16.msra.mxu0 %v2240
        %3198 = vmatprep.subr.bf16.mxu0 %v2247
        %3199 = vmatpush1.bf16.msra.mxu0 %v2246
        %3200 = vmatprep.subr.bf16.mxu0 %v2253
        %3201 = vmatpush1.bf16.msra.mxu0 %v2252
        %3202 = vmatprep.subr.bf16.mxu0 %v2259
        %3203 = vmatpush1.bf16.msra.mxu0 %v2258
        %3204 = vmatprep.subr.bf16.mxu0 %v2265
        %3205 = vmatpush1.bf16.msra.mxu0 %v2264
        %3206 = vmatprep.subr.bf16.mxu0 %v2271
        %3207 = vmatpush1.bf16.msra.mxu0 %v2270
        %3208 = vmatprep.subr.bf16.mxu0 %v2277
        %3209 = vmatpush1.bf16.msra.mxu0 %v2276
        %3210 = vmatprep.subr.bf16.mxu0 %v2283
        %3211 = vmatpush1.bf16.msra.mxu0 %v2282
        %3212 = vmatprep.subr.bf16.mxu0 %v2289
        %3213 = vmatpush1.bf16.msra.mxu0 %v2288
        %3214 = vmatprep.subr.bf16.mxu0 %v2295
        %3215 = vmatpush1.bf16.msra.mxu0 %v2294
        %3216 = vmatprep.subr.bf16.mxu0 %v2301
        %3217 = vmatpush1.bf16.msra.mxu0 %v2300
        %3218 = vmatprep.subr.bf16.mxu0 %v2307
        %3219 = vmatpush1.bf16.msra.mxu0 %v2306
        %3220 = vmatprep.subr.bf16.mxu0 %v2313
        %3221 = vmatpush1.bf16.msra.mxu0 %v2312
        %3222 = vmatprep.subr.bf16.mxu0 %v2319
        %3223 = vmatpush1.bf16.msra.mxu0 %v2318
        %3224 = vmatprep.subr.bf16.mxu0 %v2325
        %3225 = vmatpush1.bf16.msra.mxu0 %v2324
        %3226 = vmatprep.mubr.bf16.mxu0 %v775
        %3227 = vmatmul.mubr.bf16.gmra.mrb[0].mxu0 %v774
        %v3228 = vpop.f32.mrb[0].mxu0
        %v3229 = vadd.f32 %v732, %v3228
        %v3230 = vpop.f32.mrb[0].mxu0
        %v3231 = vadd.f32 %v736, %v3230
        %v3232 = vpop.f32.mrb[0].mxu0
        %v3233 = vpop.f32.mrb[0].mxu0
        %3234 = vdwg.mxu0
        %3235 = vmatprep.subr.bf16.mxu0 %v2331
        %3236 = vmatpush1.bf16.msra.mxu0 %v2330
        %3237 = vmatprep.subr.bf16.mxu0 %v2337
        %3238 = vmatpush1.bf16.msra.mxu0 %v2336
        %3239 = vmatprep.subr.bf16.mxu0 %v2343
        %3240 = vmatpush1.bf16.msra.mxu0 %v2342
        %3241 = vmatprep.subr.bf16.mxu0 %v2349
        %3242 = vmatpush1.bf16.msra.mxu0 %v2348
        %3243 = vmatprep.subr.bf16.mxu0 %v2355
        %3244 = vmatpush1.bf16.msra.mxu0 %v2354
        %3245 = vmatprep.subr.bf16.mxu0 %v2361
        %3246 = vmatpush1.bf16.msra.mxu0 %v2360
        %3247 = vmatprep.subr.bf16.mxu0 %v2367
        %3248 = vmatpush1.bf16.msra.mxu0 %v2366
        %3249 = vmatprep.subr.bf16.mxu0 %v2373
        %3250 = vmatpush1.bf16.msra.mxu0 %v2372
        %3251 = vmatprep.subr.bf16.mxu0 %v2379
        %3252 = vmatpush1.bf16.msra.mxu0 %v2378
        %3253 = vmatprep.subr.bf16.mxu0 %v2385
        %3254 = vmatpush1.bf16.msra.mxu0 %v2384
        %3255 = vmatprep.subr.bf16.mxu0 %v2391
        %3256 = vmatpush1.bf16.msra.mxu0 %v2390
        %3257 = vmatprep.subr.bf16.mxu0 %v2397
        %3258 = vmatpush1.bf16.msra.mxu0 %v2396
        %3259 = vmatprep.subr.bf16.mxu0 %v2403
        %3260 = vmatpush1.bf16.msra.mxu0 %v2402
        %3261 = vmatprep.subr.bf16.mxu0 %v2409
        %3262 = vmatpush1.bf16.msra.mxu0 %v2408
        %3263 = vmatprep.subr.bf16.mxu0 %v2415
        %3264 = vmatpush1.bf16.msra.mxu0 %v2414
        %3265 = vmatprep.subr.bf16.mxu0 %v2421
        %3266 = vmatpush1.bf16.msra.mxu0 %v2420
        %3267 = vmatprep.mubr.bf16.mxu0 %v777
        %3268 = vmatmul.mubr.bf16.gmra.mrb[0].mxu0 %v776
        %v3269 = vpop.f32.mrb[0].mxu0
        %v3270 = vadd.f32 %v3229, %v3269
        %v3271 = vpop.f32.mrb[0].mxu0
        %v3272 = vadd.f32 %v3231, %v3271
        %v3273 = vpop.f32.mrb[0].mxu0
        %v3274 = vpop.f32.mrb[0].mxu0
        %3275 = vdwg.mxu0
        %3276 = vmatprep.subr.bf16.mxu0 %v2427
        %3277 = vmatpush1.bf16.msra.mxu0 %v2426
        %3278 = vmatprep.subr.bf16.mxu0 %v2433
        %3279 = vmatpush1.bf16.msra.mxu0 %v2432
        %3280 = vmatprep.subr.bf16.mxu0 %v2439
        %3281 = vmatpush1.bf16.msra.mxu0 %v2438
        %3282 = vmatprep.subr.bf16.mxu0 %v2445
        %3283 = vmatpush1.bf16.msra.mxu0 %v2444
        %3284 = vmatprep.subr.bf16.mxu0 %v2451
        %3285 = vmatpush1.bf16.msra.mxu0 %v2450
        %3286 = vmatprep.subr.bf16.mxu0 %v2457
        %3287 = vmatpush1.bf16.msra.mxu0 %v2456
        %3288 = vmatprep.subr.bf16.mxu0 %v2463
        %3289 = vmatpush1.bf16.msra.mxu0 %v2462
        %3290 = vmatprep.subr.bf16.mxu0 %v2469
        %3291 = vmatpush1.bf16.msra.mxu0 %v2468
        %3292 = vmatprep.subr.bf16.mxu0 %v2475
        %3293 = vmatpush1.bf16.msra.mxu0 %v2474
        %3294 = vmatprep.subr.bf16.mxu0 %v2481
        %3295 = vmatpush1.bf16.msra.mxu0 %v2480
        %3296 = vmatprep.subr.bf16.mxu0 %v2487
        %3297 = vmatpush1.bf16.msra.mxu0 %v2486
        %3298 = vmatprep.subr.bf16.mxu0 %v2493
        %3299 = vmatpush1.bf16.msra.mxu0 %v2492
        %3300 = vmatprep.subr.bf16.mxu0 %v2499
        %3301 = vmatpush1.bf16.msra.mxu0 %v2498
        %3302 = vmatprep.subr.bf16.mxu0 %v2505
        %3303 = vmatpush1.bf16.msra.mxu0 %v2504
        %3304 = vmatprep.subr.bf16.mxu0 %v2511
        %3305 = vmatpush1.bf16.msra.mxu0 %v2510
        %3306 = vmatprep.subr.bf16.mxu0 %v2517
        %3307 = vmatpush1.bf16.msra.mxu0 %v2516
        %3308 = vmatprep.mubr.bf16.mxu0 %v779
        %3309 = vmatmul.mubr.bf16.gmra.mrb[0].mxu0 %v778
        %v3310 = vpop.f32.mrb[0].mxu0
        %v3311 = vadd.f32 %v3270, %v3310
        %v3312 = vpop.f32.mrb[0].mxu0
        %v3313 = vadd.f32 %v3272, %v3312
        %v3314 = vpop.f32.mrb[0].mxu0
        %v3315 = vpop.f32.mrb[0].mxu0
        %3316 = vdwg.mxu0
        %3317 = vmatprep.subr.bf16.mxu0 %v2523
        %3318 = vmatpush1.bf16.msra.mxu0 %v2522
        %3319 = vmatprep.subr.bf16.mxu0 %v2529
        %3320 = vmatpush1.bf16.msra.mxu0 %v2528
        %3321 = vmatprep.subr.bf16.mxu0 %v2535
        %3322 = vmatpush1.bf16.msra.mxu0 %v2534
        %3323 = vmatprep.subr.bf16.mxu0 %v2541
        %3324 = vmatpush1.bf16.msra.mxu0 %v2540
        %3325 = vmatprep.subr.bf16.mxu0 %v2547
        %3326 = vmatpush1.bf16.msra.mxu0 %v2546
        %3327 = vmatprep.subr.bf16.mxu0 %v2553
        %3328 = vmatpush1.bf16.msra.mxu0 %v2552
        %3329 = vmatprep.subr.bf16.mxu0 %v2559
        %3330 = vmatpush1.bf16.msra.mxu0 %v2558
        %3331 = vmatprep.subr.bf16.mxu0 %v2565
        %3332 = vmatpush1.bf16.msra.mxu0 %v2564
        %3333 = vmatprep.subr.bf16.mxu0 %v2571
        %3334 = vmatpush1.bf16.msra.mxu0 %v2570
        %3335 = vmatprep.subr.bf16.mxu0 %v2577
        %3336 = vmatpush1.bf16.msra.mxu0 %v2576
        %3337 = vmatprep.subr.bf16.mxu0 %v2583
        %3338 = vmatpush1.bf16.msra.mxu0 %v2582
        %3339 = vmatprep.subr.bf16.mxu0 %v2589
        %3340 = vmatpush1.bf16.msra.mxu0 %v2588
        %3341 = vmatprep.subr.bf16.mxu0 %v2595
        %3342 = vmatpush1.bf16.msra.mxu0 %v2594
        %3343 = vmatprep.subr.bf16.mxu0 %v2601
        %3344 = vmatpush1.bf16.msra.mxu0 %v2600
        %3345 = vmatprep.subr.bf16.mxu0 %v2607
        %3346 = vmatpush1.bf16.msra.mxu0 %v2606
        %3347 = vmatprep.subr.bf16.mxu0 %v2613
        %3348 = vmatpush1.bf16.msra.mxu0 %v2612
        %3349 = vmatprep.mubr.bf16.mxu0 %v781
        %3350 = vmatmul.mubr.bf16.gmra.mrb[0].mxu0 %v780
        %v3351 = vpop.f32.mrb[0].mxu0
        %v3352 = vadd.f32 %v3311, %v3351
        %v3353 = vpop.f32.mrb[0].mxu0
        %v3354 = vadd.f32 %v3313, %v3353
        %v3355 = vpop.f32.mrb[0].mxu0
        %v3356 = vpop.f32.mrb[0].mxu0
        %3357 = vdwg.mxu0
        %3358 = vmatprep.subr.bf16.mxu0 %v2619
        %3359 = vmatpush1.bf16.msra.mxu0 %v2618
        %3360 = vmatprep.subr.bf16.mxu0 %v2625
        %3361 = vmatpush1.bf16.msra.mxu0 %v2624
        %3362 = vmatprep.subr.bf16.mxu0 %v2631
        %3363 = vmatpush1.bf16.msra.mxu0 %v2630
        %3364 = vmatprep.subr.bf16.mxu0 %v2637
        %3365 = vmatpush1.bf16.msra.mxu0 %v2636
        %3366 = vmatprep.subr.bf16.mxu0 %v2643
        %3367 = vmatpush1.bf16.msra.mxu0 %v2642
        %3368 = vmatprep.subr.bf16.mxu0 %v2649
        %3369 = vmatpush1.bf16.msra.mxu0 %v2648
        %3370 = vmatprep.subr.bf16.mxu0 %v2655
        %3371 = vmatpush1.bf16.msra.mxu0 %v2654
        %3372 = vmatprep.subr.bf16.mxu0 %v2661
        %3373 = vmatpush1.bf16.msra.mxu0 %v2660
        %3374 = vmatprep.subr.bf16.mxu0 %v2667
        %3375 = vmatpush1.bf16.msra.mxu0 %v2666
        %3376 = vmatprep.subr.bf16.mxu0 %v2673
        %3377 = vmatpush1.bf16.msra.mxu0 %v2672
        %3378 = vmatprep.subr.bf16.mxu0 %v2679
        %3379 = vmatpush1.bf16.msra.mxu0 %v2678
        %3380 = vmatprep.subr.bf16.mxu0 %v2685
        %3381 = vmatpush1.bf16.msra.mxu0 %v2684
        %3382 = vmatprep.subr.bf16.mxu0 %v2691
        %3383 = vmatpush1.bf16.msra.mxu0 %v2690
        %3384 = vmatprep.subr.bf16.mxu0 %v2697
        %3385 = vmatpush1.bf16.msra.mxu0 %v2696
        %3386 = vmatprep.subr.bf16.mxu0 %v2703
        %3387 = vmatpush1.bf16.msra.mxu0 %v2702
        %3388 = vmatprep.subr.bf16.mxu0 %v2709
        %3389 = vmatpush1.bf16.msra.mxu0 %v2708
        %3390 = vmatprep.mubr.bf16.mxu0 %v783
        %3391 = vmatmul.mubr.bf16.gmra.mrb[0].mxu0 %v782
        %v3392 = vpop.f32.mrb[0].mxu0
        %v3393 = vadd.f32 %v3352, %v3392
        %v3394 = vpop.f32.mrb[0].mxu0
        %v3395 = vadd.f32 %v3354, %v3394
        %v3396 = vpop.f32.mrb[0].mxu0
        %v3397 = vpop.f32.mrb[0].mxu0
        %3398 = vdwg.mxu0
        %3399 = vmatprep.subr.bf16.mxu0 %v2237
        %3400 = vmatpush1.bf16.msra.mxu0 %v2236
        %3401 = vmatprep.subr.bf16.mxu0 %v2243
        %3402 = vmatpush1.bf16.msra.mxu0 %v2242
        %3403 = vmatprep.subr.bf16.mxu0 %v2249
        %3404 = vmatpush1.bf16.msra.mxu0 %v2248
        %3405 = vmatprep.subr.bf16.mxu0 %v2255
        %3406 = vmatpush1.bf16.msra.mxu0 %v2254
        %3407 = vmatprep.subr.bf16.mxu0 %v2261
        %3408 = vmatpush1.bf16.msra.mxu0 %v2260
        %3409 = vmatprep.subr.bf16.mxu0 %v2267
        %3410 = vmatpush1.bf16.msra.mxu0 %v2266
        %3411 = vmatprep.subr.bf16.mxu0 %v2273
        %3412 = vmatpush1.bf16.msra.mxu0 %v2272
        %3413 = vmatprep.subr.bf16.mxu0 %v2279
        %3414 = vmatpush1.bf16.msra.mxu0 %v2278
        %3415 = vmatprep.subr.bf16.mxu0 %v2285
        %3416 = vmatpush1.bf16.msra.mxu0 %v2284
        %3417 = vmatprep.subr.bf16.mxu0 %v2291
        %3418 = vmatpush1.bf16.msra.mxu0 %v2290
        %3419 = vmatprep.subr.bf16.mxu0 %v2297
        %3420 = vmatpush1.bf16.msra.mxu0 %v2296
        %3421 = vmatprep.subr.bf16.mxu0 %v2303
        %3422 = vmatpush1.bf16.msra.mxu0 %v2302
        %3423 = vmatprep.subr.bf16.mxu0 %v2309
        %3424 = vmatpush1.bf16.msra.mxu0 %v2308
        %3425 = vmatprep.subr.bf16.mxu0 %v2315
        %3426 = vmatpush1.bf16.msra.mxu0 %v2314
        %3427 = vmatprep.subr.bf16.mxu0 %v2321
        %3428 = vmatpush1.bf16.msra.mxu0 %v2320
        %3429 = vmatprep.subr.bf16.mxu0 %v2327
        %3430 = vmatpush1.bf16.msra.mxu0 %v2326
        %3431 = vmatprep.mubr.bf16.mxu0 %v775
        %3432 = vmatmul.mubr.bf16.gmra.mrb[0].mxu0 %v774
        %v3433 = vpop.f32.mrb[0].mxu0
        %v3434 = vadd.f32 %v740, %v3433
        %v3435 = vpop.f32.mrb[0].mxu0
        %v3436 = vadd.f32 %v744, %v3435
        %v3437 = vpop.f32.mrb[0].mxu0
        %v3438 = vpop.f32.mrb[0].mxu0
        %3439 = vdwg.mxu0
        %3440 = vmatprep.subr.bf16.mxu0 %v2333
        %3441 = vmatpush1.bf16.msra.mxu0 %v2332
        %3442 = vmatprep.subr.bf16.mxu0 %v2339
        %3443 = vmatpush1.bf16.msra.mxu0 %v2338
        %3444 = vmatprep.subr.bf16.mxu0 %v2345
        %3445 = vmatpush1.bf16.msra.mxu0 %v2344
        %3446 = vmatprep.subr.bf16.mxu0 %v2351
        %3447 = vmatpush1.bf16.msra.mxu0 %v2350
        %3448 = vmatprep.subr.bf16.mxu0 %v2357
        %3449 = vmatpush1.bf16.msra.mxu0 %v2356
        %3450 = vmatprep.subr.bf16.mxu0 %v2363
        %3451 = vmatpush1.bf16.msra.mxu0 %v2362
        %3452 = vmatprep.subr.bf16.mxu0 %v2369
        %3453 = vmatpush1.bf16.msra.mxu0 %v2368
        %3454 = vmatprep.subr.bf16.mxu0 %v2375
        %3455 = vmatpush1.bf16.msra.mxu0 %v2374
        %3456 = vmatprep.subr.bf16.mxu0 %v2381
        %3457 = vmatpush1.bf16.msra.mxu0 %v2380
        %3458 = vmatprep.subr.bf16.mxu0 %v2387
        %3459 = vmatpush1.bf16.msra.mxu0 %v2386
        %3460 = vmatprep.subr.bf16.mxu0 %v2393
        %3461 = vmatpush1.bf16.msra.mxu0 %v2392
        %3462 = vmatprep.subr.bf16.mxu0 %v2399
        %3463 = vmatpush1.bf16.msra.mxu0 %v2398
        %3464 = vmatprep.subr.bf16.mxu0 %v2405
        %3465 = vmatpush1.bf16.msra.mxu0 %v2404
        %3466 = vmatprep.subr.bf16.mxu0 %v2411
        %3467 = vmatpush1.bf16.msra.mxu0 %v2410
        %3468 = vmatprep.subr.bf16.mxu0 %v2417
        %3469 = vmatpush1.bf16.msra.mxu0 %v2416
        %3470 = vmatprep.subr.bf16.mxu0 %v2423
        %3471 = vmatpush1.bf16.msra.mxu0 %v2422
        %3472 = vmatprep.mubr.bf16.mxu0 %v777
        %3473 = vmatmul.mubr.bf16.gmra.mrb[0].mxu0 %v776
        %v3474 = vpop.f32.mrb[0].mxu0
        %v3475 = vadd.f32 %v3434, %v3474
        %v3476 = vpop.f32.mrb[0].mxu0
        %v3477 = vadd.f32 %v3436, %v3476
        %v3478 = vpop.f32.mrb[0].mxu0
        %v3479 = vpop.f32.mrb[0].mxu0
        %3480 = vdwg.mxu0
        %3481 = vmatprep.subr.bf16.mxu0 %v2429
        %3482 = vmatpush1.bf16.msra.mxu0 %v2428
        %3483 = vmatprep.subr.bf16.mxu0 %v2435
        %3484 = vmatpush1.bf16.msra.mxu0 %v2434
        %3485 = vmatprep.subr.bf16.mxu0 %v2441
        %3486 = vmatpush1.bf16.msra.mxu0 %v2440
        %3487 = vmatprep.subr.bf16.mxu0 %v2447
        %3488 = vmatpush1.bf16.msra.mxu0 %v2446
        %3489 = vmatprep.subr.bf16.mxu0 %v2453
        %3490 = vmatpush1.bf16.msra.mxu0 %v2452
        %3491 = vmatprep.subr.bf16.mxu0 %v2459
        %3492 = vmatpush1.bf16.msra.mxu0 %v2458
        %3493 = vmatprep.subr.bf16.mxu0 %v2465
        %3494 = vmatpush1.bf16.msra.mxu0 %v2464
        %3495 = vmatprep.subr.bf16.mxu0 %v2471
        %3496 = vmatpush1.bf16.msra.mxu0 %v2470
        %3497 = vmatprep.subr.bf16.mxu0 %v2477
        %3498 = vmatpush1.bf16.msra.mxu0 %v2476
        %3499 = vmatprep.subr.bf16.mxu0 %v2483
        %3500 = vmatpush1.bf16.msra.mxu0 %v2482
        %3501 = vmatprep.subr.bf16.mxu0 %v2489
        %3502 = vmatpush1.bf16.msra.mxu0 %v2488
        %3503 = vmatprep.subr.bf16.mxu0 %v2495
        %3504 = vmatpush1.bf16.msra.mxu0 %v2494
        %3505 = vmatprep.subr.bf16.mxu0 %v2501
        %3506 = vmatpush1.bf16.msra.mxu0 %v2500
        %3507 = vmatprep.subr.bf16.mxu0 %v2507
        %3508 = vmatpush1.bf16.msra.mxu0 %v2506
        %3509 = vmatprep.subr.bf16.mxu0 %v2513
        %3510 = vmatpush1.bf16.msra.mxu0 %v2512
        %3511 = vmatprep.subr.bf16.mxu0 %v2519
        %3512 = vmatpush1.bf16.msra.mxu0 %v2518
        %3513 = vmatprep.mubr.bf16.mxu0 %v779
        %3514 = vmatmul.mubr.bf16.gmra.mrb[0].mxu0 %v778
        %v3515 = vpop.f32.mrb[0].mxu0
        %v3516 = vadd.f32 %v3475, %v3515
        %v3517 = vpop.f32.mrb[0].mxu0
        %v3518 = vadd.f32 %v3477, %v3517
        %v3519 = vpop.f32.mrb[0].mxu0
        %v3520 = vpop.f32.mrb[0].mxu0
        %3521 = vdwg.mxu0
        %3522 = vmatprep.subr.bf16.mxu0 %v2525
        %3523 = vmatpush1.bf16.msra.mxu0 %v2524
        %3524 = vmatprep.subr.bf16.mxu0 %v2531
        %3525 = vmatpush1.bf16.msra.mxu0 %v2530
        %3526 = vmatprep.subr.bf16.mxu0 %v2537
        %3527 = vmatpush1.bf16.msra.mxu0 %v2536
        %3528 = vmatprep.subr.bf16.mxu0 %v2543
        %3529 = vmatpush1.bf16.msra.mxu0 %v2542
        %3530 = vmatprep.subr.bf16.mxu0 %v2549
        %3531 = vmatpush1.bf16.msra.mxu0 %v2548
        %3532 = vmatprep.subr.bf16.mxu0 %v2555
        %3533 = vmatpush1.bf16.msra.mxu0 %v2554
        %3534 = vmatprep.subr.bf16.mxu0 %v2561
        %3535 = vmatpush1.bf16.msra.mxu0 %v2560
        %3536 = vmatprep.subr.bf16.mxu0 %v2567
        %3537 = vmatpush1.bf16.msra.mxu0 %v2566
        %3538 = vmatprep.subr.bf16.mxu0 %v2573
        %3539 = vmatpush1.bf16.msra.mxu0 %v2572
        %3540 = vmatprep.subr.bf16.mxu0 %v2579
        %3541 = vmatpush1.bf16.msra.mxu0 %v2578
        %3542 = vmatprep.subr.bf16.mxu0 %v2585
        %3543 = vmatpush1.bf16.msra.mxu0 %v2584
        %3544 = vmatprep.subr.bf16.mxu0 %v2591
        %3545 = vmatpush1.bf16.msra.mxu0 %v2590
        %3546 = vmatprep.subr.bf16.mxu0 %v2597
        %3547 = vmatpush1.bf16.msra.mxu0 %v2596
        %3548 = vmatprep.subr.bf16.mxu0 %v2603
        %3549 = vmatpush1.bf16.msra.mxu0 %v2602
        %3550 = vmatprep.subr.bf16.mxu0 %v2609
        %3551 = vmatpush1.bf16.msra.mxu0 %v2608
        %3552 = vmatprep.subr.bf16.mxu0 %v2615
        %3553 = vmatpush1.bf16.msra.mxu0 %v2614
        %3554 = vmatprep.mubr.bf16.mxu0 %v781
        %3555 = vmatmul.mubr.bf16.gmra.mrb[0].mxu0 %v780
        %v3556 = vpop.f32.mrb[0].mxu0
        %v3557 = vadd.f32 %v3516, %v3556
        %v3558 = vpop.f32.mrb[0].mxu0
        %v3559 = vadd.f32 %v3518, %v3558
        %v3560 = vpop.f32.mrb[0].mxu0
        %v3561 = vpop.f32.mrb[0].mxu0
        %3562 = vdwg.mxu0
        %3563 = vmatprep.subr.bf16.mxu0 %v2621
        %3564 = vmatpush1.bf16.msra.mxu0 %v2620
        %3565 = vmatprep.subr.bf16.mxu0 %v2627
        %3566 = vmatpush1.bf16.msra.mxu0 %v2626
        %3567 = vmatprep.subr.bf16.mxu0 %v2633
        %3568 = vmatpush1.bf16.msra.mxu0 %v2632
        %3569 = vmatprep.subr.bf16.mxu0 %v2639
        %3570 = vmatpush1.bf16.msra.mxu0 %v2638
        %3571 = vmatprep.subr.bf16.mxu0 %v2645
        %3572 = vmatpush1.bf16.msra.mxu0 %v2644
        %3573 = vmatprep.subr.bf16.mxu0 %v2651
        %3574 = vmatpush1.bf16.msra.mxu0 %v2650
        %3575 = vmatprep.subr.bf16.mxu0 %v2657
        %3576 = vmatpush1.bf16.msra.mxu0 %v2656
        %3577 = vmatprep.subr.bf16.mxu0 %v2663
        %3578 = vmatpush1.bf16.msra.mxu0 %v2662
        %3579 = vmatprep.subr.bf16.mxu0 %v2669
        %3580 = vmatpush1.bf16.msra.mxu0 %v2668
        %3581 = vmatprep.subr.bf16.mxu0 %v2675
        %3582 = vmatpush1.bf16.msra.mxu0 %v2674
        %3583 = vmatprep.subr.bf16.mxu0 %v2681
        %3584 = vmatpush1.bf16.msra.mxu0 %v2680
        %3585 = vmatprep.subr.bf16.mxu0 %v2687
        %3586 = vmatpush1.bf16.msra.mxu0 %v2686
        %3587 = vmatprep.subr.bf16.mxu0 %v2693
        %3588 = vmatpush1.bf16.msra.mxu0 %v2692
        %3589 = vmatprep.subr.bf16.mxu0 %v2699
        %3590 = vmatpush1.bf16.msra.mxu0 %v2698
        %3591 = vmatprep.subr.bf16.mxu0 %v2705
        %3592 = vmatpush1.bf16.msra.mxu0 %v2704
        %3593 = vmatprep.subr.bf16.mxu0 %v2711
        %3594 = vmatpush1.bf16.msra.mxu0 %v2710
        %3595 = vmatprep.mubr.bf16.mxu0 %v783
        %3596 = vmatmul.mubr.bf16.gmra.mrb[0].mxu0 %v782
        %v3597 = vpop.f32.mrb[0].mxu0
        %v3598 = vadd.f32 %v3557, %v3597
        %v3599 = vpop.f32.mrb[0].mxu0
        %v3600 = vadd.f32 %v3559, %v3599
        %v3601 = vpop.f32.mrb[0].mxu0
        %v3602 = vpop.f32.mrb[0].mxu0
        %3603 = vdwg.mxu0
        %3604 = vmatprep.subr.bf16.mxu0 %v2239
        %3605 = vmatpush1.bf16.msra.mxu0 %v2238
        %3606 = vmatprep.subr.bf16.mxu0 %v2245
        %3607 = vmatpush1.bf16.msra.mxu0 %v2244
        %3608 = vmatprep.subr.bf16.mxu0 %v2251
        %3609 = vmatpush1.bf16.msra.mxu0 %v2250
        %3610 = vmatprep.subr.bf16.mxu0 %v2257
        %3611 = vmatpush1.bf16.msra.mxu0 %v2256
        %3612 = vmatprep.subr.bf16.mxu0 %v2263
        %3613 = vmatpush1.bf16.msra.mxu0 %v2262
        %3614 = vmatprep.subr.bf16.mxu0 %v2269
        %3615 = vmatpush1.bf16.msra.mxu0 %v2268
        %3616 = vmatprep.subr.bf16.mxu0 %v2275
        %3617 = vmatpush1.bf16.msra.mxu0 %v2274
        %3618 = vmatprep.subr.bf16.mxu0 %v2281
        %3619 = vmatpush1.bf16.msra.mxu0 %v2280
        %3620 = vmatprep.subr.bf16.mxu0 %v2287
        %3621 = vmatpush1.bf16.msra.mxu0 %v2286
        %3622 = vmatprep.subr.bf16.mxu0 %v2293
        %3623 = vmatpush1.bf16.msra.mxu0 %v2292
        %3624 = vmatprep.subr.bf16.mxu0 %v2299
        %3625 = vmatpush1.bf16.msra.mxu0 %v2298
        %3626 = vmatprep.subr.bf16.mxu0 %v2305
        %3627 = vmatpush1.bf16.msra.mxu0 %v2304
        %3628 = vmatprep.subr.bf16.mxu0 %v2311
        %3629 = vmatpush1.bf16.msra.mxu0 %v2310
        %3630 = vmatprep.subr.bf16.mxu0 %v2317
        %3631 = vmatpush1.bf16.msra.mxu0 %v2316
        %3632 = vmatprep.subr.bf16.mxu0 %v2323
        %3633 = vmatpush1.bf16.msra.mxu0 %v2322
        %3634 = vmatprep.subr.bf16.mxu0 %v2329
        %3635 = vmatpush1.bf16.msra.mxu0 %v2328
        %3636 = vmatprep.mubr.bf16.mxu0 %v775
        %3637 = vmatmul.mubr.bf16.gmra.mrb[0].mxu0 %v774
        %v3638 = vpop.f32.mrb[0].mxu0
        %v3639 = vadd.f32 %v748, %v3638
        %v3640 = vpop.f32.mrb[0].mxu0
        %v3641 = vadd.f32 %v752, %v3640
        %v3642 = vpop.f32.mrb[0].mxu0
        %v3643 = vpop.f32.mrb[0].mxu0
        %3644 = vdwg.mxu0
        %3645 = vmatprep.subr.bf16.mxu0 %v2335
        %3646 = vmatpush1.bf16.msra.mxu0 %v2334
        %3647 = vmatprep.subr.bf16.mxu0 %v2341
        %3648 = vmatpush1.bf16.msra.mxu0 %v2340
        %3649 = vmatprep.subr.bf16.mxu0 %v2347
        %3650 = vmatpush1.bf16.msra.mxu0 %v2346
        %3651 = vmatprep.subr.bf16.mxu0 %v2353
        %3652 = vmatpush1.bf16.msra.mxu0 %v2352
        %3653 = vmatprep.subr.bf16.mxu0 %v2359
        %3654 = vmatpush1.bf16.msra.mxu0 %v2358
        %3655 = vmatprep.subr.bf16.mxu0 %v2365
        %3656 = vmatpush1.bf16.msra.mxu0 %v2364
        %3657 = vmatprep.subr.bf16.mxu0 %v2371
        %3658 = vmatpush1.bf16.msra.mxu0 %v2370
        %3659 = vmatprep.subr.bf16.mxu0 %v2377
        %3660 = vmatpush1.bf16.msra.mxu0 %v2376
        %3661 = vmatprep.subr.bf16.mxu0 %v2383
        %3662 = vmatpush1.bf16.msra.mxu0 %v2382
        %3663 = vmatprep.subr.bf16.mxu0 %v2389
        %3664 = vmatpush1.bf16.msra.mxu0 %v2388
        %3665 = vmatprep.subr.bf16.mxu0 %v2395
        %3666 = vmatpush1.bf16.msra.mxu0 %v2394
        %3667 = vmatprep.subr.bf16.mxu0 %v2401
        %3668 = vmatpush1.bf16.msra.mxu0 %v2400
        %3669 = vmatprep.subr.bf16.mxu0 %v2407
        %3670 = vmatpush1.bf16.msra.mxu0 %v2406
        %3671 = vmatprep.subr.bf16.mxu0 %v2413
        %3672 = vmatpush1.bf16.msra.mxu0 %v2412
        %3673 = vmatprep.subr.bf16.mxu0 %v2419
        %3674 = vmatpush1.bf16.msra.mxu0 %v2418
        %3675 = vmatprep.subr.bf16.mxu0 %v2425
        %3676 = vmatpush1.bf16.msra.mxu0 %v2424
        %3677 = vmatprep.mubr.bf16.mxu0 %v777
        %3678 = vmatmul.mubr.bf16.gmra.mrb[0].mxu0 %v776
        %v3679 = vpop.f32.mrb[0].mxu0
        %v3680 = vadd.f32 %v3639, %v3679
        %v3681 = vpop.f32.mrb[0].mxu0
        %v3682 = vadd.f32 %v3641, %v3681
        %v3683 = vpop.f32.mrb[0].mxu0
        %v3684 = vpop.f32.mrb[0].mxu0
        %3685 = vdwg.mxu0
        %3686 = vmatprep.subr.bf16.mxu0 %v2431
        %3687 = vmatpush1.bf16.msra.mxu0 %v2430
        %3688 = vmatprep.subr.bf16.mxu0 %v2437
        %3689 = vmatpush1.bf16.msra.mxu0 %v2436
        %3690 = vmatprep.subr.bf16.mxu0 %v2443
        %3691 = vmatpush1.bf16.msra.mxu0 %v2442
        %3692 = vmatprep.subr.bf16.mxu0 %v2449
        %3693 = vmatpush1.bf16.msra.mxu0 %v2448
        %3694 = vmatprep.subr.bf16.mxu0 %v2455
        %3695 = vmatpush1.bf16.msra.mxu0 %v2454
        %3696 = vmatprep.subr.bf16.mxu0 %v2461
        %3697 = vmatpush1.bf16.msra.mxu0 %v2460
        %3698 = vmatprep.subr.bf16.mxu0 %v2467
        %3699 = vmatpush1.bf16.msra.mxu0 %v2466
        %3700 = vmatprep.subr.bf16.mxu0 %v2473
        %3701 = vmatpush1.bf16.msra.mxu0 %v2472
        %3702 = vmatprep.subr.bf16.mxu0 %v2479
        %3703 = vmatpush1.bf16.msra.mxu0 %v2478
        %3704 = vmatprep.subr.bf16.mxu0 %v2485
        %3705 = vmatpush1.bf16.msra.mxu0 %v2484
        %3706 = vmatprep.subr.bf16.mxu0 %v2491
        %3707 = vmatpush1.bf16.msra.mxu0 %v2490
        %3708 = vmatprep.subr.bf16.mxu0 %v2497
        %3709 = vmatpush1.bf16.msra.mxu0 %v2496
        %3710 = vmatprep.subr.bf16.mxu0 %v2503
        %3711 = vmatpush1.bf16.msra.mxu0 %v2502
        %3712 = vmatprep.subr.bf16.mxu0 %v2509
        %3713 = vmatpush1.bf16.msra.mxu0 %v2508
        %3714 = vmatprep.subr.bf16.mxu0 %v2515
        %3715 = vmatpush1.bf16.msra.mxu0 %v2514
        %3716 = vmatprep.subr.bf16.mxu0 %v2521
        %3717 = vmatpush1.bf16.msra.mxu0 %v2520
        %3718 = vmatprep.mubr.bf16.mxu0 %v779
        %3719 = vmatmul.mubr.bf16.gmra.mrb[0].mxu0 %v778
        %v3720 = vpop.f32.mrb[0].mxu0
        %v3721 = vadd.f32 %v3680, %v3720
        %v3722 = vpop.f32.mrb[0].mxu0
        %v3723 = vadd.f32 %v3682, %v3722
        %v3724 = vpop.f32.mrb[0].mxu0
        %v3725 = vpop.f32.mrb[0].mxu0
        %3726 = vdwg.mxu0
        %3727 = vmatprep.subr.bf16.mxu0 %v2527
        %3728 = vmatpush1.bf16.msra.mxu0 %v2526
        %3729 = vmatprep.subr.bf16.mxu0 %v2533
        %3730 = vmatpush1.bf16.msra.mxu0 %v2532
        %3731 = vmatprep.subr.bf16.mxu0 %v2539
        %3732 = vmatpush1.bf16.msra.mxu0 %v2538
        %3733 = vmatprep.subr.bf16.mxu0 %v2545
        %3734 = vmatpush1.bf16.msra.mxu0 %v2544
        %3735 = vmatprep.subr.bf16.mxu0 %v2551
        %3736 = vmatpush1.bf16.msra.mxu0 %v2550
        %3737 = vmatprep.subr.bf16.mxu0 %v2557
        %3738 = vmatpush1.bf16.msra.mxu0 %v2556
        %3739 = vmatprep.subr.bf16.mxu0 %v2563
        %3740 = vmatpush1.bf16.msra.mxu0 %v2562
        %3741 = vmatprep.subr.bf16.mxu0 %v2569
        %3742 = vmatpush1.bf16.msra.mxu0 %v2568
        %3743 = vmatprep.subr.bf16.mxu0 %v2575
        %3744 = vmatpush1.bf16.msra.mxu0 %v2574
        %3745 = vmatprep.subr.bf16.mxu0 %v2581
        %3746 = vmatpush1.bf16.msra.mxu0 %v2580
        %3747 = vmatprep.subr.bf16.mxu0 %v2587
        %3748 = vmatpush1.bf16.msra.mxu0 %v2586
        %3749 = vmatprep.subr.bf16.mxu0 %v2593
        %3750 = vmatpush1.bf16.msra.mxu0 %v2592
        %3751 = vmatprep.subr.bf16.mxu0 %v2599
        %3752 = vmatpush1.bf16.msra.mxu0 %v2598
        %3753 = vmatprep.subr.bf16.mxu0 %v2605
        %3754 = vmatpush1.bf16.msra.mxu0 %v2604
        %3755 = vmatprep.subr.bf16.mxu0 %v2611
        %3756 = vmatpush1.bf16.msra.mxu0 %v2610
        %3757 = vmatprep.subr.bf16.mxu0 %v2617
        %3758 = vmatpush1.bf16.msra.mxu0 %v2616
        %3759 = vmatprep.mubr.bf16.mxu0 %v781
        %3760 = vmatmul.mubr.bf16.gmra.mrb[0].mxu0 %v780
        %v3761 = vpop.f32.mrb[0].mxu0
        %v3762 = vadd.f32 %v3721, %v3761
        %v3763 = vpop.f32.mrb[0].mxu0
        %v3764 = vadd.f32 %v3723, %v3763
        %v3765 = vpop.f32.mrb[0].mxu0
        %v3766 = vpop.f32.mrb[0].mxu0
        %3767 = vdwg.mxu0
        %3768 = vmatprep.subr.bf16.mxu0 %v2623
        %3769 = vmatpush1.bf16.msra.mxu0 %v2622
        %3770 = vmatprep.subr.bf16.mxu0 %v2629
        %3771 = vmatpush1.bf16.msra.mxu0 %v2628
        %3772 = vmatprep.subr.bf16.mxu0 %v2635
        %3773 = vmatpush1.bf16.msra.mxu0 %v2634
        %3774 = vmatprep.subr.bf16.mxu0 %v2641
        %3775 = vmatpush1.bf16.msra.mxu0 %v2640
        %3776 = vmatprep.subr.bf16.mxu0 %v2647
        %3777 = vmatpush1.bf16.msra.mxu0 %v2646
        %3778 = vmatprep.subr.bf16.mxu0 %v2653
        %3779 = vmatpush1.bf16.msra.mxu0 %v2652
        %3780 = vmatprep.subr.bf16.mxu0 %v2659
        %3781 = vmatpush1.bf16.msra.mxu0 %v2658
        %3782 = vmatprep.subr.bf16.mxu0 %v2665
        %3783 = vmatpush1.bf16.msra.mxu0 %v2664
        %3784 = vmatprep.subr.bf16.mxu0 %v2671
        %3785 = vmatpush1.bf16.msra.mxu0 %v2670
        %3786 = vmatprep.subr.bf16.mxu0 %v2677
        %3787 = vmatpush1.bf16.msra.mxu0 %v2676
        %3788 = vmatprep.subr.bf16.mxu0 %v2683
        %3789 = vmatpush1.bf16.msra.mxu0 %v2682
        %3790 = vmatprep.subr.bf16.mxu0 %v2689
        %3791 = vmatpush1.bf16.msra.mxu0 %v2688
        %3792 = vmatprep.subr.bf16.mxu0 %v2695
        %3793 = vmatpush1.bf16.msra.mxu0 %v2694
        %3794 = vmatprep.subr.bf16.mxu0 %v2701
        %3795 = vmatpush1.bf16.msra.mxu0 %v2700
        %3796 = vmatprep.subr.bf16.mxu0 %v2707
        %3797 = vmatpush1.bf16.msra.mxu0 %v2706
        %3798 = vmatprep.subr.bf16.mxu0 %v2713
        %3799 = vmatpush1.bf16.msra.mxu0 %v2712
        %3800 = vmatprep.mubr.bf16.mxu0 %v783
        %3801 = vmatmul.mubr.bf16.gmra.mrb[0].mxu0 %v782
        %v3802 = vpop.f32.mrb[0].mxu0
        %v3803 = vadd.f32 %v3762, %v3802
        %v3804 = vpop.f32.mrb[0].mxu0
        %v3805 = vadd.f32 %v3764, %v3804
        %v3806 = vpop.f32.mrb[0].mxu0
        %v3807 = vpop.f32.mrb[0].mxu0
        %3808 = vdwg.mxu0
        %3809 = vst [vmem:[%s240] sm:$0xff] %v3393
        %3810 = vst [vmem:[%s240 + $0x8] sm:$0xff] %v3395
        %3811 = vst [vmem:[%s240 + $0x10] sm:$0xff] %v3598
        %3812 = vst [vmem:[%s240 + $0x18] sm:$0xff] %v3600
        %3813 = vst [vmem:[%s240 + $0x20] sm:$0xff] %v3803
        %3814 = vst [vmem:[%s240 + $0x28] sm:$0xff] %v3805
        %s3815 = smul.u32 6, %s18
        %p3816 = scmp.lt.s32.totalorder %s3815, 11
        %s3817 = scalar_select %p3816, %s3815, 11
        %s3818 = smul.addr %s3817, 8
        %s3819 = scalar_lea.vmem %s3, %s3818
        // Predicated region
        $region45: #{multi_prompt_forward.2} parent=31 // pred_check
          %p3820 = pneg %p109
        $region46: #{multi_prompt_forward.2} parent=31 // pred_check_branch
          %3822 = sbr.rel (%p3820) target = $region48
        $region47: #{multi_prompt_forward.2} parent=31 // pred_region
          %s3823 = smul.u32 6, %s18
        $region48: #{multi_prompt_forward.2} parent=31 // pred_fallthru
          _
      $region32: #{multi_prompt_forward.2} parent=5 // pred_fallthru
        _
      %p3824 = scmp.le.s32.totalorder 2, %s13
      // Predicated region
      $region49: #{multi_prompt_forward.2} parent=5 // pred_check
        %p3825 = pneg %p3824
      $region50: #{multi_prompt_forward.2} parent=5 // pred_check_branch
        %3827 = sbr.rel (%p3825) target = $region52
      $region51: #{multi_prompt_forward.2} parent=5 // pred_region
        %s3828 = ssub.s32 %s13, 2
        // Predicated region
        $region53: #{multi_prompt_forward.2} parent=51 // pred_check
          %p3829 = pneg %p115
        $region54: #{multi_prompt_forward.2} parent=51 // pred_check_branch
          %3831 = sbr.rel (%p3829) target = $region56
        $region55: #{multi_prompt_forward.2} parent=51 // pred_region
          %s3832 = smul.u32 6, %s19
          %p3833 = scmp.lt.s32.totalorder %s3832, 11
          %s3834 = scalar_select %p3833, %s3832, 11
          %s3835 = smul.addr %s3834, 8
          %s3836 = scalar_lea.vmem %s3, %s3835
        $region56: #{multi_prompt_forward.2} parent=51 // pred_fallthru
          _
      $region52: #{multi_prompt_forward.2} parent=5 // pred_fallthru
        _
    $region6: #{multi_prompt_forward.2} parent=1 // loop_footer
      %s17 = sadd.s32 1, %s13
    $region7: #{multi_prompt_forward.2} parent=1 // loop_footer_branch
      %12 = sbr.rel target = $region3
    $region8: #{multi_prompt_forward.2} parent=1 // loop_exit
      _
    %3837 = vsyncpa [#allocation3], 1
    %s3838 = scalar_lea.sflag [#allocation3], 1
    %3839 = vsyncpa %s3838, 1
    %3840 = vsyncpa [#allocation5], 1
    %s3841 = scalar_lea.sflag [#allocation5], 1
    %3842 = vsyncpa %s3841, 1

</llo_original>
